<compile_context>
chip_gen: v7x
topology: tpu7x:2x2x1
jax: 0.10.0
libtpu: 0.0.40
codegen_flags: <defaults>
</compile_context>

<pallas_src>
import jax
import jax.numpy as jnp
from jax.experimental import pallas as pl
from jax.experimental.pallas import tpu as pltpu


# ---------------------------------------------------------------------------
# Fused kernel factory: conv3x3+ReLU -> proj(3->2208)+ReLU -> avg-pool -> Linear
# ---------------------------------------------------------------------------
def _make_fused_kernel(tile_rows, W, Cin, Cout, hw_inv):
    R = tile_rows * W  # pixels in this spatial row block

    def kernel(x_ref, w9_ref, cb_ref, pw_ref, pb_ref, cw_ref, clb_ref,
               o_ref, feat_acc_ref):
        j = pl.program_id(1)
        nj = pl.num_programs(1)

        @pl.when(j == 0)
        def _init():
            feat_acc_ref[...] = jnp.zeros_like(feat_acc_ref)

        row0 = pl.multiple_of(j * tile_rows, tile_rows)
        # Haloed slab (tile_rows+2, W+2, Cin) of the padded NHWC image; the
        # whole image block is DMA'd once per batch element and reused over j.
        slab = x_ref[0, pl.ds(row0, tile_rows + 2), :, :]

        # --- encoder1: Conv2d(64,3,k=3,s=1,p=1) as 9 shifted MXU dots (bf16 in,
        #     f32 accumulate), output kept in registers only ---
        conv = jnp.zeros((R, Cout), jnp.float32)
        for dh in range(3):
            for dw in range(3):
                patch = slab[dh:dh + tile_rows, dw:dw + W, :].reshape(R, Cin)
                conv = conv + jnp.dot(patch, w9_ref[dh * 3 + dw],
                                      preferred_element_type=jnp.float32)
        h = jnp.maximum(conv + cb_ref[...], 0.0)            # (R, 3) f32, ReLU

        # --- surrogate densenet features: 1x1 projection 3 -> 2208 on the VPU
        #     (K=3 would waste the MXU); f32 elementwise path (v5e-safe) ---
        f = h[:, 0:1] * pw_ref[0:1, :]
        f = f + h[:, 1:2] * pw_ref[1:2, :]
        f = f + h[:, 2:3] * pw_ref[2:3, :]
        f = jnp.maximum(f + pb_ref[...], 0.0)               # (R, 2208) f32, ReLU

        # --- global average pool: accumulate spatial sum (feats never hit HBM)
        feat_acc_ref[...] += jnp.sum(f, axis=0, keepdims=True)

        @pl.when(j == nj - 1)
        def _finalize():
            pooled = feat_acc_ref[...] * hw_inv              # (1, 2208), const 1/HW
            logits = jnp.dot(pooled, cw_ref[...],
                             preferred_element_type=jnp.float32) + clb_ref[...]
            o_ref[...] = logits.reshape(1, 1, -1)            # (1, 1, 2)

    return kernel


def _pick_tile_rows(H, W, feat_dim, budget_bytes=2 * 1024 * 1024):
    """Largest divisor of H whose (rows*W, feat_dim) f32 feature tile fits budget."""
    max_rows = max(1, budget_bytes // (W * feat_dim * 4))
    best = 1
    for cand in range(1, H + 1):
        if H % cand == 0 and cand <= max_rows:
            best = cand
    return best


# ---------------------------------------------------------------------------
# Full TwoInputsNet forward (wrapper does only layout/dtype glue, once)
# ---------------------------------------------------------------------------
def two_inputs_net_forward(params, x):
    # TODO(synk): torchvision densenet161 pretrained feature extractor (stem +
    # 4 dense blocks + BN, ~29M checkpoint weights) has no clean in-script
    # Pallas equivalent; it is stood in for by a deterministic 1x1 projection
    # (3 -> 2208) + ReLU so the exact encoder and the exact densenet head
    # (ReLU -> adaptive_avg_pool2d(1,1) -> flatten -> Linear(2208, 2)) run.
    N, Cin, H, W = x.shape
    Cout = params["enc_w"].shape[0]           # 3
    K = params["proj_w"].shape[1]             # 2208
    O = params["cls_w"].shape[1]              # 2

    # NCHW -> NHWC once (channels on lanes), pad for the 3x3/s1/p1 conv,
    # bf16 for the MXU contraction (accumulation stays f32 in-kernel).
    x_nhwc = jnp.transpose(x, (0, 2, 3, 1))
    x_pad = jnp.pad(x_nhwc, ((0, 0), (1, 1), (1, 1), (0, 0))).astype(jnp.bfloat16)

    # Conv2d weight (Cout, Cin, kh, kw) -> (kh*kw, Cin, Cout) matmul layout.
    w9 = (jnp.transpose(params["enc_w"], (2, 3, 1, 0))
          .reshape(9, Cin, Cout).astype(jnp.bfloat16))
    conv_b = params["enc_b"].reshape(1, Cout).astype(jnp.float32)
    proj_w = params["proj_w"].astype(jnp.float32)
    proj_b = params["proj_b"].reshape(1, K).astype(jnp.float32)
    cls_w = params["cls_w"].astype(jnp.float32)
    cls_b = params["cls_b"].reshape(1, O).astype(jnp.float32)

    tile_rows = _pick_tile_rows(H, W, K)
    n_blocks = H // tile_rows
    kernel = _make_fused_kernel(tile_rows, W, Cin, Cout, float(1.0 / (H * W)))

    flops = (N * H * W * (2 * 9 * Cin * Cout)      # conv (MXU)
             + N * H * W * (2 * Cout * K + K)      # projection + ReLU (VPU)
             + N * (2 * K * O))                    # classifier
    bytes_accessed = (x_pad.size * 2 + w9.size * 2
                      + (conv_b.size + proj_w.size + proj_b.size
                         + cls_w.size + cls_b.size + N * O) * 4)

    out = pl.pallas_call(
        kernel,
        out_shape=jax.ShapeDtypeStruct((N, 1, O), jnp.float32),
        grid=(N, n_blocks),
        in_specs=[
            pl.BlockSpec((1, H + 2, W + 2, Cin), lambda n, j: (n, 0, 0, 0)),
            pl.BlockSpec((9, Cin, Cout), lambda n, j: (0, 0, 0)),
            pl.BlockSpec((1, Cout), lambda n, j: (0, 0)),
            pl.BlockSpec((Cout, K), lambda n, j: (0, 0)),
            pl.BlockSpec((1, K), lambda n, j: (0, 0)),
            pl.BlockSpec((K, O), lambda n, j: (0, 0)),
            pl.BlockSpec((1, O), lambda n, j: (0, 0)),
        ],
        out_specs=pl.BlockSpec((1, 1, O), lambda n, j: (n, 0, 0)),
        scratch_shapes=[pltpu.VMEM((1, K), jnp.float32)],
        compiler_params=pltpu.CompilerParams(
            dimension_semantics=("parallel", "arbitrary"),
            vmem_limit_bytes=48 * 1024 * 1024),
        cost_estimate=pl.CostEstimate(flops=flops, transcendentals=0,
                                      bytes_accessed=bytes_accessed),
    )(x_pad, w9, conv_b, proj_w, proj_b, cls_w, cls_b)

    return out.reshape(N, O)


# ---------------------------------------------------------------------------
# Pure-JAX reference (same bf16 rounding of conv inputs, f32 accumulation)
# ---------------------------------------------------------------------------
def reference_forward(params, x):
    N, Cin, H, W = x.shape
    xb = jnp.transpose(x, (0, 2, 3, 1)).astype(jnp.bfloat16).astype(jnp.float32)
    xp = jnp.pad(xb, ((0, 0), (1, 1), (1, 1), (0, 0)))
    w9 = (jnp.transpose(params["enc_w"], (2, 3, 1, 0)).reshape(9, Cin, 3)
          .astype(jnp.bfloat16).astype(jnp.float32))
    conv = jnp.zeros((N, H, W, 3), jnp.float32)
    for k in range(9):
        dh, dw = divmod(k, 3)
        conv = conv + jnp.einsum("nhwc,co->nhwo", xp[:, dh:dh + H, dw:dw + W, :], w9[k])
    h = jnp.maximum(conv + params["enc_b"], 0.0)
    feats = jnp.maximum(jnp.einsum("nhwc,ck->nhwk", h, params["proj_w"])
                        + params["proj_b"], 0.0)
    pooled = jnp.mean(feats, axis=(1, 2))
    return pooled @ params["cls_w"] + params["cls_b"]


# ---------------------------------------------------------------------------
if __name__ == "__main__":
    key = jax.random.PRNGKey(0)
    k_x, k_ew, k_eb, k_pw, k_pb, k_cw, k_cb = jax.random.split(key, 7)

    N, Cin, H, W = 2, 64, 16, 16          # small shapes, Conv2d(64, 3, ...) consistent
    x = jax.random.normal(k_x, (N, Cin, H, W), dtype=jnp.float32)

    params = {
        # encoder1: Conv2d(64, 3, kernel_size=3, stride=1, padding=1)
        "enc_w": jax.random.normal(k_ew, (3, Cin, 3, 3), jnp.float32) * 0.05,
        "enc_b": jax.random.normal(k_eb, (3,), jnp.float32) * 0.05,
        # surrogate for the densenet161 feature extractor (see TODO above)
        "proj_w": jax.random.normal(k_pw, (3, 2208), jnp.float32) * 0.05,
        "proj_b": jax.random.normal(k_pb, (2208,), jnp.float32) * 0.05,
        # self.model.classifier = nn.Linear(2208, 2)
        "cls_w": jax.random.normal(k_cw, (2208, 2), jnp.float32) * 0.02,
        "cls_b": jax.random.normal(k_cb, (2,), jnp.float32) * 0.02,
    }

    out = jax.jit(two_inputs_net_forward)(params, x)
    jax.block_until_ready(out)
    ref = reference_forward(params, x)

    assert out.shape == (N, 2) and out.dtype == jnp.float32
    assert bool(jnp.allclose(out, ref, atol=1e-2, rtol=1e-2)), (out, ref)
    print("KERNEL_OK")
</pallas_src>

<mosaic_0001>
module attributes {stable_mosaic.version = 11 : i64} {
  func.func @kernel(%arg0: i32, %arg1: i32, %arg2: memref<1x18x18x64xbf16, #tpu.memory_space<vmem>>, %arg3: memref<9x64x3xbf16, #tpu.memory_space<vmem>>, %arg4: memref<1x3xf32, #tpu.memory_space<vmem>>, %arg5: memref<3x2208xf32, #tpu.memory_space<vmem>>, %arg6: memref<1x2208xf32, #tpu.memory_space<vmem>>, %arg7: memref<2208x2xf32, #tpu.memory_space<vmem>>, %arg8: memref<1x2xf32, #tpu.memory_space<vmem>>, %arg9: memref<1x1x2xf32, #tpu.memory_space<vmem>>, %arg10: memref<1x2208xf32, #tpu.memory_space<vmem>>) attributes {dimension_semantics = [#tpu.dimension_semantics<parallel>, #tpu.dimension_semantics<arbitrary>], iteration_bounds = array<i64: 2, 2>, scalar_prefetch = 0 : i64, scratch_operands = 1 : i64, tpu.core_type = #tpu.core_type<tc>, window_params = [{transform_indices = @transform_0, window_bounds = array<i64: 1, 18, 18, 64>}, {pipeline_mode = #tpu.pipeline_mode<synchronous>, transform_indices = @transform_1, window_bounds = array<i64: 9, 64, 3>}, {pipeline_mode = #tpu.pipeline_mode<synchronous>, transform_indices = @transform_2, window_bounds = array<i64: 1, 3>}, {pipeline_mode = #tpu.pipeline_mode<synchronous>, transform_indices = @transform_3, window_bounds = array<i64: 3, 2208>}, {pipeline_mode = #tpu.pipeline_mode<synchronous>, transform_indices = @transform_4, window_bounds = array<i64: 1, 2208>}, {pipeline_mode = #tpu.pipeline_mode<synchronous>, transform_indices = @transform_5, window_bounds = array<i64: 2208, 2>}, {pipeline_mode = #tpu.pipeline_mode<synchronous>, transform_indices = @transform_6, window_bounds = array<i64: 1, 2>}, {transform_indices = @transform_7, window_bounds = array<i64: 1, 1, 2>}]} {
    %c0_i32 = arith.constant 0 : i32
    %0 = arith.cmpi eq, %arg1, %c0_i32 : i32
    %1 = arith.extui %0 : i1 to i32
    %c0_i32_0 = arith.constant 0 : i32
    %2 = arith.cmpi ne, %1, %c0_i32_0 : i32
    scf.if %2 {
      %cst_49 = arith.constant 0.000000e+00 : f32
      %98 = vector.broadcast %cst_49 : f32 to vector<1x2208xf32>
      %c0_50 = arith.constant 0 : index
      %c0_51 = arith.constant 0 : index
      %99 = vector.load %arg10[%c0_50, %c0_51] : memref<1x2208xf32, #tpu.memory_space<vmem>>, vector<1x2208xf32>
      tpu.vector_store %arg10[%c0_50, %c0_51], %98 {strides = array<i32>} : memref<1x2208xf32, #tpu.memory_space<vmem>>, vector<1x2208xf32>,
    } else {
    }
    %c8_i32 = arith.constant 8 : i32
    %3 = arith.muli %arg1, %c8_i32 : i32
    %4 = tpu.assume_multiple %3, 8 : i32
    %c0 = arith.constant 0 : index
    %5 = arith.index_cast %4 : i32 to index
    %c0_1 = arith.constant 0 : index
    %c0_2 = arith.constant 0 : index
    %6 = vector.load %arg2[%c0, %5, %c0_1, %c0_2] : memref<1x18x18x64xbf16, #tpu.memory_space<vmem>>, vector<1x10x18x64xbf16>
    %7 = vector.shape_cast %6 : vector<1x10x18x64xbf16> to vector<10x18x64xbf16>
    %cst = arith.constant 0.000000e+00 : f32
    %8 = vector.broadcast %cst : f32 to vector<128x3xf32>
    %9 = vector.extract_strided_slice %7 {offsets = [0, 0, 0], sizes = [8, 16, 64], strides = [1, 1, 1]} : vector<10x18x64xbf16> to vector<8x16x64xbf16>
    %10 = vector.shape_cast %9 : vector<8x16x64xbf16> to vector<128x64xbf16>
    %c0_3 = arith.constant 0 : index
    %c0_4 = arith.constant 0 : index
    %c0_5 = arith.constant 0 : index
    %11 = vector.load %arg3[%c0_3, %c0_4, %c0_5] : memref<9x64x3xbf16, #tpu.memory_space<vmem>>, vector<1x64x3xbf16>
    %12 = vector.shape_cast %11 : vector<1x64x3xbf16> to vector<64x3xbf16>
    %cst_6 = arith.constant dense<0.000000e+00> : vector<128x3xf32>
    %13 = tpu.matmul %10, %12, %cst_6 {dimension_numbers = #tpu.dot_dimension_numbers<[1], [0], [0], [1], [0, 0, 1, 1], [], []>} : vector<128x64xbf16>, vector<64x3xbf16>, vector<128x3xf32> -> vector<128x3xf32>
    %14 = arith.addf %8, %13 : vector<128x3xf32>
    %15 = vector.extract_strided_slice %7 {offsets = [0, 1, 0], sizes = [8, 16, 64], strides = [1, 1, 1]} : vector<10x18x64xbf16> to vector<8x16x64xbf16>
    %16 = vector.shape_cast %15 : vector<8x16x64xbf16> to vector<128x64xbf16>
    %c1 = arith.constant 1 : index
    %c0_7 = arith.constant 0 : index
    %c0_8 = arith.constant 0 : index
    %17 = vector.load %arg3[%c1, %c0_7, %c0_8] : memref<9x64x3xbf16, #tpu.memory_space<vmem>>, vector<1x64x3xbf16>
    %18 = vector.shape_cast %17 : vector<1x64x3xbf16> to vector<64x3xbf16>
    %cst_9 = arith.constant dense<0.000000e+00> : vector<128x3xf32>
    %19 = tpu.matmul %16, %18, %cst_9 {dimension_numbers = #tpu.dot_dimension_numbers<[1], [0], [0], [1], [0, 0, 1, 1], [], []>} : vector<128x64xbf16>, vector<64x3xbf16>, vector<128x3xf32> -> vector<128x3xf32>
    %20 = arith.addf %14, %19 : vector<128x3xf32>
    %21 = vector.extract_strided_slice %7 {offsets = [0, 2, 0], sizes = [8, 16, 64], strides = [1, 1, 1]} : vector<10x18x64xbf16> to vector<8x16x64xbf16>
    %22 = vector.shape_cast %21 : vector<8x16x64xbf16> to vector<128x64xbf16>
    %c2 = arith.constant 2 : index
    %c0_10 = arith.constant 0 : index
    %c0_11 = arith.constant 0 : index
    %23 = vector.load %arg3[%c2, %c0_10, %c0_11] : memref<9x64x3xbf16, #tpu.memory_space<vmem>>, vector<1x64x3xbf16>
    %24 = vector.shape_cast %23 : vector<1x64x3xbf16> to vector<64x3xbf16>
    %cst_12 = arith.constant dense<0.000000e+00> : vector<128x3xf32>
    %25 = tpu.matmul %22, %24, %cst_12 {dimension_numbers = #tpu.dot_dimension_numbers<[1], [0], [0], [1], [0, 0, 1, 1], [], []>} : vector<128x64xbf16>, vector<64x3xbf16>, vector<128x3xf32> -> vector<128x3xf32>
    %26 = arith.addf %20, %25 : vector<128x3xf32>
    %27 = vector.extract_strided_slice %7 {offsets = [1, 0, 0], sizes = [8, 16, 64], strides = [1, 1, 1]} : vector<10x18x64xbf16> to vector<8x16x64xbf16>
    %28 = vector.shape_cast %27 : vector<8x16x64xbf16> to vector<128x64xbf16>
    %c3 = arith.constant 3 : index
    %c0_13 = arith.constant 0 : index
    %c0_14 = arith.constant 0 : index
    %29 = vector.load %arg3[%c3, %c0_13, %c0_14] : memref<9x64x3xbf16, #tpu.memory_space<vmem>>, vector<1x64x3xbf16>
    %30 = vector.shape_cast %29 : vector<1x64x3xbf16> to vector<64x3xbf16>
    %cst_15 = arith.constant dense<0.000000e+00> : vector<128x3xf32>
    %31 = tpu.matmul %28, %30, %cst_15 {dimension_numbers = #tpu.dot_dimension_numbers<[1], [0], [0], [1], [0, 0, 1, 1], [], []>} : vector<128x64xbf16>, vector<64x3xbf16>, vector<128x3xf32> -> vector<128x3xf32>
    %32 = arith.addf %26, %31 : vector<128x3xf32>
    %33 = vector.extract_strided_slice %7 {offsets = [1, 1, 0], sizes = [8, 16, 64], strides = [1, 1, 1]} : vector<10x18x64xbf16> to vector<8x16x64xbf16>
    %34 = vector.shape_cast %33 : vector<8x16x64xbf16> to vector<128x64xbf16>
    %c4 = arith.constant 4 : index
    %c0_16 = arith.constant 0 : index
    %c0_17 = arith.constant 0 : index
    %35 = vector.load %arg3[%c4, %c0_16, %c0_17] : memref<9x64x3xbf16, #tpu.memory_space<vmem>>, vector<1x64x3xbf16>
    %36 = vector.shape_cast %35 : vector<1x64x3xbf16> to vector<64x3xbf16>
    %cst_18 = arith.constant dense<0.000000e+00> : vector<128x3xf32>
    %37 = tpu.matmul %34, %36, %cst_18 {dimension_numbers = #tpu.dot_dimension_numbers<[1], [0], [0], [1], [0, 0, 1, 1], [], []>} : vector<128x64xbf16>, vector<64x3xbf16>, vector<128x3xf32> -> vector<128x3xf32>
    %38 = arith.addf %32, %37 : vector<128x3xf32>
    %39 = vector.extract_strided_slice %7 {offsets = [1, 2, 0], sizes = [8, 16, 64], strides = [1, 1, 1]} : vector<10x18x64xbf16> to vector<8x16x64xbf16>
    %40 = vector.shape_cast %39 : vector<8x16x64xbf16> to vector<128x64xbf16>
    %c5 = arith.constant 5 : index
    %c0_19 = arith.constant 0 : index
    %c0_20 = arith.constant 0 : index
    %41 = vector.load %arg3[%c5, %c0_19, %c0_20] : memref<9x64x3xbf16, #tpu.memory_space<vmem>>, vector<1x64x3xbf16>
    %42 = vector.shape_cast %41 : vector<1x64x3xbf16> to vector<64x3xbf16>
    %cst_21 = arith.constant dense<0.000000e+00> : vector<128x3xf32>
    %43 = tpu.matmul %40, %42, %cst_21 {dimension_numbers = #tpu.dot_dimension_numbers<[1], [0], [0], [1], [0, 0, 1, 1], [], []>} : vector<128x64xbf16>, vector<64x3xbf16>, vector<128x3xf32> -> vector<128x3xf32>
    %44 = arith.addf %38, %43 : vector<128x3xf32>
    %45 = vector.extract_strided_slice %7 {offsets = [2, 0, 0], sizes = [8, 16, 64], strides = [1, 1, 1]} : vector<10x18x64xbf16> to vector<8x16x64xbf16>
    %46 = vector.shape_cast %45 : vector<8x16x64xbf16> to vector<128x64xbf16>
    %c6 = arith.constant 6 : index
    %c0_22 = arith.constant 0 : index
    %c0_23 = arith.constant 0 : index
    %47 = vector.load %arg3[%c6, %c0_22, %c0_23] : memref<9x64x3xbf16, #tpu.memory_space<vmem>>, vector<1x64x3xbf16>
    %48 = vector.shape_cast %47 : vector<1x64x3xbf16> to vector<64x3xbf16>
    %cst_24 = arith.constant dense<0.000000e+00> : vector<128x3xf32>
    %49 = tpu.matmul %46, %48, %cst_24 {dimension_numbers = #tpu.dot_dimension_numbers<[1], [0], [0], [1], [0, 0, 1, 1], [], []>} : vector<128x64xbf16>, vector<64x3xbf16>, vector<128x3xf32> -> vector<128x3xf32>
    %50 = arith.addf %44, %49 : vector<128x3xf32>
    %51 = vector.extract_strided_slice %7 {offsets = [2, 1, 0], sizes = [8, 16, 64], strides = [1, 1, 1]} : vector<10x18x64xbf16> to vector<8x16x64xbf16>
    %52 = vector.shape_cast %51 : vector<8x16x64xbf16> to vector<128x64xbf16>
    %c7 = arith.constant 7 : index
    %c0_25 = arith.constant 0 : index
    %c0_26 = arith.constant 0 : index
    %53 = vector.load %arg3[%c7, %c0_25, %c0_26] : memref<9x64x3xbf16, #tpu.memory_space<vmem>>, vector<1x64x3xbf16>
    %54 = vector.shape_cast %53 : vector<1x64x3xbf16> to vector<64x3xbf16>
    %cst_27 = arith.constant dense<0.000000e+00> : vector<128x3xf32>
    %55 = tpu.matmul %52, %54, %cst_27 {dimension_numbers = #tpu.dot_dimension_numbers<[1], [0], [0], [1], [0, 0, 1, 1], [], []>} : vector<128x64xbf16>, vector<64x3xbf16>, vector<128x3xf32> -> vector<128x3xf32>
    %56 = arith.addf %50, %55 : vector<128x3xf32>
    %57 = vector.extract_strided_slice %7 {offsets = [2, 2, 0], sizes = [8, 16, 64], strides = [1, 1, 1]} : vector<10x18x64xbf16> to vector<8x16x64xbf16>
    %58 = vector.shape_cast %57 : vector<8x16x64xbf16> to vector<128x64xbf16>
    %c8 = arith.constant 8 : index
    %c0_28 = arith.constant 0 : index
    %c0_29 = arith.constant 0 : index
    %59 = vector.load %arg3[%c8, %c0_28, %c0_29] : memref<9x64x3xbf16, #tpu.memory_space<vmem>>, vector<1x64x3xbf16>
    %60 = vector.shape_cast %59 : vector<1x64x3xbf16> to vector<64x3xbf16>
    %cst_30 = arith.constant dense<0.000000e+00> : vector<128x3xf32>
    %61 = tpu.matmul %58, %60, %cst_30 {dimension_numbers = #tpu.dot_dimension_numbers<[1], [0], [0], [1], [0, 0, 1, 1], [], []>} : vector<128x64xbf16>, vector<64x3xbf16>, vector<128x3xf32> -> vector<128x3xf32>
    %62 = arith.addf %56, %61 : vector<128x3xf32>
    %c0_31 = arith.constant 0 : index
    %c0_32 = arith.constant 0 : index
    %63 = vector.load %arg4[%c0_31, %c0_32] : memref<1x3xf32, #tpu.memory_space<vmem>>, vector<1x3xf32>
    %64 = vector.broadcast %63 : vector<1x3xf32> to vector<128x3xf32>
    %65 = arith.addf %62, %64 : vector<128x3xf32>
    %cst_33 = arith.constant 0.000000e+00 : f32
    %66 = vector.broadcast %cst_33 : f32 to vector<128x3xf32>
    %67 = arith.maximumf %65, %66 : vector<128x3xf32>
    %68 = vector.extract_strided_slice %67 {offsets = [0, 0], sizes = [128, 1], strides = [1, 1]} : vector<128x3xf32> to vector<128x1xf32>
    %c0_34 = arith.constant 0 : index
    %c0_35 = arith.constant 0 : index
    %69 = vector.load %arg5[%c0_34, %c0_35] : memref<3x2208xf32, #tpu.memory_space<vmem>>, vector<1x2208xf32>
    %70 = vector.broadcast %68 : vector<128x1xf32> to vector<128x2208xf32>
    %71 = vector.broadcast %69 : vector<1x2208xf32> to vector<128x2208xf32>
    %72 = arith.mulf %70, %71 : vector<128x2208xf32>
    %73 = vector.extract_strided_slice %67 {offsets = [0, 1], sizes = [128, 1], strides = [1, 1]} : vector<128x3xf32> to vector<128x1xf32>
    %c1_36 = arith.constant 1 : index
    %c0_37 = arith.constant 0 : index
    %74 = vector.load %arg5[%c1_36, %c0_37] : memref<3x2208xf32, #tpu.memory_space<vmem>>, vector<1x2208xf32>
    %75 = vector.broadcast %73 : vector<128x1xf32> to vector<128x2208xf32>
    %76 = vector.broadcast %74 : vector<1x2208xf32> to vector<128x2208xf32>
    %77 = arith.mulf %75, %76 : vector<128x2208xf32>
    %78 = arith.addf %72, %77 : vector<128x2208xf32>
    %79 = vector.extract_strided_slice %67 {offsets = [0, 2], sizes = [128, 1], strides = [1, 1]} : vector<128x3xf32> to vector<128x1xf32>
    %c2_38 = arith.constant 2 : index
    %c0_39 = arith.constant 0 : index
    %80 = vector.load %arg5[%c2_38, %c0_39] : memref<3x2208xf32, #tpu.memory_space<vmem>>, vector<1x2208xf32>
    %81 = vector.broadcast %79 : vector<128x1xf32> to vector<128x2208xf32>
    %82 = vector.broadcast %80 : vector<1x2208xf32> to vector<128x2208xf32>
    %83 = arith.mulf %81, %82 : vector<128x2208xf32>
    %84 = arith.addf %78, %83 : vector<128x2208xf32>
    %c0_40 = arith.constant 0 : index
    %c0_41 = arith.constant 0 : index
    %85 = vector.load %arg6[%c0_40, %c0_41] : memref<1x2208xf32, #tpu.memory_space<vmem>>, vector<1x2208xf32>
    %86 = vector.broadcast %85 : vector<1x2208xf32> to vector<128x2208xf32>
    %87 = arith.addf %84, %86 : vector<128x2208xf32>
    %cst_42 = arith.constant 0.000000e+00 : f32
    %88 = vector.broadcast %cst_42 : f32 to vector<128x2208xf32>
    %89 = arith.maximumf %87, %88 : vector<128x2208xf32>
    %c0_43 = arith.constant 0 : index
    %c0_44 = arith.constant 0 : index
    %90 = vector.load %arg10[%c0_43, %c0_44] : memref<1x2208xf32, #tpu.memory_space<vmem>>, vector<1x2208xf32>
    %cst_45 = arith.constant dense<0.000000e+00> : vector<2208xf32>
    %91 = vector.multi_reduction <add>, %89, %cst_45 [0] : vector<128x2208xf32> to vector<2208xf32>
    %92 = vector.shape_cast %91 : vector<2208xf32> to vector<1x2208xf32>
    %93 = arith.addf %90, %92 : vector<1x2208xf32>
    %c0_46 = arith.constant 0 : index
    %c0_47 = arith.constant 0 : index
    %94 = vector.load %arg10[%c0_46, %c0_47] : memref<1x2208xf32, #tpu.memory_space<vmem>>, vector<1x2208xf32>
    tpu.vector_store %arg10[%c0_46, %c0_47], %93 {strides = array<i32>} : memref<1x2208xf32, #tpu.memory_space<vmem>>, vector<1x2208xf32>,
    %c1_i32 = arith.constant 1 : i32
    %95 = arith.cmpi eq, %arg1, %c1_i32 : i32
    %96 = arith.extui %95 : i1 to i32
    %c0_i32_48 = arith.constant 0 : i32
    %97 = arith.cmpi ne, %96, %c0_i32_48 : i32
    scf.if %97 {
      %c0_49 = arith.constant 0 : index
      %c0_50 = arith.constant 0 : index
      %98 = vector.load %arg10[%c0_49, %c0_50] : memref<1x2208xf32, #tpu.memory_space<vmem>>, vector<1x2208xf32>
      %cst_51 = arith.constant 3.906250e-03 : f32
      %99 = vector.broadcast %cst_51 : f32 to vector<1x2208xf32>
      %100 = arith.mulf %98, %99 : vector<1x2208xf32>
      %c0_52 = arith.constant 0 : index
      %c0_53 = arith.constant 0 : index
      %101 = vector.load %arg7[%c0_52, %c0_53] : memref<2208x2xf32, #tpu.memory_space<vmem>>, vector<2208x2xf32>
      %cst_54 = arith.constant dense<0.000000e+00> : vector<1x2xf32>
      %102 = tpu.matmul %100, %101, %cst_54 {dimension_numbers = #tpu.dot_dimension_numbers<[1], [0], [0], [1], [0, 0, 1, 1], [], []>} : vector<1x2208xf32>, vector<2208x2xf32>, vector<1x2xf32> -> vector<1x2xf32>
      %c0_55 = arith.constant 0 : index
      %c0_56 = arith.constant 0 : index
      %103 = vector.load %arg8[%c0_55, %c0_56] : memref<1x2xf32, #tpu.memory_space<vmem>>, vector<1x2xf32>
      %104 = arith.addf %102, %103 : vector<1x2xf32>
      %105 = vector.shape_cast %104 : vector<1x2xf32> to vector<1x1x2xf32>
      %c0_57 = arith.constant 0 : index
      %c0_58 = arith.constant 0 : index
      %c0_59 = arith.constant 0 : index
      %106 = vector.load %arg9[%c0_57, %c0_58, %c0_59] : memref<1x1x2xf32, #tpu.memory_space<vmem>>, vector<1x1x2xf32>
      tpu.vector_store %arg9[%c0_57, %c0_58, %c0_59], %105 {strides = array<i32>} : memref<1x1x2xf32, #tpu.memory_space<vmem>>, vector<1x1x2xf32>,
    } else {
    }
    return
  }
  func.func @transform_0(%arg0: i32, %arg1: i32) -> (i32, i32, i32, i32) {
    %c0_i32 = arith.constant 0 : i32
    %c0_i32_0 = arith.constant 0 : i32
    %c0_i32_1 = arith.constant 0 : i32
    %c0_i32_2 = arith.constant 0 : i32
    return %arg0, %c0_i32, %c0_i32_0, %c0_i32_1 : i32, i32, i32, i32
  }
  func.func @transform_1(%arg0: i32, %arg1: i32) -> (i32, i32, i32) {
    %c0_i32 = arith.constant 0 : i32
    %c0_i32_0 = arith.constant 0 : i32
    %c0_i32_1 = arith.constant 0 : i32
    %c0_i32_2 = arith.constant 0 : i32
    return %c0_i32, %c0_i32_0, %c0_i32_1 : i32, i32, i32
  }
  func.func @transform_2(%arg0: i32, %arg1: i32) -> (i32, i32) {
    %c0_i32 = arith.constant 0 : i32
    %c0_i32_0 = arith.constant 0 : i32
    %c0_i32_1 = arith.constant 0 : i32
    return %c0_i32, %c0_i32_0 : i32, i32
  }
  func.func @transform_3(%arg0: i32, %arg1: i32) -> (i32, i32) {
    %c0_i32 = arith.constant 0 : i32
    %c0_i32_0 = arith.constant 0 : i32
    %c0_i32_1 = arith.constant 0 : i32
    return %c0_i32, %c0_i32_0 : i32, i32
  }
  func.func @transform_4(%arg0: i32, %arg1: i32) -> (i32, i32) {
    %c0_i32 = arith.constant 0 : i32
    %c0_i32_0 = arith.constant 0 : i32
    %c0_i32_1 = arith.constant 0 : i32
    return %c0_i32, %c0_i32_0 : i32, i32
  }
  func.func @transform_5(%arg0: i32, %arg1: i32) -> (i32, i32) {
    %c0_i32 = arith.constant 0 : i32
    %c0_i32_0 = arith.constant 0 : i32
    %c0_i32_1 = arith.constant 0 : i32
    return %c0_i32, %c0_i32_0 : i32, i32
  }
  func.func @transform_6(%arg0: i32, %arg1: i32) -> (i32, i32) {
    %c0_i32 = arith.constant 0 : i32
    %c0_i32_0 = arith.constant 0 : i32
    %c0_i32_1 = arith.constant 0 : i32
    return %c0_i32, %c0_i32_0 : i32, i32
  }
  func.func @transform_7(%arg0: i32, %arg1: i32) -> (i32, i32, i32) {
    %c0_i32 = arith.constant 0 : i32
    %c0_i32_0 = arith.constant 0 : i32
    %c0_i32_1 = arith.constant 0 : i32
    return %arg0, %c0_i32, %c0_i32_0 : i32, i32, i32
  }
}

</mosaic_0001>

<llo_original>
// kernel: two_inputs_net_forward.1
$region0: #{two_inputs_net_forward.1}
  #allocation0 [shape = 'u32[]', space=smem, size = 0x4, offset = 0x4, fixed_abs, tag = 'smem constant byte address 0x4 - core index']
  #allocation1 [shape = 'u32[144,128]{1,0:T(1,128)}', space=vmem, size = 0x12000, scoped, tag = 'internal scratch']
  #allocation2 [shape = 'f32[1,2208]{1,0:T(1,128)}', space=vmem, size = 0x2400, scoped, tag = 'scratch operand']
  %s0 = inlined_call_operand.vmem [shape: bf16[2,18,18,64], index: 0, kind: input, shape index: {}]
  %s1 = inlined_call_operand.vmem [shape: bf16[9,64,3], index: 1, kind: input, shape index: {}]
  %s2 = inlined_call_operand.vmem [shape: f32[1,3], index: 2, kind: input, shape index: {}]
  %s3 = inlined_call_operand.vmem [shape: f32[3,2208], index: 3, kind: input, shape index: {}]
  %s4 = inlined_call_operand.vmem [shape: f32[1,2208], index: 4, kind: input, shape index: {}]
  %s5 = inlined_call_operand.vmem [shape: f32[2208,2], index: 5, kind: input, shape index: {}]
  %s6 = inlined_call_operand.vmem [shape: f32[1,2], index: 6, kind: input, shape index: {}]
  %s7 = inlined_call_operand.hbm [shape: f32[2,1,2], index: 7, kind: output, shape index: {}]
  %s8 = sld [smem:[#allocation0]]
  $region69: #{two_inputs_net_forward.1} parent=0
    _
  %s10 = ssub.s32 1, %s8
  %s11 = scalar_select 0, %s10, %s8
  $region1: #{two_inputs_net_forward.1} parent=0
    #allocation3 [shape = 'u8[1024]{0}', space=vmem, size = 0x400, scoped, tag = 'output window, operand 0']
    #allocation4 [shape = 's32[2]{0}', space=sflag, size = 0x8, scoped, tag = 'scoped memory for two_inputs_net_forward.1']
    %12 = vsyncpa [#allocation4], 0
    %s13 = scalar_lea.sflag [#allocation4], 1
    %14 = vsyncpa %s13, 0
    loop: start=0, step=1, limit=6
    $region2: #{two_inputs_net_forward.1} parent=1 // loop_pre_header
      _
    $region3: #{two_inputs_net_forward.1} parent=1 // loop_header
      %s16 = sphi 0, %s20
      %p17 = scmp.ge.s32.totalorder %s16, 6
      %s23 = sphi 0, %s35
      %s24 = sphi 0, %s31
      %s25 = sphi 0, %s23
      %s26 = sphi 0, %s24
      %s27 = sphi 0, %s25
      %s28 = sphi 0, %s26
      %s38 = sphi 0, %s40
      %s41 = sphi 0, %s38
      %s42 = sphi 0, %s41
      %s58 = sphi 0, %s42
      %s62 = sphi 0, %s62
      %s64 = sphi 0, %s62
      %s65 = sphi 0, %s64
      %s79 = sphi 0, %s65
      %s83 = sphi 0, %s83
      %s85 = sphi 0, %s83
      %s86 = sphi 0, %s85
      %s100 = sphi 0, %s86
      %s104 = sphi 0, %s104
      %s106 = sphi 0, %s104
      %s107 = sphi 0, %s106
      %s121 = sphi 0, %s107
      %s125 = sphi 0, %s125
      %s127 = sphi 0, %s125
      %s128 = sphi 0, %s127
      %s142 = sphi 0, %s128
      %s146 = sphi 0, %s146
      %s148 = sphi 0, %s146
      %s149 = sphi 0, %s148
      %s163 = sphi 0, %s149
      %s167 = sphi 0, %s167
      %s169 = sphi 0, %s167
      %s170 = sphi 0, %s169
      %s184 = sphi 0, %s170
      %s190 = sphi 0, %s192
      %s193 = sphi 0, %s190
      %s194 = sphi 0, %s193
      %s210 = sphi 0, %s194
    $region4: #{two_inputs_net_forward.1} parent=1 // loop_header_branch
      %19 = sbr.rel (%p17) target = $region8
    $region5: #{two_inputs_net_forward.1} parent=1 // loop_body
      %s21 = ssub.s32 %s16, 1
      %s22 = ssub.s32 %s16, 2
      %s29 = sadd.s32 1, %s24
      %p30 = scmp.ge.s32.totalorder %s29, 2
      %s31 = scalar_select %p30, 0, %s29
      %s32 = sadd.s32 1, %s23
      %s33 = scalar_select %p30, %s32, %s23
      %p34 = scmp.ge.s32.totalorder %s33, 2
      %s35 = scalar_select %p34, 0, %s33
      %s36 = ssub.s32 %s23, %s35
      %p37 = scmp.eq.s32.totalorder %s36, 0
      %s39 = sadd.s32 %s38, 1
      %s40 = scalar_select %p37, %s38, %s39
      %p43 = pneg %p37
      %p44 = scmp.eq.s32.totalorder %s16, 3
      %p45 = por %p43, %p44
      %p46 = scmp.ne.s32.totalorder %s38, %s41
      %p47 = scmp.eq.s32.totalorder %s16, 0
      %p48 = por %p46, %p47
      %p49 = scmp.ne.s32.totalorder %s38, %s41
      %p50 = scmp.eq.s32.totalorder %s21, 3
      %p51 = por %p49, %p50
      %p52 = scmp.ne.s32.totalorder %s41, %s42
      %p53 = scmp.eq.s32.totalorder %s21, 0
      %p54 = por %p52, %p53
      %p55 = scmp.ne.s32.totalorder %s41, %s42
      %p56 = scmp.eq.s32.totalorder %s22, 3
      %p57 = por %p55, %p56
      %p59 = scmp.ne.s32.totalorder %s42, %s58
      %p60 = scmp.eq.s32.totalorder %s22, 0
      %p61 = por %p59, %p60
      %s63 = sadd.s32 %s62, 1
      %p66 = scmp.eq.s32.totalorder %s16, 3
      %p67 = scmp.ne.s32.totalorder %s62, %s64
      %p68 = scmp.eq.s32.totalorder %s16, 0
      %p69 = por %p67, %p68
      %p70 = scmp.ne.s32.totalorder %s62, %s64
      %p71 = scmp.eq.s32.totalorder %s21, 3
      %p72 = por %p70, %p71
      %p73 = scmp.ne.s32.totalorder %s64, %s65
      %p74 = scmp.eq.s32.totalorder %s21, 0
      %p75 = por %p73, %p74
      %p76 = scmp.ne.s32.totalorder %s64, %s65
      %p77 = scmp.eq.s32.totalorder %s22, 3
      %p78 = por %p76, %p77
      %p80 = scmp.ne.s32.totalorder %s65, %s79
      %p81 = scmp.eq.s32.totalorder %s22, 0
      %p82 = por %p80, %p81
      %s84 = sadd.s32 %s83, 1
      %p87 = scmp.eq.s32.totalorder %s16, 3
      %p88 = scmp.ne.s32.totalorder %s83, %s85
      %p89 = scmp.eq.s32.totalorder %s16, 0
      %p90 = por %p88, %p89
      %p91 = scmp.ne.s32.totalorder %s83, %s85
      %p92 = scmp.eq.s32.totalorder %s21, 3
      %p93 = por %p91, %p92
      %p94 = scmp.ne.s32.totalorder %s85, %s86
      %p95 = scmp.eq.s32.totalorder %s21, 0
      %p96 = por %p94, %p95
      %p97 = scmp.ne.s32.totalorder %s85, %s86
      %p98 = scmp.eq.s32.totalorder %s22, 3
      %p99 = por %p97, %p98
      %p101 = scmp.ne.s32.totalorder %s86, %s100
      %p102 = scmp.eq.s32.totalorder %s22, 0
      %p103 = por %p101, %p102
      %s105 = sadd.s32 %s104, 1
      %p108 = scmp.eq.s32.totalorder %s16, 3
      %p109 = scmp.ne.s32.totalorder %s104, %s106
      %p110 = scmp.eq.s32.totalorder %s16, 0
      %p111 = por %p109, %p110
      %p112 = scmp.ne.s32.totalorder %s104, %s106
      %p113 = scmp.eq.s32.totalorder %s21, 3
      %p114 = por %p112, %p113
      %p115 = scmp.ne.s32.totalorder %s106, %s107
      %p116 = scmp.eq.s32.totalorder %s21, 0
      %p117 = por %p115, %p116
      %p118 = scmp.ne.s32.totalorder %s106, %s107
      %p119 = scmp.eq.s32.totalorder %s22, 3
      %p120 = por %p118, %p119
      %p122 = scmp.ne.s32.totalorder %s107, %s121
      %p123 = scmp.eq.s32.totalorder %s22, 0
      %p124 = por %p122, %p123
      %s126 = sadd.s32 %s125, 1
      %p129 = scmp.eq.s32.totalorder %s16, 3
      %p130 = scmp.ne.s32.totalorder %s125, %s127
      %p131 = scmp.eq.s32.totalorder %s16, 0
      %p132 = por %p130, %p131
      %p133 = scmp.ne.s32.totalorder %s125, %s127
      %p134 = scmp.eq.s32.totalorder %s21, 3
      %p135 = por %p133, %p134
      %p136 = scmp.ne.s32.totalorder %s127, %s128
      %p137 = scmp.eq.s32.totalorder %s21, 0
      %p138 = por %p136, %p137
      %p139 = scmp.ne.s32.totalorder %s127, %s128
      %p140 = scmp.eq.s32.totalorder %s22, 3
      %p141 = por %p139, %p140
      %p143 = scmp.ne.s32.totalorder %s128, %s142
      %p144 = scmp.eq.s32.totalorder %s22, 0
      %p145 = por %p143, %p144
      %s147 = sadd.s32 %s146, 1
      %p150 = scmp.eq.s32.totalorder %s16, 3
      %p151 = scmp.ne.s32.totalorder %s146, %s148
      %p152 = scmp.eq.s32.totalorder %s16, 0
      %p153 = por %p151, %p152
      %p154 = scmp.ne.s32.totalorder %s146, %s148
      %p155 = scmp.eq.s32.totalorder %s21, 3
      %p156 = por %p154, %p155
      %p157 = scmp.ne.s32.totalorder %s148, %s149
      %p158 = scmp.eq.s32.totalorder %s21, 0
      %p159 = por %p157, %p158
      %p160 = scmp.ne.s32.totalorder %s148, %s149
      %p161 = scmp.eq.s32.totalorder %s22, 3
      %p162 = por %p160, %p161
      %p164 = scmp.ne.s32.totalorder %s149, %s163
      %p165 = scmp.eq.s32.totalorder %s22, 0
      %p166 = por %p164, %p165
      %s168 = sadd.s32 %s167, 1
      %p171 = scmp.eq.s32.totalorder %s16, 3
      %p172 = scmp.ne.s32.totalorder %s167, %s169
      %p173 = scmp.eq.s32.totalorder %s16, 0
      %p174 = por %p172, %p173
      %p175 = scmp.ne.s32.totalorder %s167, %s169
      %p176 = scmp.eq.s32.totalorder %s21, 3
      %p177 = por %p175, %p176
      %p178 = scmp.ne.s32.totalorder %s169, %s170
      %p179 = scmp.eq.s32.totalorder %s21, 0
      %p180 = por %p178, %p179
      %p181 = scmp.ne.s32.totalorder %s169, %s170
      %p182 = scmp.eq.s32.totalorder %s22, 3
      %p183 = por %p181, %p182
      %p185 = scmp.ne.s32.totalorder %s170, %s184
      %p186 = scmp.eq.s32.totalorder %s22, 0
      %p187 = por %p185, %p186
      %s188 = ssub.s32 %s23, %s35
      %p189 = scmp.eq.s32.totalorder %s188, 0
      %s191 = sadd.s32 %s190, 1
      %s192 = scalar_select %p189, %s190, %s191
      %p195 = pneg %p189
      %p196 = scmp.eq.s32.totalorder %s16, 3
      %p197 = por %p195, %p196
      %p198 = scmp.ne.s32.totalorder %s190, %s193
      %p199 = scmp.eq.s32.totalorder %s16, 0
      %p200 = por %p198, %p199
      %p201 = scmp.ne.s32.totalorder %s190, %s193
      %p202 = scmp.eq.s32.totalorder %s21, 3
      %p203 = por %p201, %p202
      %p204 = scmp.ne.s32.totalorder %s193, %s194
      %p205 = scmp.eq.s32.totalorder %s21, 0
      %p206 = por %p204, %p205
      %p207 = scmp.ne.s32.totalorder %s193, %s194
      %p208 = scmp.eq.s32.totalorder %s22, 3
      %p209 = por %p207, %p208
      %p211 = scmp.ne.s32.totalorder %s194, %s210
      %p212 = scmp.eq.s32.totalorder %s22, 0
      %p213 = por %p211, %p212
      %p214 = scmp.le.s32.totalorder 1, %s16
      %p215 = scmp.lt.s32.totalorder %s16, 5
      %p216 = pnand %p214, %p215
      %p217 = pneg %p216
      // Predicated region
      $region9: #{two_inputs_net_forward.1} parent=5 // pred_check
        _
      $region10: #{two_inputs_net_forward.1} parent=5 // pred_check_branch
        %219 = sbr.rel (%p216) target = $region12
      $region11: #{two_inputs_net_forward.1} parent=5 // pred_region
        %s220 = ssub.s32 %s16, 1
        // Predicated region
        $region13: #{two_inputs_net_forward.1} parent=11 // pred_check
          %p221 = pneg %p75
        $region14: #{two_inputs_net_forward.1} parent=11 // pred_check_branch
          %223 = sbr.rel (%p221) target = $region16
        $region15: #{two_inputs_net_forward.1} parent=11 // pred_region
          _
        $region16: #{two_inputs_net_forward.1} parent=11 // pred_fallthru
          _
        // Predicated region
        $region17: #{two_inputs_net_forward.1} parent=11 // pred_check
          %p224 = pneg %p96
        $region18: #{two_inputs_net_forward.1} parent=11 // pred_check_branch
          %226 = sbr.rel (%p224) target = $region20
        $region19: #{two_inputs_net_forward.1} parent=11 // pred_region
          _
        $region20: #{two_inputs_net_forward.1} parent=11 // pred_fallthru
          _
        // Predicated region
        $region21: #{two_inputs_net_forward.1} parent=11 // pred_check
          %p227 = pneg %p117
        $region22: #{two_inputs_net_forward.1} parent=11 // pred_check_branch
          %229 = sbr.rel (%p227) target = $region24
        $region23: #{two_inputs_net_forward.1} parent=11 // pred_region
          _
        $region24: #{two_inputs_net_forward.1} parent=11 // pred_fallthru
          _
        // Predicated region
        $region25: #{two_inputs_net_forward.1} parent=11 // pred_check
          %p230 = pneg %p138
        $region26: #{two_inputs_net_forward.1} parent=11 // pred_check_branch
          %232 = sbr.rel (%p230) target = $region28
        $region27: #{two_inputs_net_forward.1} parent=11 // pred_region
          _
        $region28: #{two_inputs_net_forward.1} parent=11 // pred_fallthru
          _
        // Predicated region
        $region29: #{two_inputs_net_forward.1} parent=11 // pred_check
          %p233 = pneg %p159
        $region30: #{two_inputs_net_forward.1} parent=11 // pred_check_branch
          %235 = sbr.rel (%p233) target = $region32
        $region31: #{two_inputs_net_forward.1} parent=11 // pred_region
          _
        $region32: #{two_inputs_net_forward.1} parent=11 // pred_fallthru
          _
        // Predicated region
        $region33: #{two_inputs_net_forward.1} parent=11 // pred_check
          %p236 = pneg %p180
        $region34: #{two_inputs_net_forward.1} parent=11 // pred_check_branch
          %238 = sbr.rel (%p236) target = $region36
        $region35: #{two_inputs_net_forward.1} parent=11 // pred_region
          _
        $region36: #{two_inputs_net_forward.1} parent=11 // pred_fallthru
          _
      $region12: #{two_inputs_net_forward.1} parent=5 // pred_fallthru
        _
      %p239 = scmp.lt.s32.totalorder %s16, 4
      // Predicated region
      $region37: #{two_inputs_net_forward.1} parent=5 // pred_check
        %p240 = pneg %p239
      $region38: #{two_inputs_net_forward.1} parent=5 // pred_check_branch
        %242 = sbr.rel (%p240) target = $region40
      $region39: #{two_inputs_net_forward.1} parent=5 // pred_region
        // Predicated region
        $region41: #{two_inputs_net_forward.1} parent=39 // pred_check
          %p243 = pneg %p48
        $region42: #{two_inputs_net_forward.1} parent=39 // pred_check_branch
          %245 = sbr.rel (%p243) target = $region44
        $region43: #{two_inputs_net_forward.1} parent=39 // pred_region
          %p246 = scmp.lt.s32.totalorder %s23, 1
          %s247 = scalar_select %p246, %s23, 1
          %s248 = smul.addr %s247, 54
          %s249 = smul.addr %s248, 4
          %s250 = scalar_lea.vmem %s0, %s249
        $region44: #{two_inputs_net_forward.1} parent=39 // pred_fallthru
          _
      $region40: #{two_inputs_net_forward.1} parent=5 // pred_fallthru
        _
      %p251 = scmp.le.s32.totalorder 1, %s16
      %p252 = scmp.lt.s32.totalorder %s16, 5
      %p253 = pnand %p251, %p252
      %p254 = pneg %p253
      // Predicated region
      $region45: #{two_inputs_net_forward.1} parent=5 // pred_check
        _
      $region46: #{two_inputs_net_forward.1} parent=5 // pred_check_branch
        %256 = sbr.rel (%p253) target = $region48
      $region47: #{two_inputs_net_forward.1} parent=5 // pred_region
        %s257 = ssub.s32 %s16, 1
        %p258 = scmp.lt.s32.totalorder %s25, 1
        %s259 = scalar_select %p258, %s25, 1
        %s260 = smul.addr %s259, 54
        %s261 = smul.addr %s260, 4
        %s262 = scalar_lea.vmem %s0, %s261
        %p263 = pneg %p54
        %p264 = pneg %p51
        %p265 = pneg %p75
        %p266 = pneg %p72
        %p267 = pneg %p96
        %p268 = pneg %p93
        %p269 = pneg %p117
        %p270 = pneg %p114
        %p271 = pneg %p138
        %p272 = pneg %p135
        %p273 = pneg %p159
        %p274 = pneg %p156
        %p275 = pneg %p180
        %p276 = pneg %p177
        %p277 = pneg %p206
        %p278 = pneg %p203
        %s279 = sand.u32 %s193, 1
        %s280 = scalar_lea.sflag [#allocation4], %s279
        %s281 = sand.u32 %s193, 1
        %s282 = scalar_lea.vmem [#allocation3], %s281
        %p283 = scmp.lt.s32.totalorder %s25, 1
        %s284 = scalar_select %p283, %s25, 1
        %s285 = smul.addr %s284, 54
        %s286 = smul.addr %s285, 4
        %s287 = scalar_lea.vmem %s0, %s286
        %p289 = scmp.eq.s32.totalorder %s26, 0
        // Predicated region
        $region49: #{two_inputs_net_forward.1} parent=47 // pred_check
          %p290 = pneg %p289
        $region50: #{two_inputs_net_forward.1} parent=47 // pred_check_branch
          %292 = sbr.rel (%p290) target = $region52
        $region51: #{two_inputs_net_forward.1} parent=47 // pred_region
          %293 = vst [vmem:[#allocation2] sm:$0xff] 0.0
          %294 = vst [vmem:[#allocation2 + $0x8] sm:$0xff] 0.0
          %v295 = vlaneseq
          %vm296 = vcmp.ge.s32.totalorder %v295, 0
          %vm297 = vcmp.lt.s32.totalorder %v295, 160
          %vm298 = vmand %vm296, %vm297
          %299 = vst.msk [vmem:[#allocation2 + $0x10] sm:$0x3] %vm298, 0.0
        $region52: #{two_inputs_net_forward.1} parent=47 // pred_fallthru
          _
        %s300 = smul.u32 %s26, 8
        %s301 = smul.u32 %s300, 3
        %s302 = smul.addr %s301, 4
        %s303 = scalar_lea.vmem %s287, %s302
        %v304 = vld [vmem:[%s303] sm:$0xf]
        %v305 = vld [vmem:[%s303 + $0x4] sm:$0xf]
        %v306 = vld [vmem:[%s303 + $0x8] sm:$0x1]
        %v307 = vld [vmem:[%s303 + $0xc] sm:$0xf]
        %v308 = vld [vmem:[%s303 + $0x10] sm:$0xf]
        %v309 = vld [vmem:[%s303 + $0x14] sm:$0x1]
        %v310 = vld [vmem:[%s303 + $0x18] sm:$0xf]
        %v311 = vld [vmem:[%s303 + $0x1c] sm:$0xf]
        %v312 = vld [vmem:[%s303 + $0x20] sm:$0x1]
        %v313 = vld [vmem:[%s303 + $0x24] sm:$0xf]
        %v314 = vld [vmem:[%s303 + $0x28] sm:$0xf]
        %v315 = vld [vmem:[%s303 + $0x2c] sm:$0x1]
        %v316 = vld [vmem:[%s303 + $0x30] sm:$0xf]
        %v317 = vld [vmem:[%s303 + $0x34] sm:$0xf]
        %v318 = vld [vmem:[%s303 + $0x38] sm:$0x1]
        %v319 = vld [vmem:[%s303 + $0x3c] sm:$0xf]
        %v320 = vld [vmem:[%s303 + $0x40] sm:$0xf]
        %v321 = vld [vmem:[%s303 + $0x44] sm:$0x1]
        %v322 = vld [vmem:[%s303 + $0x48] sm:$0xf]
        %v323 = vld [vmem:[%s303 + $0x4c] sm:$0xf]
        %v324 = vld [vmem:[%s303 + $0x50] sm:$0x1]
        %v325 = vld [vmem:[%s303 + $0x54] sm:$0xf]
        %v326 = vld [vmem:[%s303 + $0x58] sm:$0xf]
        %v327 = vld [vmem:[%s303 + $0x5c] sm:$0x1]
        %v328 = vld [vmem:[%s303 + $0x60] sm:$0xf]
        %v329 = vld [vmem:[%s303 + $0x64] sm:$0xf]
        %v330 = vld [vmem:[%s303 + $0x68] sm:$0x1]
        %v331 = vld [vmem:[%s303 + $0x6c] sm:$0xf]
        %v332 = vld [vmem:[%s303 + $0x70] sm:$0xf]
        %v333 = vld [vmem:[%s303 + $0x74] sm:$0x1]
        %v334 = vld [vmem:[%s1] sm:$0xf]
        %v335 = vld [vmem:[%s1 + $0x4] sm:$0xf]
        %v336 = vld [vmem:[%s1 + $0x8] sm:$0xf]
        %v337 = vld [vmem:[%s1 + $0xc] sm:$0xf]
        %v338 = vld [vmem:[%s1 + $0x10] sm:$0xf]
        %v339 = vld [vmem:[%s1 + $0x14] sm:$0xf]
        %v340 = vld [vmem:[%s1 + $0x18] sm:$0xf]
        %v341 = vld [vmem:[%s1 + $0x1c] sm:$0xf]
        %vm342 = vsmask.f32 3328
        %vm343 = vsmask.f32 7440
        %vm344 = vmor %vm342, %vm343
        %v346 = vshrl.u32 %v304, 16
        %v348 = vrot.slane %v346, 4
        %v349 = vshll.u32 %v304, 16
        %v351 = vrot.slane %v349, 5
        %v352 = vor.u32 %v348, %v351
        %v353 = vrot.slane %v352, 4
        %v355 = vshll.u32 %v305, 16
        %v357 = vrot.slane %v355, 5
        %v358 = vsel %vm344, %v353, %v357
        %v359 = vshrl.u32 %v305, 16
        %v361 = vrot.slane %v359, 4
        %v362 = vor.u32 %v361, %v357
        %v363 = vrot.slane %v362, 4
        %v365 = vshll.u32 %v306, 16
        %v367 = vrot.slane %v365, 5
        %v368 = vsel %vm344, %v363, %v367
        %v370 = vshrl.u32 %v307, 16
        %v372 = vrot.slane %v370, 4
        %v373 = vshll.u32 %v307, 16
        %v375 = vrot.slane %v373, 5
        %v376 = vor.u32 %v372, %v375
        %v377 = vrot.slane %v376, 4
        %v379 = vshll.u32 %v308, 16
        %v381 = vrot.slane %v379, 5
        %v382 = vsel %vm344, %v377, %v381
        %v383 = vshrl.u32 %v308, 16
        %v385 = vrot.slane %v383, 4
        %v386 = vor.u32 %v385, %v381
        %v387 = vrot.slane %v386, 4
        %v389 = vshll.u32 %v309, 16
        %v391 = vrot.slane %v389, 5
        %v392 = vsel %vm344, %v387, %v391
        %v394 = vshrl.u32 %v310, 16
        %v396 = vrot.slane %v394, 4
        %v397 = vshll.u32 %v310, 16
        %v399 = vrot.slane %v397, 5
        %v400 = vor.u32 %v396, %v399
        %v401 = vrot.slane %v400, 4
        %v403 = vshll.u32 %v311, 16
        %v405 = vrot.slane %v403, 5
        %v406 = vsel %vm344, %v401, %v405
        %v407 = vshrl.u32 %v311, 16
        %v409 = vrot.slane %v407, 4
        %v410 = vor.u32 %v409, %v405
        %v411 = vrot.slane %v410, 4
        %v413 = vshll.u32 %v312, 16
        %v415 = vrot.slane %v413, 5
        %v416 = vsel %vm344, %v411, %v415
        %v418 = vshrl.u32 %v313, 16
        %v420 = vrot.slane %v418, 4
        %v421 = vshll.u32 %v313, 16
        %v423 = vrot.slane %v421, 5
        %v424 = vor.u32 %v420, %v423
        %v425 = vrot.slane %v424, 4
        %v427 = vshll.u32 %v314, 16
        %v429 = vrot.slane %v427, 5
        %v430 = vsel %vm344, %v425, %v429
        %v431 = vshrl.u32 %v314, 16
        %v433 = vrot.slane %v431, 4
        %v434 = vor.u32 %v433, %v429
        %v435 = vrot.slane %v434, 4
        %v437 = vshll.u32 %v315, 16
        %v439 = vrot.slane %v437, 5
        %v440 = vsel %vm344, %v435, %v439
        %v442 = vshrl.u32 %v316, 16
        %v444 = vrot.slane %v442, 4
        %v445 = vshll.u32 %v316, 16
        %v447 = vrot.slane %v445, 5
        %v448 = vor.u32 %v444, %v447
        %v449 = vrot.slane %v448, 4
        %v451 = vshll.u32 %v317, 16
        %v453 = vrot.slane %v451, 5
        %v454 = vsel %vm344, %v449, %v453
        %v455 = vshrl.u32 %v317, 16
        %v457 = vrot.slane %v455, 4
        %v458 = vor.u32 %v457, %v453
        %v459 = vrot.slane %v458, 4
        %v461 = vshll.u32 %v318, 16
        %v463 = vrot.slane %v461, 5
        %v464 = vsel %vm344, %v459, %v463
        %v466 = vshrl.u32 %v319, 16
        %v468 = vrot.slane %v466, 4
        %v469 = vshll.u32 %v319, 16
        %v471 = vrot.slane %v469, 5
        %v472 = vor.u32 %v468, %v471
        %v473 = vrot.slane %v472, 4
        %v475 = vshll.u32 %v320, 16
        %v477 = vrot.slane %v475, 5
        %v478 = vsel %vm344, %v473, %v477
        %v479 = vshrl.u32 %v320, 16
        %v481 = vrot.slane %v479, 4
        %v482 = vor.u32 %v481, %v477
        %v483 = vrot.slane %v482, 4
        %v485 = vshll.u32 %v321, 16
        %v487 = vrot.slane %v485, 5
        %v488 = vsel %vm344, %v483, %v487
        %v490 = vshrl.u32 %v322, 16
        %v492 = vrot.slane %v490, 4
        %v493 = vshll.u32 %v322, 16
        %v495 = vrot.slane %v493, 5
        %v496 = vor.u32 %v492, %v495
        %v497 = vrot.slane %v496, 4
        %v499 = vshll.u32 %v323, 16
        %v501 = vrot.slane %v499, 5
        %v502 = vsel %vm344, %v497, %v501
        %v503 = vshrl.u32 %v323, 16
        %v505 = vrot.slane %v503, 4
        %v506 = vor.u32 %v505, %v501
        %v507 = vrot.slane %v506, 4
        %v509 = vshll.u32 %v324, 16
        %v511 = vrot.slane %v509, 5
        %v512 = vsel %vm344, %v507, %v511
        %v514 = vshrl.u32 %v325, 16
        %v516 = vrot.slane %v514, 4
        %v517 = vshll.u32 %v325, 16
        %v519 = vrot.slane %v517, 5
        %v520 = vor.u32 %v516, %v519
        %v521 = vrot.slane %v520, 4
        %v523 = vshll.u32 %v326, 16
        %v525 = vrot.slane %v523, 5
        %v526 = vsel %vm344, %v521, %v525
        %v527 = vshrl.u32 %v326, 16
        %v529 = vrot.slane %v527, 4
        %v530 = vor.u32 %v529, %v525
        %v531 = vrot.slane %v530, 4
        %v533 = vshll.u32 %v327, 16
        %v535 = vrot.slane %v533, 5
        %v536 = vsel %vm344, %v531, %v535
        %s537 = scalar_lea.vmem %s1, 32
        %v538 = vld [vmem:[%s537] sm:$0xf]
        %v539 = vld [vmem:[%s537 + $0x4] sm:$0xf]
        %v540 = vld [vmem:[%s537 + $0x8] sm:$0xf]
        %v541 = vld [vmem:[%s537 + $0xc] sm:$0xf]
        %v542 = vld [vmem:[%s537 + $0x10] sm:$0xf]
        %v543 = vld [vmem:[%s537 + $0x14] sm:$0xf]
        %v544 = vld [vmem:[%s537 + $0x18] sm:$0xf]
        %v545 = vld [vmem:[%s537 + $0x1c] sm:$0xf]
        %v546 = vunpack.c.l.b16 %v358
        %v547 = vunpack.c.l.b16 %v368
        %v548 = vunpack.c.l.b16 %v382
        %v549 = vunpack.c.l.b16 %v392
        %v550 = vunpack.c.l.b16 %v406
        %v551 = vunpack.c.l.b16 %v416
        %v552 = vunpack.c.l.b16 %v430
        %v553 = vunpack.c.l.b16 %v440
        %v554 = vunpack.c.l.b16 %v454
        %v555 = vunpack.c.l.b16 %v464
        %v556 = vunpack.c.l.b16 %v478
        %v557 = vunpack.c.l.b16 %v488
        %v558 = vunpack.c.l.b16 %v502
        %v559 = vunpack.c.l.b16 %v512
        %v560 = vunpack.c.l.b16 %v526
        %v561 = vunpack.c.l.b16 %v536
        %v562 = vpack.c.b16 %v547, %v546
        %v563 = vpack.c.b16 %v549, %v548
        %v564 = vpack.c.b16 %v551, %v550
        %v565 = vpack.c.b16 %v553, %v552
        %v566 = vpack.c.b16 %v555, %v554
        %v567 = vpack.c.b16 %v557, %v556
        %v568 = vpack.c.b16 %v559, %v558
        %v569 = vpack.c.b16 %v561, %v560
        %v578 = vunpack.c.l.b16 %v538
        %v579 = vunpack.c.l.b16 %v539
        %v580 = vunpack.c.l.b16 %v540
        %v581 = vunpack.c.l.b16 %v541
        %v582 = vunpack.c.l.b16 %v542
        %v583 = vunpack.c.l.b16 %v543
        %v584 = vunpack.c.l.b16 %v544
        %v585 = vunpack.c.l.b16 %v545
        %v586 = vpack.c.b16 %v579, %v578
        %v587 = vpack.c.b16 %v581, %v580
        %v588 = vpack.c.b16 %v583, %v582
        %v589 = vpack.c.b16 %v585, %v584
        %vm594 = vcmask 523264
        %v596 = vsel %vm594, %v562, 0
        %v599 = vsel %vm594, %v563, 0
        %v602 = vsel %vm594, %v564, 0
        %v605 = vsel %vm594, %v565, 0
        %v608 = vsel %vm594, %v566, 0
        %v611 = vsel %vm594, %v567, 0
        %v614 = vsel %vm594, %v568, 0
        %v617 = vsel %vm594, %v569, 0
        %619 = vmatprep.subr.bf16.mxu0 0
        %620 = vmatpush1.bf16.msra.mxu0 %v586
        %621 = vmatprep.subr.bf16.mxu0 0
        %622 = vmatpush1.bf16.msra.mxu0 %v587
        %623 = vmatprep.subr.bf16.mxu0 0
        %624 = vmatpush1.bf16.msra.mxu0 %v588
        %625 = vmatprep.subr.bf16.mxu0 0
        %626 = vmatpush1.bf16.msra.mxu0 %v589
        %627 = vmatprep.subr.bf16.mxu0 0
        %628 = vmatpush1.bf16.msra.mxu0 0
        %629 = vmatprep.subr.bf16.mxu0 0
        %630 = vmatpush1.bf16.msra.mxu0 0
        %631 = vmatprep.subr.bf16.mxu0 0
        %632 = vmatpush1.bf16.msra.mxu0 0
        %633 = vmatprep.subr.bf16.mxu0 0
        %634 = vmatpush1.bf16.msra.mxu0 0
        %635 = vmatprep.subr.bf16.mxu0 0
        %636 = vmatpush1.bf16.msra.mxu0 0
        %637 = vmatprep.subr.bf16.mxu0 0
        %638 = vmatpush1.bf16.msra.mxu0 0
        %639 = vmatprep.subr.bf16.mxu0 0
        %640 = vmatpush1.bf16.msra.mxu0 0
        %641 = vmatprep.subr.bf16.mxu0 0
        %642 = vmatpush1.bf16.msra.mxu0 0
        %643 = vmatprep.subr.bf16.mxu0 0
        %644 = vmatpush1.bf16.msra.mxu0 0
        %645 = vmatprep.subr.bf16.mxu0 0
        %646 = vmatpush1.bf16.msra.mxu0 0
        %647 = vmatprep.subr.bf16.mxu0 0
        %648 = vmatpush1.bf16.msra.mxu0 0
        %649 = vmatprep.subr.bf16.mxu0 0
        %650 = vmatpush1.bf16.msra.mxu0 0
        %651 = vmatprep.mubr.bf16.mxu0 0
        %652 = vmatmul.mubr.bf16.gmra.mrb[0].mxu0 %v596
        %v653 = vpop.f32.mrb[0].mxu0
        %v654 = vadd.f32 0.0, %v653
        %v655 = vpop.f32.mrb[0].mxu0
        %v656 = vpop.f32.mrb[0].mxu0
        %v657 = vadd.f32 0.0, %v656
        %v658 = vpop.f32.mrb[0].mxu0
        %659 = vmatprep.mubr.bf16.mxu0 0
        %660 = vmatmul.mubr.bf16.gmra.mrb[0].mxu0 %v599
        %v661 = vpop.f32.mrb[0].mxu0
        %v662 = vadd.f32 0.0, %v661
        %v663 = vpop.f32.mrb[0].mxu0
        %v664 = vpop.f32.mrb[0].mxu0
        %v665 = vadd.f32 0.0, %v664
        %v666 = vpop.f32.mrb[0].mxu0
        %667 = vmatprep.mubr.bf16.mxu0 0
        %668 = vmatmul.mubr.bf16.gmra.mrb[0].mxu0 %v602
        %v669 = vpop.f32.mrb[0].mxu0
        %v670 = vadd.f32 0.0, %v669
        %v671 = vpop.f32.mrb[0].mxu0
        %v672 = vpop.f32.mrb[0].mxu0
        %v673 = vadd.f32 0.0, %v672
        %v674 = vpop.f32.mrb[0].mxu0
        %675 = vmatprep.mubr.bf16.mxu0 0
        %676 = vmatmul.mubr.bf16.gmra.mrb[0].mxu0 %v605
        %v677 = vpop.f32.mrb[0].mxu0
        %v678 = vadd.f32 0.0, %v677
        %v679 = vpop.f32.mrb[0].mxu0
        %v680 = vpop.f32.mrb[0].mxu0
        %v681 = vadd.f32 0.0, %v680
        %v682 = vpop.f32.mrb[0].mxu0
        %683 = vmatprep.mubr.bf16.mxu0 0
        %684 = vmatmul.mubr.bf16.gmra.mrb[0].mxu0 %v608
        %v685 = vpop.f32.mrb[0].mxu0
        %v686 = vadd.f32 0.0, %v685
        %v687 = vpop.f32.mrb[0].mxu0
        %v688 = vpop.f32.mrb[0].mxu0
        %v689 = vadd.f32 0.0, %v688
        %v690 = vpop.f32.mrb[0].mxu0
        %691 = vmatprep.mubr.bf16.mxu0 0
        %692 = vmatmul.mubr.bf16.gmra.mrb[0].mxu0 %v611
        %v693 = vpop.f32.mrb[0].mxu0
        %v694 = vadd.f32 0.0, %v693
        %v695 = vpop.f32.mrb[0].mxu0
        %v696 = vpop.f32.mrb[0].mxu0
        %v697 = vadd.f32 0.0, %v696
        %v698 = vpop.f32.mrb[0].mxu0
        %699 = vmatprep.mubr.bf16.mxu0 0
        %700 = vmatmul.mubr.bf16.gmra.mrb[0].mxu0 %v614
        %v701 = vpop.f32.mrb[0].mxu0
        %v702 = vadd.f32 0.0, %v701
        %v703 = vpop.f32.mrb[0].mxu0
        %v704 = vpop.f32.mrb[0].mxu0
        %v705 = vadd.f32 0.0, %v704
        %v706 = vpop.f32.mrb[0].mxu0
        %707 = vmatprep.mubr.bf16.mxu0 0
        %708 = vmatmul.mubr.bf16.gmra.mrb[0].mxu0 %v617
        %v709 = vpop.f32.mrb[0].mxu0
        %v710 = vadd.f32 0.0, %v709
        %v711 = vpop.f32.mrb[0].mxu0
        %v712 = vpop.f32.mrb[0].mxu0
        %v713 = vadd.f32 0.0, %v712
        %v714 = vpop.f32.mrb[0].mxu0
        %715 = vdwg.mxu0
        %v732 = vunpack.c.l.b16 %v304
        %v733 = vunpack.c.l.b16 %v305
        %v734 = vunpack.c.l.b16 %v307
        %v735 = vunpack.c.l.b16 %v308
        %v736 = vunpack.c.l.b16 %v310
        %v737 = vunpack.c.l.b16 %v311
        %v738 = vunpack.c.l.b16 %v313
        %v739 = vunpack.c.l.b16 %v314
        %v740 = vunpack.c.l.b16 %v316
        %v741 = vunpack.c.l.b16 %v317
        %v742 = vunpack.c.l.b16 %v319
        %v743 = vunpack.c.l.b16 %v320
        %v744 = vunpack.c.l.b16 %v322
        %v745 = vunpack.c.l.b16 %v323
        %v746 = vunpack.c.l.b16 %v325
        %v747 = vunpack.c.l.b16 %v326
        %v748 = vpack.c.b16 %v733, %v732
        %v749 = vpack.c.b16 %v735, %v734
        %v750 = vpack.c.b16 %v737, %v736
        %v751 = vpack.c.b16 %v739, %v738
        %v752 = vpack.c.b16 %v741, %v740
        %v753 = vpack.c.b16 %v743, %v742
        %v754 = vpack.c.b16 %v745, %v744
        %v755 = vpack.c.b16 %v747, %v746
        %v764 = vunpack.c.l.b16 %v334
        %v765 = vunpack.c.l.b16 %v335
        %v766 = vunpack.c.l.b16 %v336
        %v767 = vunpack.c.l.b16 %v337
        %v768 = vunpack.c.l.b16 %v338
        %v769 = vunpack.c.l.b16 %v339
        %v770 = vunpack.c.l.b16 %v340
        %v771 = vunpack.c.l.b16 %v341
        %v772 = vpack.c.b16 %v765, %v764
        %v773 = vpack.c.b16 %v767, %v766
        %v774 = vpack.c.b16 %v769, %v768
        %v775 = vpack.c.b16 %v771, %v770
        %v781 = vsel %vm594, %v748, 0
        %v784 = vsel %vm594, %v749, 0
        %v787 = vsel %vm594, %v750, 0
        %v790 = vsel %vm594, %v751, 0
        %v793 = vsel %vm594, %v752, 0
        %v796 = vsel %vm594, %v753, 0
        %v799 = vsel %vm594, %v754, 0
        %v802 = vsel %vm594, %v755, 0
        %804 = vmatprep.subr.bf16.mxu0 0
        %805 = vmatpush1.bf16.msra.mxu0 %v772
        %806 = vmatprep.subr.bf16.mxu0 0
        %807 = vmatpush1.bf16.msra.mxu0 %v773
        %808 = vmatprep.subr.bf16.mxu0 0
        %809 = vmatpush1.bf16.msra.mxu0 %v774
        %810 = vmatprep.subr.bf16.mxu0 0
        %811 = vmatpush1.bf16.msra.mxu0 %v775
        %812 = vmatprep.subr.bf16.mxu0 0
        %813 = vmatpush1.bf16.msra.mxu0 0
        %814 = vmatprep.subr.bf16.mxu0 0
        %815 = vmatpush1.bf16.msra.mxu0 0
        %816 = vmatprep.subr.bf16.mxu0 0
        %817 = vmatpush1.bf16.msra.mxu0 0
        %818 = vmatprep.subr.bf16.mxu0 0
        %819 = vmatpush1.bf16.msra.mxu0 0
        %820 = vmatprep.subr.bf16.mxu0 0
        %821 = vmatpush1.bf16.msra.mxu0 0
        %822 = vmatprep.subr.bf16.mxu0 0
        %823 = vmatpush1.bf16.msra.mxu0 0
        %824 = vmatprep.subr.bf16.mxu0 0
        %825 = vmatpush1.bf16.msra.mxu0 0
        %826 = vmatprep.subr.bf16.mxu0 0
        %827 = vmatpush1.bf16.msra.mxu0 0
        %828 = vmatprep.subr.bf16.mxu0 0
        %829 = vmatpush1.bf16.msra.mxu0 0
        %830 = vmatprep.subr.bf16.mxu0 0
        %831 = vmatpush1.bf16.msra.mxu0 0
        %832 = vmatprep.subr.bf16.mxu0 0
        %833 = vmatpush1.bf16.msra.mxu0 0
        %834 = vmatprep.subr.bf16.mxu0 0
        %835 = vmatpush1.bf16.msra.mxu0 0
        %836 = vmatprep.mubr.bf16.mxu0 0
        %837 = vmatmul.mubr.bf16.gmra.mrb[0].mxu0 %v781
        %v838 = vpop.f32.mrb[0].mxu0
        %v839 = vadd.f32 %v654, %v838
        %v840 = vpop.f32.mrb[0].mxu0
        %v841 = vpop.f32.mrb[0].mxu0
        %v842 = vadd.f32 %v657, %v841
        %v843 = vpop.f32.mrb[0].mxu0
        %844 = vmatprep.mubr.bf16.mxu0 0
        %845 = vmatmul.mubr.bf16.gmra.mrb[0].mxu0 %v784
        %v846 = vpop.f32.mrb[0].mxu0
        %v847 = vadd.f32 %v662, %v846
        %v848 = vpop.f32.mrb[0].mxu0
        %v849 = vpop.f32.mrb[0].mxu0
        %v850 = vadd.f32 %v665, %v849
        %v851 = vpop.f32.mrb[0].mxu0
        %852 = vmatprep.mubr.bf16.mxu0 0
        %853 = vmatmul.mubr.bf16.gmra.mrb[0].mxu0 %v787
        %v854 = vpop.f32.mrb[0].mxu0
        %v855 = vadd.f32 %v670, %v854
        %v856 = vpop.f32.mrb[0].mxu0
        %v857 = vpop.f32.mrb[0].mxu0
        %v858 = vadd.f32 %v673, %v857
        %v859 = vpop.f32.mrb[0].mxu0
        %860 = vmatprep.mubr.bf16.mxu0 0
        %861 = vmatmul.mubr.bf16.gmra.mrb[0].mxu0 %v790
        %v862 = vpop.f32.mrb[0].mxu0
        %v863 = vadd.f32 %v678, %v862
        %v864 = vpop.f32.mrb[0].mxu0
        %v865 = vpop.f32.mrb[0].mxu0
        %v866 = vadd.f32 %v681, %v865
        %v867 = vpop.f32.mrb[0].mxu0
        %868 = vmatprep.mubr.bf16.mxu0 0
        %869 = vmatmul.mubr.bf16.gmra.mrb[0].mxu0 %v793
        %v870 = vpop.f32.mrb[0].mxu0
        %v871 = vadd.f32 %v686, %v870
        %v872 = vpop.f32.mrb[0].mxu0
        %v873 = vpop.f32.mrb[0].mxu0
        %v874 = vadd.f32 %v689, %v873
        %v875 = vpop.f32.mrb[0].mxu0
        %876 = vmatprep.mubr.bf16.mxu0 0
        %877 = vmatmul.mubr.bf16.gmra.mrb[0].mxu0 %v796
        %v878 = vpop.f32.mrb[0].mxu0
        %v879 = vadd.f32 %v694, %v878
        %v880 = vpop.f32.mrb[0].mxu0
        %v881 = vpop.f32.mrb[0].mxu0
        %v882 = vadd.f32 %v697, %v881
        %v883 = vpop.f32.mrb[0].mxu0
        %884 = vmatprep.mubr.bf16.mxu0 0
        %885 = vmatmul.mubr.bf16.gmra.mrb[0].mxu0 %v799
        %v886 = vpop.f32.mrb[0].mxu0
        %v887 = vadd.f32 %v702, %v886
        %v888 = vpop.f32.mrb[0].mxu0
        %v889 = vpop.f32.mrb[0].mxu0
        %v890 = vadd.f32 %v705, %v889
        %v891 = vpop.f32.mrb[0].mxu0
        %892 = vmatprep.mubr.bf16.mxu0 0
        %893 = vmatmul.mubr.bf16.gmra.mrb[0].mxu0 %v802
        %v894 = vpop.f32.mrb[0].mxu0
        %v895 = vadd.f32 %v710, %v894
        %v896 = vpop.f32.mrb[0].mxu0
        %v897 = vpop.f32.mrb[0].mxu0
        %v898 = vadd.f32 %v713, %v897
        %v899 = vpop.f32.mrb[0].mxu0
        %900 = vdwg.mxu0
        %vm909 = vcmask 1042432
        %vm910 = vcmask 1046532
        %vm911 = vmor %vm909, %vm910
        %v912 = vrot.slane %v304, 5
        %v913 = vrot.slane %v912, 4
        %v914 = vrot.slane %v305, 5
        %v915 = vsel %vm911, %v913, %v914
        %v916 = vrot.slane %v914, 4
        %v917 = vrot.slane %v306, 5
        %v918 = vsel %vm911, %v916, %v917
        %v919 = vrot.slane %v307, 5
        %v920 = vrot.slane %v919, 4
        %v921 = vrot.slane %v308, 5
        %v922 = vsel %vm911, %v920, %v921
        %v923 = vrot.slane %v921, 4
        %v924 = vrot.slane %v309, 5
        %v925 = vsel %vm911, %v923, %v924
        %v926 = vrot.slane %v310, 5
        %v927 = vrot.slane %v926, 4
        %v928 = vrot.slane %v311, 5
        %v929 = vsel %vm911, %v927, %v928
        %v930 = vrot.slane %v928, 4
        %v931 = vrot.slane %v312, 5
        %v932 = vsel %vm911, %v930, %v931
        %v933 = vrot.slane %v313, 5
        %v934 = vrot.slane %v933, 4
        %v935 = vrot.slane %v314, 5
        %v936 = vsel %vm911, %v934, %v935
        %v937 = vrot.slane %v935, 4
        %v938 = vrot.slane %v315, 5
        %v939 = vsel %vm911, %v937, %v938
        %v940 = vrot.slane %v316, 5
        %v941 = vrot.slane %v940, 4
        %v942 = vrot.slane %v317, 5
        %v943 = vsel %vm911, %v941, %v942
        %v944 = vrot.slane %v942, 4
        %v945 = vrot.slane %v318, 5
        %v946 = vsel %vm911, %v944, %v945
        %v947 = vrot.slane %v319, 5
        %v948 = vrot.slane %v947, 4
        %v949 = vrot.slane %v320, 5
        %v950 = vsel %vm911, %v948, %v949
        %v951 = vrot.slane %v949, 4
        %v952 = vrot.slane %v321, 5
        %v953 = vsel %vm911, %v951, %v952
        %v954 = vrot.slane %v322, 5
        %v955 = vrot.slane %v954, 4
        %v956 = vrot.slane %v323, 5
        %v957 = vsel %vm911, %v955, %v956
        %v958 = vrot.slane %v956, 4
        %v959 = vrot.slane %v324, 5
        %v960 = vsel %vm911, %v958, %v959
        %v961 = vrot.slane %v325, 5
        %v962 = vrot.slane %v961, 4
        %v963 = vrot.slane %v326, 5
        %v964 = vsel %vm911, %v962, %v963
        %v965 = vrot.slane %v963, 4
        %v966 = vrot.slane %v327, 5
        %v967 = vsel %vm911, %v965, %v966
        %s968 = scalar_lea.vmem %s1, 64
        %v969 = vld [vmem:[%s968] sm:$0xf]
        %v970 = vld [vmem:[%s968 + $0x4] sm:$0xf]
        %v971 = vld [vmem:[%s968 + $0x8] sm:$0xf]
        %v972 = vld [vmem:[%s968 + $0xc] sm:$0xf]
        %v973 = vld [vmem:[%s968 + $0x10] sm:$0xf]
        %v974 = vld [vmem:[%s968 + $0x14] sm:$0xf]
        %v975 = vld [vmem:[%s968 + $0x18] sm:$0xf]
        %v976 = vld [vmem:[%s968 + $0x1c] sm:$0xf]
        %v977 = vunpack.c.l.b16 %v915
        %v978 = vunpack.c.l.b16 %v918
        %v979 = vunpack.c.l.b16 %v922
        %v980 = vunpack.c.l.b16 %v925
        %v981 = vunpack.c.l.b16 %v929
        %v982 = vunpack.c.l.b16 %v932
        %v983 = vunpack.c.l.b16 %v936
        %v984 = vunpack.c.l.b16 %v939
        %v985 = vunpack.c.l.b16 %v943
        %v986 = vunpack.c.l.b16 %v946
        %v987 = vunpack.c.l.b16 %v950
        %v988 = vunpack.c.l.b16 %v953
        %v989 = vunpack.c.l.b16 %v957
        %v990 = vunpack.c.l.b16 %v960
        %v991 = vunpack.c.l.b16 %v964
        %v992 = vunpack.c.l.b16 %v967
        %v993 = vpack.c.b16 %v978, %v977
        %v994 = vpack.c.b16 %v980, %v979
        %v995 = vpack.c.b16 %v982, %v981
        %v996 = vpack.c.b16 %v984, %v983
        %v997 = vpack.c.b16 %v986, %v985
        %v998 = vpack.c.b16 %v988, %v987
        %v999 = vpack.c.b16 %v990, %v989
        %v1000 = vpack.c.b16 %v992, %v991
        %v1009 = vunpack.c.l.b16 %v969
        %v1010 = vunpack.c.l.b16 %v970
        %v1011 = vunpack.c.l.b16 %v971
        %v1012 = vunpack.c.l.b16 %v972
        %v1013 = vunpack.c.l.b16 %v973
        %v1014 = vunpack.c.l.b16 %v974
        %v1015 = vunpack.c.l.b16 %v975
        %v1016 = vunpack.c.l.b16 %v976
        %v1017 = vpack.c.b16 %v1010, %v1009
        %v1018 = vpack.c.b16 %v1012, %v1011
        %v1019 = vpack.c.b16 %v1014, %v1013
        %v1020 = vpack.c.b16 %v1016, %v1015
        %v1026 = vsel %vm594, %v993, 0
        %v1029 = vsel %vm594, %v994, 0
        %v1032 = vsel %vm594, %v995, 0
        %v1035 = vsel %vm594, %v996, 0
        %v1038 = vsel %vm594, %v997, 0
        %v1041 = vsel %vm594, %v998, 0
        %v1044 = vsel %vm594, %v999, 0
        %v1047 = vsel %vm594, %v1000, 0
        %1049 = vmatprep.subr.bf16.mxu0 0
        %1050 = vmatpush1.bf16.msra.mxu0 %v1017
        %1051 = vmatprep.subr.bf16.mxu0 0
        %1052 = vmatpush1.bf16.msra.mxu0 %v1018
        %1053 = vmatprep.subr.bf16.mxu0 0
        %1054 = vmatpush1.bf16.msra.mxu0 %v1019
        %1055 = vmatprep.subr.bf16.mxu0 0
        %1056 = vmatpush1.bf16.msra.mxu0 %v1020
        %1057 = vmatprep.subr.bf16.mxu0 0
        %1058 = vmatpush1.bf16.msra.mxu0 0
        %1059 = vmatprep.subr.bf16.mxu0 0
        %1060 = vmatpush1.bf16.msra.mxu0 0
        %1061 = vmatprep.subr.bf16.mxu0 0
        %1062 = vmatpush1.bf16.msra.mxu0 0
        %1063 = vmatprep.subr.bf16.mxu0 0
        %1064 = vmatpush1.bf16.msra.mxu0 0
        %1065 = vmatprep.subr.bf16.mxu0 0
        %1066 = vmatpush1.bf16.msra.mxu0 0
        %1067 = vmatprep.subr.bf16.mxu0 0
        %1068 = vmatpush1.bf16.msra.mxu0 0
        %1069 = vmatprep.subr.bf16.mxu0 0
        %1070 = vmatpush1.bf16.msra.mxu0 0
        %1071 = vmatprep.subr.bf16.mxu0 0
        %1072 = vmatpush1.bf16.msra.mxu0 0
        %1073 = vmatprep.subr.bf16.mxu0 0
        %1074 = vmatpush1.bf16.msra.mxu0 0
        %1075 = vmatprep.subr.bf16.mxu0 0
        %1076 = vmatpush1.bf16.msra.mxu0 0
        %1077 = vmatprep.subr.bf16.mxu0 0
        %1078 = vmatpush1.bf16.msra.mxu0 0
        %1079 = vmatprep.subr.bf16.mxu0 0
        %1080 = vmatpush1.bf16.msra.mxu0 0
        %1081 = vmatprep.mubr.bf16.mxu0 0
        %1082 = vmatmul.mubr.bf16.gmra.mrb[0].mxu0 %v1026
        %v1083 = vpop.f32.mrb[0].mxu0
        %v1084 = vadd.f32 0.0, %v1083
        %v1085 = vpop.f32.mrb[0].mxu0
        %v1086 = vpop.f32.mrb[0].mxu0
        %v1087 = vadd.f32 0.0, %v1086
        %v1088 = vpop.f32.mrb[0].mxu0
        %1089 = vmatprep.mubr.bf16.mxu0 0
        %1090 = vmatmul.mubr.bf16.gmra.mrb[0].mxu0 %v1029
        %v1091 = vpop.f32.mrb[0].mxu0
        %v1092 = vadd.f32 0.0, %v1091
        %v1093 = vpop.f32.mrb[0].mxu0
        %v1094 = vpop.f32.mrb[0].mxu0
        %v1095 = vadd.f32 0.0, %v1094
        %v1096 = vpop.f32.mrb[0].mxu0
        %1097 = vmatprep.mubr.bf16.mxu0 0
        %1098 = vmatmul.mubr.bf16.gmra.mrb[0].mxu0 %v1032
        %v1099 = vpop.f32.mrb[0].mxu0
        %v1100 = vadd.f32 0.0, %v1099
        %v1101 = vpop.f32.mrb[0].mxu0
        %v1102 = vpop.f32.mrb[0].mxu0
        %v1103 = vadd.f32 0.0, %v1102
        %v1104 = vpop.f32.mrb[0].mxu0
        %1105 = vmatprep.mubr.bf16.mxu0 0
        %1106 = vmatmul.mubr.bf16.gmra.mrb[0].mxu0 %v1035
        %v1107 = vpop.f32.mrb[0].mxu0
        %v1108 = vadd.f32 0.0, %v1107
        %v1109 = vpop.f32.mrb[0].mxu0
        %v1110 = vpop.f32.mrb[0].mxu0
        %v1111 = vadd.f32 0.0, %v1110
        %v1112 = vpop.f32.mrb[0].mxu0
        %1113 = vmatprep.mubr.bf16.mxu0 0
        %1114 = vmatmul.mubr.bf16.gmra.mrb[0].mxu0 %v1038
        %v1115 = vpop.f32.mrb[0].mxu0
        %v1116 = vadd.f32 0.0, %v1115
        %v1117 = vpop.f32.mrb[0].mxu0
        %v1118 = vpop.f32.mrb[0].mxu0
        %v1119 = vadd.f32 0.0, %v1118
        %v1120 = vpop.f32.mrb[0].mxu0
        %1121 = vmatprep.mubr.bf16.mxu0 0
        %1122 = vmatmul.mubr.bf16.gmra.mrb[0].mxu0 %v1041
        %v1123 = vpop.f32.mrb[0].mxu0
        %v1124 = vadd.f32 0.0, %v1123
        %v1125 = vpop.f32.mrb[0].mxu0
        %v1126 = vpop.f32.mrb[0].mxu0
        %v1127 = vadd.f32 0.0, %v1126
        %v1128 = vpop.f32.mrb[0].mxu0
        %1129 = vmatprep.mubr.bf16.mxu0 0
        %1130 = vmatmul.mubr.bf16.gmra.mrb[0].mxu0 %v1044
        %v1131 = vpop.f32.mrb[0].mxu0
        %v1132 = vadd.f32 0.0, %v1131
        %v1133 = vpop.f32.mrb[0].mxu0
        %v1134 = vpop.f32.mrb[0].mxu0
        %v1135 = vadd.f32 0.0, %v1134
        %v1136 = vpop.f32.mrb[0].mxu0
        %1137 = vmatprep.mubr.bf16.mxu0 0
        %1138 = vmatmul.mubr.bf16.gmra.mrb[0].mxu0 %v1047
        %v1139 = vpop.f32.mrb[0].mxu0
        %v1140 = vadd.f32 0.0, %v1139
        %v1141 = vpop.f32.mrb[0].mxu0
        %v1142 = vpop.f32.mrb[0].mxu0
        %v1143 = vadd.f32 0.0, %v1142
        %v1144 = vpop.f32.mrb[0].mxu0
        %1145 = vdwg.mxu0
        %v1146 = vadd.f32 %v839, %v1084
        %v1147 = vadd.f32 %v842, %v1087
        %v1148 = vadd.f32 %v847, %v1092
        %v1149 = vadd.f32 %v850, %v1095
        %v1150 = vadd.f32 %v855, %v1100
        %v1151 = vadd.f32 %v858, %v1103
        %v1152 = vadd.f32 %v863, %v1108
        %v1153 = vadd.f32 %v866, %v1111
        %v1154 = vadd.f32 %v871, %v1116
        %v1155 = vadd.f32 %v874, %v1119
        %v1156 = vadd.f32 %v879, %v1124
        %v1157 = vadd.f32 %v882, %v1127
        %v1158 = vadd.f32 %v887, %v1132
        %v1159 = vadd.f32 %v890, %v1135
        %v1160 = vadd.f32 %v895, %v1140
        %v1161 = vadd.f32 %v898, %v1143
        %s1162 = scalar_lea.vmem %s1, 96
        %v1163 = vld [vmem:[%s1162] sm:$0xf]
        %v1164 = vld [vmem:[%s1162 + $0x4] sm:$0xf]
        %v1165 = vld [vmem:[%s1162 + $0x8] sm:$0xf]
        %v1166 = vld [vmem:[%s1162 + $0xc] sm:$0xf]
        %v1167 = vld [vmem:[%s1162 + $0x10] sm:$0xf]
        %v1168 = vld [vmem:[%s1162 + $0x14] sm:$0xf]
        %v1169 = vld [vmem:[%s1162 + $0x18] sm:$0xf]
        %v1170 = vld [vmem:[%s1162 + $0x1c] sm:$0xf]
        %v1173 = vunpack.c.l.b16 %v328
        %v1174 = vunpack.c.l.b16 %v329
        %v1175 = vpack.c.b16 %v1174, %v1173
        %v1184 = vunpack.c.l.b16 %v1163
        %v1185 = vunpack.c.l.b16 %v1164
        %v1186 = vunpack.c.l.b16 %v1165
        %v1187 = vunpack.c.l.b16 %v1166
        %v1188 = vunpack.c.l.b16 %v1167
        %v1189 = vunpack.c.l.b16 %v1168
        %v1190 = vunpack.c.l.b16 %v1169
        %v1191 = vunpack.c.l.b16 %v1170
        %v1192 = vpack.c.b16 %v1185, %v1184
        %v1193 = vpack.c.b16 %v1187, %v1186
        %v1194 = vpack.c.b16 %v1189, %v1188
        %v1195 = vpack.c.b16 %v1191, %v1190
        %v1201 = vsel %vm594, %v1175, 0
        %1203 = vmatprep.subr.bf16.mxu0 0
        %1204 = vmatpush1.bf16.msra.mxu0 %v1192
        %1205 = vmatprep.subr.bf16.mxu0 0
        %1206 = vmatpush1.bf16.msra.mxu0 %v1193
        %1207 = vmatprep.subr.bf16.mxu0 0
        %1208 = vmatpush1.bf16.msra.mxu0 %v1194
        %1209 = vmatprep.subr.bf16.mxu0 0
        %1210 = vmatpush1.bf16.msra.mxu0 %v1195
        %1211 = vmatprep.subr.bf16.mxu0 0
        %1212 = vmatpush1.bf16.msra.mxu0 0
        %1213 = vmatprep.subr.bf16.mxu0 0
        %1214 = vmatpush1.bf16.msra.mxu0 0
        %1215 = vmatprep.subr.bf16.mxu0 0
        %1216 = vmatpush1.bf16.msra.mxu0 0
        %1217 = vmatprep.subr.bf16.mxu0 0
        %1218 = vmatpush1.bf16.msra.mxu0 0
        %1219 = vmatprep.subr.bf16.mxu0 0
        %1220 = vmatpush1.bf16.msra.mxu0 0
        %1221 = vmatprep.subr.bf16.mxu0 0
        %1222 = vmatpush1.bf16.msra.mxu0 0
        %1223 = vmatprep.subr.bf16.mxu0 0
        %1224 = vmatpush1.bf16.msra.mxu0 0
        %1225 = vmatprep.subr.bf16.mxu0 0
        %1226 = vmatpush1.bf16.msra.mxu0 0
        %1227 = vmatprep.subr.bf16.mxu0 0
        %1228 = vmatpush1.bf16.msra.mxu0 0
        %1229 = vmatprep.subr.bf16.mxu0 0
        %1230 = vmatpush1.bf16.msra.mxu0 0
        %1231 = vmatprep.subr.bf16.mxu0 0
        %1232 = vmatpush1.bf16.msra.mxu0 0
        %1233 = vmatprep.subr.bf16.mxu0 0
        %1234 = vmatpush1.bf16.msra.mxu0 0
        %1235 = vmatprep.mubr.bf16.mxu0 0
        %1236 = vmatmul.mubr.bf16.gmra.mrb[0].mxu0 %v784
        %v1237 = vpop.f32.mrb[0].mxu0
        %v1238 = vadd.f32 0.0, %v1237
        %v1239 = vpop.f32.mrb[0].mxu0
        %v1240 = vpop.f32.mrb[0].mxu0
        %v1241 = vadd.f32 0.0, %v1240
        %v1242 = vpop.f32.mrb[0].mxu0
        %1243 = vmatprep.mubr.bf16.mxu0 0
        %1244 = vmatmul.mubr.bf16.gmra.mrb[0].mxu0 %v787
        %v1245 = vpop.f32.mrb[0].mxu0
        %v1246 = vadd.f32 0.0, %v1245
        %v1247 = vpop.f32.mrb[0].mxu0
        %v1248 = vpop.f32.mrb[0].mxu0
        %v1249 = vadd.f32 0.0, %v1248
        %v1250 = vpop.f32.mrb[0].mxu0
        %1251 = vmatprep.mubr.bf16.mxu0 0
        %1252 = vmatmul.mubr.bf16.gmra.mrb[0].mxu0 %v790
        %v1253 = vpop.f32.mrb[0].mxu0
        %v1254 = vadd.f32 0.0, %v1253
        %v1255 = vpop.f32.mrb[0].mxu0
        %v1256 = vpop.f32.mrb[0].mxu0
        %v1257 = vadd.f32 0.0, %v1256
        %v1258 = vpop.f32.mrb[0].mxu0
        %1259 = vmatprep.mubr.bf16.mxu0 0
        %1260 = vmatmul.mubr.bf16.gmra.mrb[0].mxu0 %v793
        %v1261 = vpop.f32.mrb[0].mxu0
        %v1262 = vadd.f32 0.0, %v1261
        %v1263 = vpop.f32.mrb[0].mxu0
        %v1264 = vpop.f32.mrb[0].mxu0
        %v1265 = vadd.f32 0.0, %v1264
        %v1266 = vpop.f32.mrb[0].mxu0
        %1267 = vmatprep.mubr.bf16.mxu0 0
        %1268 = vmatmul.mubr.bf16.gmra.mrb[0].mxu0 %v796
        %v1269 = vpop.f32.mrb[0].mxu0
        %v1270 = vadd.f32 0.0, %v1269
        %v1271 = vpop.f32.mrb[0].mxu0
        %v1272 = vpop.f32.mrb[0].mxu0
        %v1273 = vadd.f32 0.0, %v1272
        %v1274 = vpop.f32.mrb[0].mxu0
        %1275 = vmatprep.mubr.bf16.mxu0 0
        %1276 = vmatmul.mubr.bf16.gmra.mrb[0].mxu0 %v799
        %v1277 = vpop.f32.mrb[0].mxu0
        %v1278 = vadd.f32 0.0, %v1277
        %v1279 = vpop.f32.mrb[0].mxu0
        %v1280 = vpop.f32.mrb[0].mxu0
        %v1281 = vadd.f32 0.0, %v1280
        %v1282 = vpop.f32.mrb[0].mxu0
        %1283 = vmatprep.mubr.bf16.mxu0 0
        %1284 = vmatmul.mubr.bf16.gmra.mrb[0].mxu0 %v802
        %v1285 = vpop.f32.mrb[0].mxu0
        %v1286 = vadd.f32 0.0, %v1285
        %v1287 = vpop.f32.mrb[0].mxu0
        %v1288 = vpop.f32.mrb[0].mxu0
        %v1289 = vadd.f32 0.0, %v1288
        %v1290 = vpop.f32.mrb[0].mxu0
        %1291 = vmatprep.mubr.bf16.mxu0 0
        %1292 = vmatmul.mubr.bf16.gmra.mrb[0].mxu0 %v1201
        %v1293 = vpop.f32.mrb[0].mxu0
        %v1294 = vadd.f32 0.0, %v1293
        %v1295 = vpop.f32.mrb[0].mxu0
        %v1296 = vpop.f32.mrb[0].mxu0
        %v1297 = vadd.f32 0.0, %v1296
        %v1298 = vpop.f32.mrb[0].mxu0
        %1299 = vdwg.mxu0
        %v1300 = vadd.f32 %v1146, %v1238
        %v1301 = vadd.f32 %v1147, %v1241
        %v1302 = vadd.f32 %v1148, %v1246
        %v1303 = vadd.f32 %v1149, %v1249
        %v1304 = vadd.f32 %v1150, %v1254
        %v1305 = vadd.f32 %v1151, %v1257
        %v1306 = vadd.f32 %v1152, %v1262
        %v1307 = vadd.f32 %v1153, %v1265
        %v1308 = vadd.f32 %v1154, %v1270
        %v1309 = vadd.f32 %v1155, %v1273
        %v1310 = vadd.f32 %v1156, %v1278
        %v1311 = vadd.f32 %v1157, %v1281
        %v1312 = vadd.f32 %v1158, %v1286
        %v1313 = vadd.f32 %v1159, %v1289
        %v1314 = vadd.f32 %v1160, %v1294
        %v1315 = vadd.f32 %v1161, %v1297
        %v1317 = vshrl.u32 %v328, 16
        %v1319 = vrot.slane %v1317, 4
        %v1320 = vshll.u32 %v328, 16
        %v1322 = vrot.slane %v1320, 5
        %v1323 = vor.u32 %v1319, %v1322
        %v1324 = vrot.slane %v1323, 4
        %v1326 = vshll.u32 %v329, 16
        %v1328 = vrot.slane %v1326, 5
        %v1329 = vsel %vm344, %v1324, %v1328
        %v1330 = vshrl.u32 %v329, 16
        %v1332 = vrot.slane %v1330, 4
        %v1333 = vor.u32 %v1332, %v1328
        %v1334 = vrot.slane %v1333, 4
        %v1336 = vshll.u32 %v330, 16
        %v1338 = vrot.slane %v1336, 5
        %v1339 = vsel %vm344, %v1334, %v1338
        %s1340 = scalar_lea.vmem %s1, 128
        %v1341 = vld [vmem:[%s1340] sm:$0xf]
        %v1342 = vld [vmem:[%s1340 + $0x4] sm:$0xf]
        %v1343 = vld [vmem:[%s1340 + $0x8] sm:$0xf]
        %v1344 = vld [vmem:[%s1340 + $0xc] sm:$0xf]
        %v1345 = vld [vmem:[%s1340 + $0x10] sm:$0xf]
        %v1346 = vld [vmem:[%s1340 + $0x14] sm:$0xf]
        %v1347 = vld [vmem:[%s1340 + $0x18] sm:$0xf]
        %v1348 = vld [vmem:[%s1340 + $0x1c] sm:$0xf]
        %v1349 = vunpack.c.l.b16 %v1329
        %v1350 = vunpack.c.l.b16 %v1339
        %v1351 = vpack.c.b16 %v1350, %v1349
        %v1360 = vunpack.c.l.b16 %v1341
        %v1361 = vunpack.c.l.b16 %v1342
        %v1362 = vunpack.c.l.b16 %v1343
        %v1363 = vunpack.c.l.b16 %v1344
        %v1364 = vunpack.c.l.b16 %v1345
        %v1365 = vunpack.c.l.b16 %v1346
        %v1366 = vunpack.c.l.b16 %v1347
        %v1367 = vunpack.c.l.b16 %v1348
        %v1368 = vpack.c.b16 %v1361, %v1360
        %v1369 = vpack.c.b16 %v1363, %v1362
        %v1370 = vpack.c.b16 %v1365, %v1364
        %v1371 = vpack.c.b16 %v1367, %v1366
        %v1377 = vsel %vm594, %v1351, 0
        %1379 = vmatprep.subr.bf16.mxu0 0
        %1380 = vmatpush1.bf16.msra.mxu0 %v1368
        %1381 = vmatprep.subr.bf16.mxu0 0
        %1382 = vmatpush1.bf16.msra.mxu0 %v1369
        %1383 = vmatprep.subr.bf16.mxu0 0
        %1384 = vmatpush1.bf16.msra.mxu0 %v1370
        %1385 = vmatprep.subr.bf16.mxu0 0
        %1386 = vmatpush1.bf16.msra.mxu0 %v1371
        %1387 = vmatprep.subr.bf16.mxu0 0
        %1388 = vmatpush1.bf16.msra.mxu0 0
        %1389 = vmatprep.subr.bf16.mxu0 0
        %1390 = vmatpush1.bf16.msra.mxu0 0
        %1391 = vmatprep.subr.bf16.mxu0 0
        %1392 = vmatpush1.bf16.msra.mxu0 0
        %1393 = vmatprep.subr.bf16.mxu0 0
        %1394 = vmatpush1.bf16.msra.mxu0 0
        %1395 = vmatprep.subr.bf16.mxu0 0
        %1396 = vmatpush1.bf16.msra.mxu0 0
        %1397 = vmatprep.subr.bf16.mxu0 0
        %1398 = vmatpush1.bf16.msra.mxu0 0
        %1399 = vmatprep.subr.bf16.mxu0 0
        %1400 = vmatpush1.bf16.msra.mxu0 0
        %1401 = vmatprep.subr.bf16.mxu0 0
        %1402 = vmatpush1.bf16.msra.mxu0 0
        %1403 = vmatprep.subr.bf16.mxu0 0
        %1404 = vmatpush1.bf16.msra.mxu0 0
        %1405 = vmatprep.subr.bf16.mxu0 0
        %1406 = vmatpush1.bf16.msra.mxu0 0
        %1407 = vmatprep.subr.bf16.mxu0 0
        %1408 = vmatpush1.bf16.msra.mxu0 0
        %1409 = vmatprep.subr.bf16.mxu0 0
        %1410 = vmatpush1.bf16.msra.mxu0 0
        %1411 = vmatprep.mubr.bf16.mxu0 0
        %1412 = vmatmul.mubr.bf16.gmra.mrb[0].mxu0 %v599
        %v1413 = vpop.f32.mrb[0].mxu0
        %v1414 = vadd.f32 0.0, %v1413
        %v1415 = vpop.f32.mrb[0].mxu0
        %v1416 = vpop.f32.mrb[0].mxu0
        %v1417 = vadd.f32 0.0, %v1416
        %v1418 = vpop.f32.mrb[0].mxu0
        %1419 = vmatprep.mubr.bf16.mxu0 0
        %1420 = vmatmul.mubr.bf16.gmra.mrb[0].mxu0 %v602
        %v1421 = vpop.f32.mrb[0].mxu0
        %v1422 = vadd.f32 0.0, %v1421
        %v1423 = vpop.f32.mrb[0].mxu0
        %v1424 = vpop.f32.mrb[0].mxu0
        %v1425 = vadd.f32 0.0, %v1424
        %v1426 = vpop.f32.mrb[0].mxu0
        %1427 = vmatprep.mubr.bf16.mxu0 0
        %1428 = vmatmul.mubr.bf16.gmra.mrb[0].mxu0 %v605
        %v1429 = vpop.f32.mrb[0].mxu0
        %v1430 = vadd.f32 0.0, %v1429
        %v1431 = vpop.f32.mrb[0].mxu0
        %v1432 = vpop.f32.mrb[0].mxu0
        %v1433 = vadd.f32 0.0, %v1432
        %v1434 = vpop.f32.mrb[0].mxu0
        %1435 = vmatprep.mubr.bf16.mxu0 0
        %1436 = vmatmul.mubr.bf16.gmra.mrb[0].mxu0 %v608
        %v1437 = vpop.f32.mrb[0].mxu0
        %v1438 = vadd.f32 0.0, %v1437
        %v1439 = vpop.f32.mrb[0].mxu0
        %v1440 = vpop.f32.mrb[0].mxu0
        %v1441 = vadd.f32 0.0, %v1440
        %v1442 = vpop.f32.mrb[0].mxu0
        %1443 = vmatprep.mubr.bf16.mxu0 0
        %1444 = vmatmul.mubr.bf16.gmra.mrb[0].mxu0 %v611
        %v1445 = vpop.f32.mrb[0].mxu0
        %v1446 = vadd.f32 0.0, %v1445
        %v1447 = vpop.f32.mrb[0].mxu0
        %v1448 = vpop.f32.mrb[0].mxu0
        %v1449 = vadd.f32 0.0, %v1448
        %v1450 = vpop.f32.mrb[0].mxu0
        %1451 = vmatprep.mubr.bf16.mxu0 0
        %1452 = vmatmul.mubr.bf16.gmra.mrb[0].mxu0 %v614
        %v1453 = vpop.f32.mrb[0].mxu0
        %v1454 = vadd.f32 0.0, %v1453
        %v1455 = vpop.f32.mrb[0].mxu0
        %v1456 = vpop.f32.mrb[0].mxu0
        %v1457 = vadd.f32 0.0, %v1456
        %v1458 = vpop.f32.mrb[0].mxu0
        %1459 = vmatprep.mubr.bf16.mxu0 0
        %1460 = vmatmul.mubr.bf16.gmra.mrb[0].mxu0 %v617
        %v1461 = vpop.f32.mrb[0].mxu0
        %v1462 = vadd.f32 0.0, %v1461
        %v1463 = vpop.f32.mrb[0].mxu0
        %v1464 = vpop.f32.mrb[0].mxu0
        %v1465 = vadd.f32 0.0, %v1464
        %v1466 = vpop.f32.mrb[0].mxu0
        %1467 = vmatprep.mubr.bf16.mxu0 0
        %1468 = vmatmul.mubr.bf16.gmra.mrb[0].mxu0 %v1377
        %v1469 = vpop.f32.mrb[0].mxu0
        %v1470 = vadd.f32 0.0, %v1469
        %v1471 = vpop.f32.mrb[0].mxu0
        %v1472 = vpop.f32.mrb[0].mxu0
        %v1473 = vadd.f32 0.0, %v1472
        %v1474 = vpop.f32.mrb[0].mxu0
        %1475 = vdwg.mxu0
        %v1476 = vadd.f32 %v1300, %v1414
        %v1477 = vadd.f32 %v1301, %v1417
        %v1478 = vadd.f32 %v1302, %v1422
        %v1479 = vadd.f32 %v1303, %v1425
        %v1480 = vadd.f32 %v1304, %v1430
        %v1481 = vadd.f32 %v1305, %v1433
        %v1482 = vadd.f32 %v1306, %v1438
        %v1483 = vadd.f32 %v1307, %v1441
        %v1484 = vadd.f32 %v1308, %v1446
        %v1485 = vadd.f32 %v1309, %v1449
        %v1486 = vadd.f32 %v1310, %v1454
        %v1487 = vadd.f32 %v1311, %v1457
        %v1488 = vadd.f32 %v1312, %v1462
        %v1489 = vadd.f32 %v1313, %v1465
        %v1490 = vadd.f32 %v1314, %v1470
        %v1491 = vadd.f32 %v1315, %v1473
        %v1493 = vrot.slane %v328, 5
        %v1494 = vrot.slane %v1493, 4
        %v1495 = vrot.slane %v329, 5
        %v1496 = vsel %vm911, %v1494, %v1495
        %v1497 = vrot.slane %v1495, 4
        %v1498 = vrot.slane %v330, 5
        %v1499 = vsel %vm911, %v1497, %v1498
        %s1500 = scalar_lea.vmem %s1, 160
        %v1501 = vld [vmem:[%s1500] sm:$0xf]
        %v1502 = vld [vmem:[%s1500 + $0x4] sm:$0xf]
        %v1503 = vld [vmem:[%s1500 + $0x8] sm:$0xf]
        %v1504 = vld [vmem:[%s1500 + $0xc] sm:$0xf]
        %v1505 = vld [vmem:[%s1500 + $0x10] sm:$0xf]
        %v1506 = vld [vmem:[%s1500 + $0x14] sm:$0xf]
        %v1507 = vld [vmem:[%s1500 + $0x18] sm:$0xf]
        %v1508 = vld [vmem:[%s1500 + $0x1c] sm:$0xf]
        %v1509 = vunpack.c.l.b16 %v1496
        %v1510 = vunpack.c.l.b16 %v1499
        %v1511 = vpack.c.b16 %v1510, %v1509
        %v1520 = vunpack.c.l.b16 %v1501
        %v1521 = vunpack.c.l.b16 %v1502
        %v1522 = vunpack.c.l.b16 %v1503
        %v1523 = vunpack.c.l.b16 %v1504
        %v1524 = vunpack.c.l.b16 %v1505
        %v1525 = vunpack.c.l.b16 %v1506
        %v1526 = vunpack.c.l.b16 %v1507
        %v1527 = vunpack.c.l.b16 %v1508
        %v1528 = vpack.c.b16 %v1521, %v1520
        %v1529 = vpack.c.b16 %v1523, %v1522
        %v1530 = vpack.c.b16 %v1525, %v1524
        %v1531 = vpack.c.b16 %v1527, %v1526
        %v1537 = vsel %vm594, %v1511, 0
        %1539 = vmatprep.subr.bf16.mxu0 0
        %1540 = vmatpush1.bf16.msra.mxu0 %v1528
        %1541 = vmatprep.subr.bf16.mxu0 0
        %1542 = vmatpush1.bf16.msra.mxu0 %v1529
        %1543 = vmatprep.subr.bf16.mxu0 0
        %1544 = vmatpush1.bf16.msra.mxu0 %v1530
        %1545 = vmatprep.subr.bf16.mxu0 0
        %1546 = vmatpush1.bf16.msra.mxu0 %v1531
        %1547 = vmatprep.subr.bf16.mxu0 0
        %1548 = vmatpush1.bf16.msra.mxu0 0
        %1549 = vmatprep.subr.bf16.mxu0 0
        %1550 = vmatpush1.bf16.msra.mxu0 0
        %1551 = vmatprep.subr.bf16.mxu0 0
        %1552 = vmatpush1.bf16.msra.mxu0 0
        %1553 = vmatprep.subr.bf16.mxu0 0
        %1554 = vmatpush1.bf16.msra.mxu0 0
        %1555 = vmatprep.subr.bf16.mxu0 0
        %1556 = vmatpush1.bf16.msra.mxu0 0
        %1557 = vmatprep.subr.bf16.mxu0 0
        %1558 = vmatpush1.bf16.msra.mxu0 0
        %1559 = vmatprep.subr.bf16.mxu0 0
        %1560 = vmatpush1.bf16.msra.mxu0 0
        %1561 = vmatprep.subr.bf16.mxu0 0
        %1562 = vmatpush1.bf16.msra.mxu0 0
        %1563 = vmatprep.subr.bf16.mxu0 0
        %1564 = vmatpush1.bf16.msra.mxu0 0
        %1565 = vmatprep.subr.bf16.mxu0 0
        %1566 = vmatpush1.bf16.msra.mxu0 0
        %1567 = vmatprep.subr.bf16.mxu0 0
        %1568 = vmatpush1.bf16.msra.mxu0 0
        %1569 = vmatprep.subr.bf16.mxu0 0
        %1570 = vmatpush1.bf16.msra.mxu0 0
        %1571 = vmatprep.mubr.bf16.mxu0 0
        %1572 = vmatmul.mubr.bf16.gmra.mrb[0].mxu0 %v1029
        %v1573 = vpop.f32.mrb[0].mxu0
        %v1574 = vadd.f32 0.0, %v1573
        %v1575 = vpop.f32.mrb[0].mxu0
        %v1576 = vpop.f32.mrb[0].mxu0
        %v1577 = vadd.f32 0.0, %v1576
        %v1578 = vpop.f32.mrb[0].mxu0
        %1579 = vmatprep.mubr.bf16.mxu0 0
        %1580 = vmatmul.mubr.bf16.gmra.mrb[0].mxu0 %v1032
        %v1581 = vpop.f32.mrb[0].mxu0
        %v1582 = vadd.f32 0.0, %v1581
        %v1583 = vpop.f32.mrb[0].mxu0
        %v1584 = vpop.f32.mrb[0].mxu0
        %v1585 = vadd.f32 0.0, %v1584
        %v1586 = vpop.f32.mrb[0].mxu0
        %1587 = vmatprep.mubr.bf16.mxu0 0
        %1588 = vmatmul.mubr.bf16.gmra.mrb[0].mxu0 %v1035
        %v1589 = vpop.f32.mrb[0].mxu0
        %v1590 = vadd.f32 0.0, %v1589
        %v1591 = vpop.f32.mrb[0].mxu0
        %v1592 = vpop.f32.mrb[0].mxu0
        %v1593 = vadd.f32 0.0, %v1592
        %v1594 = vpop.f32.mrb[0].mxu0
        %1595 = vmatprep.mubr.bf16.mxu0 0
        %1596 = vmatmul.mubr.bf16.gmra.mrb[0].mxu0 %v1038
        %v1597 = vpop.f32.mrb[0].mxu0
        %v1598 = vadd.f32 0.0, %v1597
        %v1599 = vpop.f32.mrb[0].mxu0
        %v1600 = vpop.f32.mrb[0].mxu0
        %v1601 = vadd.f32 0.0, %v1600
        %v1602 = vpop.f32.mrb[0].mxu0
        %1603 = vmatprep.mubr.bf16.mxu0 0
        %1604 = vmatmul.mubr.bf16.gmra.mrb[0].mxu0 %v1041
        %v1605 = vpop.f32.mrb[0].mxu0
        %v1606 = vadd.f32 0.0, %v1605
        %v1607 = vpop.f32.mrb[0].mxu0
        %v1608 = vpop.f32.mrb[0].mxu0
        %v1609 = vadd.f32 0.0, %v1608
        %v1610 = vpop.f32.mrb[0].mxu0
        %1611 = vmatprep.mubr.bf16.mxu0 0
        %1612 = vmatmul.mubr.bf16.gmra.mrb[0].mxu0 %v1044
        %v1613 = vpop.f32.mrb[0].mxu0
        %v1614 = vadd.f32 0.0, %v1613
        %v1615 = vpop.f32.mrb[0].mxu0
        %v1616 = vpop.f32.mrb[0].mxu0
        %v1617 = vadd.f32 0.0, %v1616
        %v1618 = vpop.f32.mrb[0].mxu0
        %1619 = vmatprep.mubr.bf16.mxu0 0
        %1620 = vmatmul.mubr.bf16.gmra.mrb[0].mxu0 %v1047
        %v1621 = vpop.f32.mrb[0].mxu0
        %v1622 = vadd.f32 0.0, %v1621
        %v1623 = vpop.f32.mrb[0].mxu0
        %v1624 = vpop.f32.mrb[0].mxu0
        %v1625 = vadd.f32 0.0, %v1624
        %v1626 = vpop.f32.mrb[0].mxu0
        %1627 = vmatprep.mubr.bf16.mxu0 0
        %1628 = vmatmul.mubr.bf16.gmra.mrb[0].mxu0 %v1537
        %v1629 = vpop.f32.mrb[0].mxu0
        %v1630 = vadd.f32 0.0, %v1629
        %v1631 = vpop.f32.mrb[0].mxu0
        %v1632 = vpop.f32.mrb[0].mxu0
        %v1633 = vadd.f32 0.0, %v1632
        %v1634 = vpop.f32.mrb[0].mxu0
        %1635 = vdwg.mxu0
        %v1636 = vadd.f32 %v1476, %v1574
        %v1637 = vadd.f32 %v1477, %v1577
        %v1638 = vadd.f32 %v1478, %v1582
        %v1639 = vadd.f32 %v1479, %v1585
        %v1640 = vadd.f32 %v1480, %v1590
        %v1641 = vadd.f32 %v1481, %v1593
        %v1642 = vadd.f32 %v1482, %v1598
        %v1643 = vadd.f32 %v1483, %v1601
        %v1644 = vadd.f32 %v1484, %v1606
        %v1645 = vadd.f32 %v1485, %v1609
        %v1646 = vadd.f32 %v1486, %v1614
        %v1647 = vadd.f32 %v1487, %v1617
        %v1648 = vadd.f32 %v1488, %v1622
        %v1649 = vadd.f32 %v1489, %v1625
        %v1650 = vadd.f32 %v1490, %v1630
        %v1651 = vadd.f32 %v1491, %v1633
        %s1652 = scalar_lea.vmem %s1, 192
        %v1653 = vld [vmem:[%s1652] sm:$0xf]
        %v1654 = vld [vmem:[%s1652 + $0x4] sm:$0xf]
        %v1655 = vld [vmem:[%s1652 + $0x8] sm:$0xf]
        %v1656 = vld [vmem:[%s1652 + $0xc] sm:$0xf]
        %v1657 = vld [vmem:[%s1652 + $0x10] sm:$0xf]
        %v1658 = vld [vmem:[%s1652 + $0x14] sm:$0xf]
        %v1659 = vld [vmem:[%s1652 + $0x18] sm:$0xf]
        %v1660 = vld [vmem:[%s1652 + $0x1c] sm:$0xf]
        %v1663 = vunpack.c.l.b16 %v331
        %v1664 = vunpack.c.l.b16 %v332
        %v1665 = vpack.c.b16 %v1664, %v1663
        %v1674 = vunpack.c.l.b16 %v1653
        %v1675 = vunpack.c.l.b16 %v1654
        %v1676 = vunpack.c.l.b16 %v1655
        %v1677 = vunpack.c.l.b16 %v1656
        %v1678 = vunpack.c.l.b16 %v1657
        %v1679 = vunpack.c.l.b16 %v1658
        %v1680 = vunpack.c.l.b16 %v1659
        %v1681 = vunpack.c.l.b16 %v1660
        %v1682 = vpack.c.b16 %v1675, %v1674
        %v1683 = vpack.c.b16 %v1677, %v1676
        %v1684 = vpack.c.b16 %v1679, %v1678
        %v1685 = vpack.c.b16 %v1681, %v1680
        %v1691 = vsel %vm594, %v1665, 0
        %1693 = vmatprep.subr.bf16.mxu0 0
        %1694 = vmatpush1.bf16.msra.mxu0 %v1682
        %1695 = vmatprep.subr.bf16.mxu0 0
        %1696 = vmatpush1.bf16.msra.mxu0 %v1683
        %1697 = vmatprep.subr.bf16.mxu0 0
        %1698 = vmatpush1.bf16.msra.mxu0 %v1684
        %1699 = vmatprep.subr.bf16.mxu0 0
        %1700 = vmatpush1.bf16.msra.mxu0 %v1685
        %1701 = vmatprep.subr.bf16.mxu0 0
        %1702 = vmatpush1.bf16.msra.mxu0 0
        %1703 = vmatprep.subr.bf16.mxu0 0
        %1704 = vmatpush1.bf16.msra.mxu0 0
        %1705 = vmatprep.subr.bf16.mxu0 0
        %1706 = vmatpush1.bf16.msra.mxu0 0
        %1707 = vmatprep.subr.bf16.mxu0 0
        %1708 = vmatpush1.bf16.msra.mxu0 0
        %1709 = vmatprep.subr.bf16.mxu0 0
        %1710 = vmatpush1.bf16.msra.mxu0 0
        %1711 = vmatprep.subr.bf16.mxu0 0
        %1712 = vmatpush1.bf16.msra.mxu0 0
        %1713 = vmatprep.subr.bf16.mxu0 0
        %1714 = vmatpush1.bf16.msra.mxu0 0
        %1715 = vmatprep.subr.bf16.mxu0 0
        %1716 = vmatpush1.bf16.msra.mxu0 0
        %1717 = vmatprep.subr.bf16.mxu0 0
        %1718 = vmatpush1.bf16.msra.mxu0 0
        %1719 = vmatprep.subr.bf16.mxu0 0
        %1720 = vmatpush1.bf16.msra.mxu0 0
        %1721 = vmatprep.subr.bf16.mxu0 0
        %1722 = vmatpush1.bf16.msra.mxu0 0
        %1723 = vmatprep.subr.bf16.mxu0 0
        %1724 = vmatpush1.bf16.msra.mxu0 0
        %1725 = vmatprep.mubr.bf16.mxu0 0
        %1726 = vmatmul.mubr.bf16.gmra.mrb[0].mxu0 %v787
        %v1727 = vpop.f32.mrb[0].mxu0
        %v1728 = vadd.f32 0.0, %v1727
        %v1729 = vpop.f32.mrb[0].mxu0
        %v1730 = vpop.f32.mrb[0].mxu0
        %v1731 = vadd.f32 0.0, %v1730
        %v1732 = vpop.f32.mrb[0].mxu0
        %1733 = vmatprep.mubr.bf16.mxu0 0
        %1734 = vmatmul.mubr.bf16.gmra.mrb[0].mxu0 %v790
        %v1735 = vpop.f32.mrb[0].mxu0
        %v1736 = vadd.f32 0.0, %v1735
        %v1737 = vpop.f32.mrb[0].mxu0
        %v1738 = vpop.f32.mrb[0].mxu0
        %v1739 = vadd.f32 0.0, %v1738
        %v1740 = vpop.f32.mrb[0].mxu0
        %1741 = vmatprep.mubr.bf16.mxu0 0
        %1742 = vmatmul.mubr.bf16.gmra.mrb[0].mxu0 %v793
        %v1743 = vpop.f32.mrb[0].mxu0
        %v1744 = vadd.f32 0.0, %v1743
        %v1745 = vpop.f32.mrb[0].mxu0
        %v1746 = vpop.f32.mrb[0].mxu0
        %v1747 = vadd.f32 0.0, %v1746
        %v1748 = vpop.f32.mrb[0].mxu0
        %1749 = vmatprep.mubr.bf16.mxu0 0
        %1750 = vmatmul.mubr.bf16.gmra.mrb[0].mxu0 %v796
        %v1751 = vpop.f32.mrb[0].mxu0
        %v1752 = vadd.f32 0.0, %v1751
        %v1753 = vpop.f32.mrb[0].mxu0
        %v1754 = vpop.f32.mrb[0].mxu0
        %v1755 = vadd.f32 0.0, %v1754
        %v1756 = vpop.f32.mrb[0].mxu0
        %1757 = vmatprep.mubr.bf16.mxu0 0
        %1758 = vmatmul.mubr.bf16.gmra.mrb[0].mxu0 %v799
        %v1759 = vpop.f32.mrb[0].mxu0
        %v1760 = vadd.f32 0.0, %v1759
        %v1761 = vpop.f32.mrb[0].mxu0
        %v1762 = vpop.f32.mrb[0].mxu0
        %v1763 = vadd.f32 0.0, %v1762
        %v1764 = vpop.f32.mrb[0].mxu0
        %1765 = vmatprep.mubr.bf16.mxu0 0
        %1766 = vmatmul.mubr.bf16.gmra.mrb[0].mxu0 %v802
        %v1767 = vpop.f32.mrb[0].mxu0
        %v1768 = vadd.f32 0.0, %v1767
        %v1769 = vpop.f32.mrb[0].mxu0
        %v1770 = vpop.f32.mrb[0].mxu0
        %v1771 = vadd.f32 0.0, %v1770
        %v1772 = vpop.f32.mrb[0].mxu0
        %1773 = vmatprep.mubr.bf16.mxu0 0
        %1774 = vmatmul.mubr.bf16.gmra.mrb[0].mxu0 %v1201
        %v1775 = vpop.f32.mrb[0].mxu0
        %v1776 = vadd.f32 0.0, %v1775
        %v1777 = vpop.f32.mrb[0].mxu0
        %v1778 = vpop.f32.mrb[0].mxu0
        %v1779 = vadd.f32 0.0, %v1778
        %v1780 = vpop.f32.mrb[0].mxu0
        %1781 = vmatprep.mubr.bf16.mxu0 0
        %1782 = vmatmul.mubr.bf16.gmra.mrb[0].mxu0 %v1691
        %v1783 = vpop.f32.mrb[0].mxu0
        %v1784 = vadd.f32 0.0, %v1783
        %v1785 = vpop.f32.mrb[0].mxu0
        %v1786 = vpop.f32.mrb[0].mxu0
        %v1787 = vadd.f32 0.0, %v1786
        %v1788 = vpop.f32.mrb[0].mxu0
        %1789 = vdwg.mxu0
        %v1790 = vadd.f32 %v1636, %v1728
        %v1791 = vadd.f32 %v1637, %v1731
        %v1792 = vadd.f32 %v1638, %v1736
        %v1793 = vadd.f32 %v1639, %v1739
        %v1794 = vadd.f32 %v1640, %v1744
        %v1795 = vadd.f32 %v1641, %v1747
        %v1796 = vadd.f32 %v1642, %v1752
        %v1797 = vadd.f32 %v1643, %v1755
        %v1798 = vadd.f32 %v1644, %v1760
        %v1799 = vadd.f32 %v1645, %v1763
        %v1800 = vadd.f32 %v1646, %v1768
        %v1801 = vadd.f32 %v1647, %v1771
        %v1802 = vadd.f32 %v1648, %v1776
        %v1803 = vadd.f32 %v1649, %v1779
        %v1804 = vadd.f32 %v1650, %v1784
        %v1805 = vadd.f32 %v1651, %v1787
        %v1807 = vshrl.u32 %v331, 16
        %v1809 = vrot.slane %v1807, 4
        %v1810 = vshll.u32 %v331, 16
        %v1812 = vrot.slane %v1810, 5
        %v1813 = vor.u32 %v1809, %v1812
        %v1814 = vrot.slane %v1813, 4
        %v1816 = vshll.u32 %v332, 16
        %v1818 = vrot.slane %v1816, 5
        %v1819 = vsel %vm344, %v1814, %v1818
        %v1820 = vshrl.u32 %v332, 16
        %v1822 = vrot.slane %v1820, 4
        %v1823 = vor.u32 %v1822, %v1818
        %v1824 = vrot.slane %v1823, 4
        %v1826 = vshll.u32 %v333, 16
        %v1828 = vrot.slane %v1826, 5
        %v1829 = vsel %vm344, %v1824, %v1828
        %s1830 = scalar_lea.vmem %s1, 224
        %v1831 = vld [vmem:[%s1830] sm:$0xf]
        %v1832 = vld [vmem:[%s1830 + $0x4] sm:$0xf]
        %v1833 = vld [vmem:[%s1830 + $0x8] sm:$0xf]
        %v1834 = vld [vmem:[%s1830 + $0xc] sm:$0xf]
        %v1835 = vld [vmem:[%s1830 + $0x10] sm:$0xf]
        %v1836 = vld [vmem:[%s1830 + $0x14] sm:$0xf]
        %v1837 = vld [vmem:[%s1830 + $0x18] sm:$0xf]
        %v1838 = vld [vmem:[%s1830 + $0x1c] sm:$0xf]
        %v1839 = vunpack.c.l.b16 %v1819
        %v1840 = vunpack.c.l.b16 %v1829
        %v1841 = vpack.c.b16 %v1840, %v1839
        %v1850 = vunpack.c.l.b16 %v1831
        %v1851 = vunpack.c.l.b16 %v1832
        %v1852 = vunpack.c.l.b16 %v1833
        %v1853 = vunpack.c.l.b16 %v1834
        %v1854 = vunpack.c.l.b16 %v1835
        %v1855 = vunpack.c.l.b16 %v1836
        %v1856 = vunpack.c.l.b16 %v1837
        %v1857 = vunpack.c.l.b16 %v1838
        %v1858 = vpack.c.b16 %v1851, %v1850
        %v1859 = vpack.c.b16 %v1853, %v1852
        %v1860 = vpack.c.b16 %v1855, %v1854
        %v1861 = vpack.c.b16 %v1857, %v1856
        %v1867 = vsel %vm594, %v1841, 0
        %1869 = vmatprep.subr.bf16.mxu0 0
        %1870 = vmatpush1.bf16.msra.mxu0 %v1858
        %1871 = vmatprep.subr.bf16.mxu0 0
        %1872 = vmatpush1.bf16.msra.mxu0 %v1859
        %1873 = vmatprep.subr.bf16.mxu0 0
        %1874 = vmatpush1.bf16.msra.mxu0 %v1860
        %1875 = vmatprep.subr.bf16.mxu0 0
        %1876 = vmatpush1.bf16.msra.mxu0 %v1861
        %1877 = vmatprep.subr.bf16.mxu0 0
        %1878 = vmatpush1.bf16.msra.mxu0 0
        %1879 = vmatprep.subr.bf16.mxu0 0
        %1880 = vmatpush1.bf16.msra.mxu0 0
        %1881 = vmatprep.subr.bf16.mxu0 0
        %1882 = vmatpush1.bf16.msra.mxu0 0
        %1883 = vmatprep.subr.bf16.mxu0 0
        %1884 = vmatpush1.bf16.msra.mxu0 0
        %1885 = vmatprep.subr.bf16.mxu0 0
        %1886 = vmatpush1.bf16.msra.mxu0 0
        %1887 = vmatprep.subr.bf16.mxu0 0
        %1888 = vmatpush1.bf16.msra.mxu0 0
        %1889 = vmatprep.subr.bf16.mxu0 0
        %1890 = vmatpush1.bf16.msra.mxu0 0
        %1891 = vmatprep.subr.bf16.mxu0 0
        %1892 = vmatpush1.bf16.msra.mxu0 0
        %1893 = vmatprep.subr.bf16.mxu0 0
        %1894 = vmatpush1.bf16.msra.mxu0 0
        %1895 = vmatprep.subr.bf16.mxu0 0
        %1896 = vmatpush1.bf16.msra.mxu0 0
        %1897 = vmatprep.subr.bf16.mxu0 0
        %1898 = vmatpush1.bf16.msra.mxu0 0
        %1899 = vmatprep.subr.bf16.mxu0 0
        %1900 = vmatpush1.bf16.msra.mxu0 0
        %1901 = vmatprep.mubr.bf16.mxu0 0
        %1902 = vmatmul.mubr.bf16.gmra.mrb[0].mxu0 %v602
        %v1903 = vpop.f32.mrb[0].mxu0
        %v1904 = vadd.f32 0.0, %v1903
        %v1905 = vpop.f32.mrb[0].mxu0
        %v1906 = vpop.f32.mrb[0].mxu0
        %v1907 = vadd.f32 0.0, %v1906
        %v1908 = vpop.f32.mrb[0].mxu0
        %1909 = vmatprep.mubr.bf16.mxu0 0
        %1910 = vmatmul.mubr.bf16.gmra.mrb[0].mxu0 %v605
        %v1911 = vpop.f32.mrb[0].mxu0
        %v1912 = vadd.f32 0.0, %v1911
        %v1913 = vpop.f32.mrb[0].mxu0
        %v1914 = vpop.f32.mrb[0].mxu0
        %v1915 = vadd.f32 0.0, %v1914
        %v1916 = vpop.f32.mrb[0].mxu0
        %1917 = vmatprep.mubr.bf16.mxu0 0
        %1918 = vmatmul.mubr.bf16.gmra.mrb[0].mxu0 %v608
        %v1919 = vpop.f32.mrb[0].mxu0
        %v1920 = vadd.f32 0.0, %v1919
        %v1921 = vpop.f32.mrb[0].mxu0
        %v1922 = vpop.f32.mrb[0].mxu0
        %v1923 = vadd.f32 0.0, %v1922
        %v1924 = vpop.f32.mrb[0].mxu0
        %1925 = vmatprep.mubr.bf16.mxu0 0
        %1926 = vmatmul.mubr.bf16.gmra.mrb[0].mxu0 %v611
        %v1927 = vpop.f32.mrb[0].mxu0
        %v1928 = vadd.f32 0.0, %v1927
        %v1929 = vpop.f32.mrb[0].mxu0
        %v1930 = vpop.f32.mrb[0].mxu0
        %v1931 = vadd.f32 0.0, %v1930
        %v1932 = vpop.f32.mrb[0].mxu0
        %1933 = vmatprep.mubr.bf16.mxu0 0
        %1934 = vmatmul.mubr.bf16.gmra.mrb[0].mxu0 %v614
        %v1935 = vpop.f32.mrb[0].mxu0
        %v1936 = vadd.f32 0.0, %v1935
        %v1937 = vpop.f32.mrb[0].mxu0
        %v1938 = vpop.f32.mrb[0].mxu0
        %v1939 = vadd.f32 0.0, %v1938
        %v1940 = vpop.f32.mrb[0].mxu0
        %1941 = vmatprep.mubr.bf16.mxu0 0
        %1942 = vmatmul.mubr.bf16.gmra.mrb[0].mxu0 %v617
        %v1943 = vpop.f32.mrb[0].mxu0
        %v1944 = vadd.f32 0.0, %v1943
        %v1945 = vpop.f32.mrb[0].mxu0
        %v1946 = vpop.f32.mrb[0].mxu0
        %v1947 = vadd.f32 0.0, %v1946
        %v1948 = vpop.f32.mrb[0].mxu0
        %1949 = vmatprep.mubr.bf16.mxu0 0
        %1950 = vmatmul.mubr.bf16.gmra.mrb[0].mxu0 %v1377
        %v1951 = vpop.f32.mrb[0].mxu0
        %v1952 = vadd.f32 0.0, %v1951
        %v1953 = vpop.f32.mrb[0].mxu0
        %v1954 = vpop.f32.mrb[0].mxu0
        %v1955 = vadd.f32 0.0, %v1954
        %v1956 = vpop.f32.mrb[0].mxu0
        %1957 = vmatprep.mubr.bf16.mxu0 0
        %1958 = vmatmul.mubr.bf16.gmra.mrb[0].mxu0 %v1867
        %v1959 = vpop.f32.mrb[0].mxu0
        %v1960 = vadd.f32 0.0, %v1959
        %v1961 = vpop.f32.mrb[0].mxu0
        %v1962 = vpop.f32.mrb[0].mxu0
        %v1963 = vadd.f32 0.0, %v1962
        %v1964 = vpop.f32.mrb[0].mxu0
        %1965 = vdwg.mxu0
        %v1966 = vadd.f32 %v1790, %v1904
        %v1967 = vadd.f32 %v1791, %v1907
        %v1968 = vadd.f32 %v1792, %v1912
        %v1969 = vadd.f32 %v1793, %v1915
        %v1970 = vadd.f32 %v1794, %v1920
        %v1971 = vadd.f32 %v1795, %v1923
        %v1972 = vadd.f32 %v1796, %v1928
        %v1973 = vadd.f32 %v1797, %v1931
        %v1974 = vadd.f32 %v1798, %v1936
        %v1975 = vadd.f32 %v1799, %v1939
        %v1976 = vadd.f32 %v1800, %v1944
        %v1977 = vadd.f32 %v1801, %v1947
        %v1978 = vadd.f32 %v1802, %v1952
        %v1979 = vadd.f32 %v1803, %v1955
        %v1980 = vadd.f32 %v1804, %v1960
        %v1981 = vadd.f32 %v1805, %v1963
        %v1983 = vrot.slane %v331, 5
        %v1984 = vrot.slane %v1983, 4
        %v1985 = vrot.slane %v332, 5
        %v1986 = vsel %vm911, %v1984, %v1985
        %v1987 = vrot.slane %v1985, 4
        %v1988 = vrot.slane %v333, 5
        %v1989 = vsel %vm911, %v1987, %v1988
        %s1990 = scalar_lea.vmem %s1, 256
        %v1991 = vld [vmem:[%s1990] sm:$0xf]
        %v1992 = vld [vmem:[%s1990 + $0x4] sm:$0xf]
        %v1993 = vld [vmem:[%s1990 + $0x8] sm:$0xf]
        %v1994 = vld [vmem:[%s1990 + $0xc] sm:$0xf]
        %v1995 = vld [vmem:[%s1990 + $0x10] sm:$0xf]
        %v1996 = vld [vmem:[%s1990 + $0x14] sm:$0xf]
        %v1997 = vld [vmem:[%s1990 + $0x18] sm:$0xf]
        %v1998 = vld [vmem:[%s1990 + $0x1c] sm:$0xf]
        %v1999 = vunpack.c.l.b16 %v1986
        %v2000 = vunpack.c.l.b16 %v1989
        %v2001 = vpack.c.b16 %v2000, %v1999
        %v2010 = vunpack.c.l.b16 %v1991
        %v2011 = vunpack.c.l.b16 %v1992
        %v2012 = vunpack.c.l.b16 %v1993
        %v2013 = vunpack.c.l.b16 %v1994
        %v2014 = vunpack.c.l.b16 %v1995
        %v2015 = vunpack.c.l.b16 %v1996
        %v2016 = vunpack.c.l.b16 %v1997
        %v2017 = vunpack.c.l.b16 %v1998
        %v2018 = vpack.c.b16 %v2011, %v2010
        %v2019 = vpack.c.b16 %v2013, %v2012
        %v2020 = vpack.c.b16 %v2015, %v2014
        %v2021 = vpack.c.b16 %v2017, %v2016
        %v2027 = vsel %vm594, %v2001, 0
        %2029 = vmatprep.subr.bf16.mxu0 0
        %2030 = vmatpush1.bf16.msra.mxu0 %v2018
        %2031 = vmatprep.subr.bf16.mxu0 0
        %2032 = vmatpush1.bf16.msra.mxu0 %v2019
        %2033 = vmatprep.subr.bf16.mxu0 0
        %2034 = vmatpush1.bf16.msra.mxu0 %v2020
        %2035 = vmatprep.subr.bf16.mxu0 0
        %2036 = vmatpush1.bf16.msra.mxu0 %v2021
        %2037 = vmatprep.subr.bf16.mxu0 0
        %2038 = vmatpush1.bf16.msra.mxu0 0
        %2039 = vmatprep.subr.bf16.mxu0 0
        %2040 = vmatpush1.bf16.msra.mxu0 0
        %2041 = vmatprep.subr.bf16.mxu0 0
        %2042 = vmatpush1.bf16.msra.mxu0 0
        %2043 = vmatprep.subr.bf16.mxu0 0
        %2044 = vmatpush1.bf16.msra.mxu0 0
        %2045 = vmatprep.subr.bf16.mxu0 0
        %2046 = vmatpush1.bf16.msra.mxu0 0
        %2047 = vmatprep.subr.bf16.mxu0 0
        %2048 = vmatpush1.bf16.msra.mxu0 0
        %2049 = vmatprep.subr.bf16.mxu0 0
        %2050 = vmatpush1.bf16.msra.mxu0 0
        %2051 = vmatprep.subr.bf16.mxu0 0
        %2052 = vmatpush1.bf16.msra.mxu0 0
        %2053 = vmatprep.subr.bf16.mxu0 0
        %2054 = vmatpush1.bf16.msra.mxu0 0
        %2055 = vmatprep.subr.bf16.mxu0 0
        %2056 = vmatpush1.bf16.msra.mxu0 0
        %2057 = vmatprep.subr.bf16.mxu0 0
        %2058 = vmatpush1.bf16.msra.mxu0 0
        %2059 = vmatprep.subr.bf16.mxu0 0
        %2060 = vmatpush1.bf16.msra.mxu0 0
        %2061 = vmatprep.mubr.bf16.mxu0 0
        %2062 = vmatmul.mubr.bf16.gmra.mrb[0].mxu0 %v1032
        %v2063 = vpop.f32.mrb[0].mxu0
        %v2064 = vadd.f32 0.0, %v2063
        %v2065 = vpop.f32.mrb[0].mxu0
        %v2066 = vpop.f32.mrb[0].mxu0
        %v2067 = vadd.f32 0.0, %v2066
        %v2068 = vpop.f32.mrb[0].mxu0
        %2069 = vmatprep.mubr.bf16.mxu0 0
        %2070 = vmatmul.mubr.bf16.gmra.mrb[0].mxu0 %v1035
        %v2071 = vpop.f32.mrb[0].mxu0
        %v2072 = vadd.f32 0.0, %v2071
        %v2073 = vpop.f32.mrb[0].mxu0
        %v2074 = vpop.f32.mrb[0].mxu0
        %v2075 = vadd.f32 0.0, %v2074
        %v2076 = vpop.f32.mrb[0].mxu0
        %2077 = vmatprep.mubr.bf16.mxu0 0
        %2078 = vmatmul.mubr.bf16.gmra.mrb[0].mxu0 %v1038
        %v2079 = vpop.f32.mrb[0].mxu0
        %v2080 = vadd.f32 0.0, %v2079
        %v2081 = vpop.f32.mrb[0].mxu0
        %v2082 = vpop.f32.mrb[0].mxu0
        %v2083 = vadd.f32 0.0, %v2082
        %v2084 = vpop.f32.mrb[0].mxu0
        %2085 = vmatprep.mubr.bf16.mxu0 0
        %2086 = vmatmul.mubr.bf16.gmra.mrb[0].mxu0 %v1041
        %v2087 = vpop.f32.mrb[0].mxu0
        %v2088 = vadd.f32 0.0, %v2087
        %v2089 = vpop.f32.mrb[0].mxu0
        %v2090 = vpop.f32.mrb[0].mxu0
        %v2091 = vadd.f32 0.0, %v2090
        %v2092 = vpop.f32.mrb[0].mxu0
        %2093 = vmatprep.mubr.bf16.mxu0 0
        %2094 = vmatmul.mubr.bf16.gmra.mrb[0].mxu0 %v1044
        %v2095 = vpop.f32.mrb[0].mxu0
        %v2096 = vadd.f32 0.0, %v2095
        %v2097 = vpop.f32.mrb[0].mxu0
        %v2098 = vpop.f32.mrb[0].mxu0
        %v2099 = vadd.f32 0.0, %v2098
        %v2100 = vpop.f32.mrb[0].mxu0
        %2101 = vmatprep.mubr.bf16.mxu0 0
        %2102 = vmatmul.mubr.bf16.gmra.mrb[0].mxu0 %v1047
        %v2103 = vpop.f32.mrb[0].mxu0
        %v2104 = vadd.f32 0.0, %v2103
        %v2105 = vpop.f32.mrb[0].mxu0
        %v2106 = vpop.f32.mrb[0].mxu0
        %v2107 = vadd.f32 0.0, %v2106
        %v2108 = vpop.f32.mrb[0].mxu0
        %2109 = vmatprep.mubr.bf16.mxu0 0
        %2110 = vmatmul.mubr.bf16.gmra.mrb[0].mxu0 %v1537
        %v2111 = vpop.f32.mrb[0].mxu0
        %v2112 = vadd.f32 0.0, %v2111
        %v2113 = vpop.f32.mrb[0].mxu0
        %v2114 = vpop.f32.mrb[0].mxu0
        %v2115 = vadd.f32 0.0, %v2114
        %v2116 = vpop.f32.mrb[0].mxu0
        %2117 = vmatprep.mubr.bf16.mxu0 0
        %2118 = vmatmul.mubr.bf16.gmra.mrb[0].mxu0 %v2027
        %v2119 = vpop.f32.mrb[0].mxu0
        %v2120 = vadd.f32 0.0, %v2119
        %v2121 = vpop.f32.mrb[0].mxu0
        %v2122 = vpop.f32.mrb[0].mxu0
        %v2123 = vadd.f32 0.0, %v2122
        %v2124 = vpop.f32.mrb[0].mxu0
        %2125 = vdwg.mxu0
        %v2126 = vadd.f32 %v1966, %v2064
        %v2127 = vadd.f32 %v1967, %v2067
        %v2128 = vadd.f32 %v1968, %v2072
        %v2129 = vadd.f32 %v1969, %v2075
        %v2130 = vadd.f32 %v1970, %v2080
        %v2131 = vadd.f32 %v1971, %v2083
        %v2132 = vadd.f32 %v1972, %v2088
        %v2133 = vadd.f32 %v1973, %v2091
        %v2134 = vadd.f32 %v1974, %v2096
        %v2135 = vadd.f32 %v1975, %v2099
        %v2136 = vadd.f32 %v1976, %v2104
        %v2137 = vadd.f32 %v1977, %v2107
        %v2138 = vadd.f32 %v1978, %v2112
        %v2139 = vadd.f32 %v1979, %v2115
        %v2140 = vadd.f32 %v1980, %v2120
        %v2141 = vadd.f32 %v1981, %v2123
        %v2142 = vld [vmem:[%s2] sm:$0x1]
        %v2144 = vlaneseq
        %v2145 = vshrl.u32 %v2144, 7
        %v2146 = vsub.s32 0, %v2145
        %v2147 = vrot.slane %v2142, %v2146
        %v2149 = vadd.f32 %v2126, %v2147
        %v2150 = vadd.f32 %v2127, %v2147
        %v2151 = vadd.f32 %v2128, %v2147
        %v2152 = vadd.f32 %v2129, %v2147
        %v2153 = vadd.f32 %v2130, %v2147
        %v2154 = vadd.f32 %v2131, %v2147
        %v2155 = vadd.f32 %v2132, %v2147
        %v2156 = vadd.f32 %v2133, %v2147
        %v2157 = vadd.f32 %v2134, %v2147
        %v2158 = vadd.f32 %v2135, %v2147
        %v2159 = vadd.f32 %v2136, %v2147
        %v2160 = vadd.f32 %v2137, %v2147
        %v2161 = vadd.f32 %v2138, %v2147
        %v2162 = vadd.f32 %v2139, %v2147
        %v2163 = vadd.f32 %v2140, %v2147
        %v2164 = vadd.f32 %v2141, %v2147
        %v2165 = vmax.f32 %v2149, 0.0
        %v2166 = vmax.f32 %v2150, 0.0
        %v2167 = vmax.f32 %v2151, 0.0
        %v2168 = vmax.f32 %v2152, 0.0
        %v2169 = vmax.f32 %v2153, 0.0
        %v2170 = vmax.f32 %v2154, 0.0
        %v2171 = vmax.f32 %v2155, 0.0
        %v2172 = vmax.f32 %v2156, 0.0
        %v2173 = vmax.f32 %v2157, 0.0
        %v2174 = vmax.f32 %v2158, 0.0
        %v2175 = vmax.f32 %v2159, 0.0
        %v2176 = vmax.f32 %v2160, 0.0
        %v2177 = vmax.f32 %v2161, 0.0
        %v2178 = vmax.f32 %v2162, 0.0
        %v2179 = vmax.f32 %v2163, 0.0
        %v2180 = vmax.f32 %v2164, 0.0
        %v2181 = vld [vmem:[%s3] ss:$4 sm:$0xff]
        %s2182 = scalar_lea.vmem %s3, 32
        %v2183 = vld [vmem:[%s2182] ss:$4 sm:$0xff]
        %s2184 = scalar_lea.vmem %s3, 64
        %v2185 = vld [vmem:[%s2184] ss:$4 sm:$0x3]
        %2187 = vset.pattern.permute.xlu0 0
        %2188 = vperm.xlu0 %2187, %v2165
        %v2189 = vpop.permute.xlu0 %2188
        %2192 = vset.pattern.permute.xlu0 0
        %2193 = vperm.xlu0 %2192, %v2166
        %v2194 = vpop.permute.xlu0 %2193
        %2197 = vset.pattern.permute.xlu0 0
        %2198 = vperm.xlu0 %2197, %v2167
        %v2199 = vpop.permute.xlu0 %2198
        %2202 = vset.pattern.permute.xlu0 0
        %2203 = vperm.xlu0 %2202, %v2168
        %v2204 = vpop.permute.xlu0 %2203
        %2207 = vset.pattern.permute.xlu0 0
        %2208 = vperm.xlu0 %2207, %v2169
        %v2209 = vpop.permute.xlu0 %2208
        %2212 = vset.pattern.permute.xlu0 0
        %2213 = vperm.xlu0 %2212, %v2170
        %v2214 = vpop.permute.xlu0 %2213
        %2217 = vset.pattern.permute.xlu0 0
        %2218 = vperm.xlu0 %2217, %v2171
        %v2219 = vpop.permute.xlu0 %2218
        %2222 = vset.pattern.permute.xlu0 0
        %2223 = vperm.xlu0 %2222, %v2172
        %v2224 = vpop.permute.xlu0 %2223
        %2227 = vset.pattern.permute.xlu0 0
        %2228 = vperm.xlu0 %2227, %v2173
        %v2229 = vpop.permute.xlu0 %2228
        %2232 = vset.pattern.permute.xlu0 0
        %2233 = vperm.xlu0 %2232, %v2174
        %v2234 = vpop.permute.xlu0 %2233
        %2237 = vset.pattern.permute.xlu0 0
        %2238 = vperm.xlu0 %2237, %v2175
        %v2239 = vpop.permute.xlu0 %2238
        %2242 = vset.pattern.permute.xlu0 0
        %2243 = vperm.xlu0 %2242, %v2176
        %v2244 = vpop.permute.xlu0 %2243
        %2247 = vset.pattern.permute.xlu0 0
        %2248 = vperm.xlu0 %2247, %v2177
        %v2249 = vpop.permute.xlu0 %2248
        %2252 = vset.pattern.permute.xlu0 0
        %2253 = vperm.xlu0 %2252, %v2178
        %v2254 = vpop.permute.xlu0 %2253
        %2257 = vset.pattern.permute.xlu0 0
        %2258 = vperm.xlu0 %2257, %v2179
        %v2259 = vpop.permute.xlu0 %2258
        %2262 = vset.pattern.permute.xlu0 0
        %2263 = vperm.xlu0 %2262, %v2180
        %v2264 = vpop.permute.xlu0 %2263
        %v2269 = vlaneseq
        %v2270 = vshrl.u32 %v2269, 7
        %v2271 = vsub.s32 0, %v2270
        %v2272 = vrot.slane %v2181, %v2271
        %v2273 = vlaneseq
        %v2274 = vshrl.u32 %v2273, 7
        %v2275 = vsub.s32 1, %v2274
        %v2276 = vrot.slane %v2181, %v2275
        %v2277 = vlaneseq
        %v2278 = vshrl.u32 %v2277, 7
        %v2279 = vsub.s32 2, %v2278
        %v2280 = vrot.slane %v2181, %v2279
        %v2281 = vlaneseq
        %v2282 = vshrl.u32 %v2281, 7
        %v2283 = vsub.s32 3, %v2282
        %v2284 = vrot.slane %v2181, %v2283
        %v2285 = vlaneseq
        %v2286 = vshrl.u32 %v2285, 7
        %v2287 = vsub.s32 4, %v2286
        %v2288 = vrot.slane %v2181, %v2287
        %v2289 = vlaneseq
        %v2290 = vshrl.u32 %v2289, 7
        %v2291 = vsub.s32 5, %v2290
        %v2292 = vrot.slane %v2181, %v2291
        %v2293 = vlaneseq
        %v2294 = vshrl.u32 %v2293, 7
        %v2295 = vsub.s32 6, %v2294
        %v2296 = vrot.slane %v2181, %v2295
        %v2297 = vlaneseq
        %v2298 = vshrl.u32 %v2297, 7
        %v2299 = vsub.s32 7, %v2298
        %v2300 = vrot.slane %v2181, %v2299
        %v2301 = vlaneseq
        %v2302 = vshrl.u32 %v2301, 7
        %v2303 = vsub.s32 0, %v2302
        %v2304 = vrot.slane %v2183, %v2303
        %v2305 = vlaneseq
        %v2306 = vshrl.u32 %v2305, 7
        %v2307 = vsub.s32 1, %v2306
        %v2308 = vrot.slane %v2183, %v2307
        %v2309 = vlaneseq
        %v2310 = vshrl.u32 %v2309, 7
        %v2311 = vsub.s32 2, %v2310
        %v2312 = vrot.slane %v2183, %v2311
        %v2313 = vlaneseq
        %v2314 = vshrl.u32 %v2313, 7
        %v2315 = vsub.s32 3, %v2314
        %v2316 = vrot.slane %v2183, %v2315
        %v2317 = vlaneseq
        %v2318 = vshrl.u32 %v2317, 7
        %v2319 = vsub.s32 4, %v2318
        %v2320 = vrot.slane %v2183, %v2319
        %v2321 = vlaneseq
        %v2322 = vshrl.u32 %v2321, 7
        %v2323 = vsub.s32 5, %v2322
        %v2324 = vrot.slane %v2183, %v2323
        %v2325 = vlaneseq
        %v2326 = vshrl.u32 %v2325, 7
        %v2327 = vsub.s32 6, %v2326
        %v2328 = vrot.slane %v2183, %v2327
        %v2329 = vlaneseq
        %v2330 = vshrl.u32 %v2329, 7
        %v2331 = vsub.s32 7, %v2330
        %v2332 = vrot.slane %v2183, %v2331
        %v2333 = vlaneseq
        %v2334 = vshrl.u32 %v2333, 7
        %v2335 = vsub.s32 0, %v2334
        %v2336 = vrot.slane %v2185, %v2335
        %v2337 = vlaneseq
        %v2338 = vshrl.u32 %v2337, 7
        %v2339 = vsub.s32 1, %v2338
        %v2340 = vrot.slane %v2185, %v2339
        %v2359 = vmul.f32 %v2189, %v2272
        %v2360 = vmul.f32 %v2189, %v2276
        %v2361 = vmul.f32 %v2189, %v2280
        %v2362 = vmul.f32 %v2189, %v2284
        %v2363 = vmul.f32 %v2189, %v2288
        %v2364 = vmul.f32 %v2189, %v2292
        %v2365 = vmul.f32 %v2189, %v2296
        %v2366 = vmul.f32 %v2189, %v2300
        %v2367 = vmul.f32 %v2189, %v2304
        %v2368 = vmul.f32 %v2189, %v2308
        %v2369 = vmul.f32 %v2189, %v2312
        %v2370 = vmul.f32 %v2189, %v2316
        %v2371 = vmul.f32 %v2189, %v2320
        %v2372 = vmul.f32 %v2189, %v2324
        %v2373 = vmul.f32 %v2189, %v2328
        %v2374 = vmul.f32 %v2189, %v2332
        %v2375 = vmul.f32 %v2189, %v2336
        %v2376 = vmul.f32 %v2189, %v2340
        %v2377 = vmul.f32 %v2194, %v2272
        %v2378 = vmul.f32 %v2194, %v2276
        %v2379 = vmul.f32 %v2194, %v2280
        %v2380 = vmul.f32 %v2194, %v2284
        %v2381 = vmul.f32 %v2194, %v2288
        %v2382 = vmul.f32 %v2194, %v2292
        %v2383 = vmul.f32 %v2194, %v2296
        %v2384 = vmul.f32 %v2194, %v2300
        %v2385 = vmul.f32 %v2194, %v2304
        %v2386 = vmul.f32 %v2194, %v2308
        %v2387 = vmul.f32 %v2194, %v2312
        %v2388 = vmul.f32 %v2194, %v2316
        %v2389 = vmul.f32 %v2194, %v2320
        %v2390 = vmul.f32 %v2194, %v2324
        %v2391 = vmul.f32 %v2194, %v2328
        %v2392 = vmul.f32 %v2194, %v2332
        %v2393 = vmul.f32 %v2194, %v2336
        %v2394 = vmul.f32 %v2194, %v2340
        %v2395 = vmul.f32 %v2199, %v2272
        %v2396 = vmul.f32 %v2199, %v2276
        %v2397 = vmul.f32 %v2199, %v2280
        %v2398 = vmul.f32 %v2199, %v2284
        %v2399 = vmul.f32 %v2199, %v2288
        %v2400 = vmul.f32 %v2199, %v2292
        %v2401 = vmul.f32 %v2199, %v2296
        %v2402 = vmul.f32 %v2199, %v2300
        %v2403 = vmul.f32 %v2199, %v2304
        %v2404 = vmul.f32 %v2199, %v2308
        %v2405 = vmul.f32 %v2199, %v2312
        %v2406 = vmul.f32 %v2199, %v2316
        %v2407 = vmul.f32 %v2199, %v2320
        %v2408 = vmul.f32 %v2199, %v2324
        %v2409 = vmul.f32 %v2199, %v2328
        %v2410 = vmul.f32 %v2199, %v2332
        %v2411 = vmul.f32 %v2199, %v2336
        %v2412 = vmul.f32 %v2199, %v2340
        %v2413 = vmul.f32 %v2204, %v2272
        %v2414 = vmul.f32 %v2204, %v2276
        %v2415 = vmul.f32 %v2204, %v2280
        %v2416 = vmul.f32 %v2204, %v2284
        %v2417 = vmul.f32 %v2204, %v2288
        %v2418 = vmul.f32 %v2204, %v2292
        %v2419 = vmul.f32 %v2204, %v2296
        %v2420 = vmul.f32 %v2204, %v2300
        %v2421 = vmul.f32 %v2204, %v2304
        %v2422 = vmul.f32 %v2204, %v2308
        %v2423 = vmul.f32 %v2204, %v2312
        %v2424 = vmul.f32 %v2204, %v2316
        %v2425 = vmul.f32 %v2204, %v2320
        %v2426 = vmul.f32 %v2204, %v2324
        %v2427 = vmul.f32 %v2204, %v2328
        %v2428 = vmul.f32 %v2204, %v2332
        %v2429 = vmul.f32 %v2204, %v2336
        %v2430 = vmul.f32 %v2204, %v2340
        %v2431 = vmul.f32 %v2209, %v2272
        %v2432 = vmul.f32 %v2209, %v2276
        %v2433 = vmul.f32 %v2209, %v2280
        %v2434 = vmul.f32 %v2209, %v2284
        %v2435 = vmul.f32 %v2209, %v2288
        %v2436 = vmul.f32 %v2209, %v2292
        %v2437 = vmul.f32 %v2209, %v2296
        %v2438 = vmul.f32 %v2209, %v2300
        %v2439 = vmul.f32 %v2209, %v2304
        %v2440 = vmul.f32 %v2209, %v2308
        %v2441 = vmul.f32 %v2209, %v2312
        %v2442 = vmul.f32 %v2209, %v2316
        %v2443 = vmul.f32 %v2209, %v2320
        %v2444 = vmul.f32 %v2209, %v2324
        %v2445 = vmul.f32 %v2209, %v2328
        %v2446 = vmul.f32 %v2209, %v2332
        %v2447 = vmul.f32 %v2209, %v2336
        %v2448 = vmul.f32 %v2209, %v2340
        %v2449 = vmul.f32 %v2214, %v2272
        %v2450 = vmul.f32 %v2214, %v2276
        %v2451 = vmul.f32 %v2214, %v2280
        %v2452 = vmul.f32 %v2214, %v2284
        %v2453 = vmul.f32 %v2214, %v2288
        %v2454 = vmul.f32 %v2214, %v2292
        %v2455 = vmul.f32 %v2214, %v2296
        %v2456 = vmul.f32 %v2214, %v2300
        %v2457 = vmul.f32 %v2214, %v2304
        %v2458 = vmul.f32 %v2214, %v2308
        %v2459 = vmul.f32 %v2214, %v2312
        %v2460 = vmul.f32 %v2214, %v2316
        %v2461 = vmul.f32 %v2214, %v2320
        %v2462 = vmul.f32 %v2214, %v2324
        %v2463 = vmul.f32 %v2214, %v2328
        %v2464 = vmul.f32 %v2214, %v2332
        %v2465 = vmul.f32 %v2214, %v2336
        %v2466 = vmul.f32 %v2214, %v2340
        %v2467 = vmul.f32 %v2219, %v2272
        %v2468 = vmul.f32 %v2219, %v2276
        %v2469 = vmul.f32 %v2219, %v2280
        %v2470 = vmul.f32 %v2219, %v2284
        %v2471 = vmul.f32 %v2219, %v2288
        %v2472 = vmul.f32 %v2219, %v2292
        %v2473 = vmul.f32 %v2219, %v2296
        %v2474 = vmul.f32 %v2219, %v2300
        %v2475 = vmul.f32 %v2219, %v2304
        %v2476 = vmul.f32 %v2219, %v2308
        %v2477 = vmul.f32 %v2219, %v2312
        %v2478 = vmul.f32 %v2219, %v2316
        %v2479 = vmul.f32 %v2219, %v2320
        %v2480 = vmul.f32 %v2219, %v2324
        %v2481 = vmul.f32 %v2219, %v2328
        %v2482 = vmul.f32 %v2219, %v2332
        %v2483 = vmul.f32 %v2219, %v2336
        %v2484 = vmul.f32 %v2219, %v2340
        %v2485 = vmul.f32 %v2224, %v2272
        %v2486 = vmul.f32 %v2224, %v2276
        %v2487 = vmul.f32 %v2224, %v2280
        %v2488 = vmul.f32 %v2224, %v2284
        %v2489 = vmul.f32 %v2224, %v2288
        %v2490 = vmul.f32 %v2224, %v2292
        %v2491 = vmul.f32 %v2224, %v2296
        %v2492 = vmul.f32 %v2224, %v2300
        %v2493 = vmul.f32 %v2224, %v2304
        %v2494 = vmul.f32 %v2224, %v2308
        %v2495 = vmul.f32 %v2224, %v2312
        %v2496 = vmul.f32 %v2224, %v2316
        %v2497 = vmul.f32 %v2224, %v2320
        %v2498 = vmul.f32 %v2224, %v2324
        %v2499 = vmul.f32 %v2224, %v2328
        %v2500 = vmul.f32 %v2224, %v2332
        %v2501 = vmul.f32 %v2224, %v2336
        %v2502 = vmul.f32 %v2224, %v2340
        %v2503 = vmul.f32 %v2229, %v2272
        %v2504 = vmul.f32 %v2229, %v2276
        %v2505 = vmul.f32 %v2229, %v2280
        %v2506 = vmul.f32 %v2229, %v2284
        %v2507 = vmul.f32 %v2229, %v2288
        %v2508 = vmul.f32 %v2229, %v2292
        %v2509 = vmul.f32 %v2229, %v2296
        %v2510 = vmul.f32 %v2229, %v2300
        %v2511 = vmul.f32 %v2229, %v2304
        %v2512 = vmul.f32 %v2229, %v2308
        %v2513 = vmul.f32 %v2229, %v2312
        %v2514 = vmul.f32 %v2229, %v2316
        %v2515 = vmul.f32 %v2229, %v2320
        %v2516 = vmul.f32 %v2229, %v2324
        %v2517 = vmul.f32 %v2229, %v2328
        %v2518 = vmul.f32 %v2229, %v2332
        %v2519 = vmul.f32 %v2229, %v2336
        %v2520 = vmul.f32 %v2229, %v2340
        %v2521 = vmul.f32 %v2234, %v2272
        %v2522 = vmul.f32 %v2234, %v2276
        %v2523 = vmul.f32 %v2234, %v2280
        %v2524 = vmul.f32 %v2234, %v2284
        %v2525 = vmul.f32 %v2234, %v2288
        %v2526 = vmul.f32 %v2234, %v2292
        %v2527 = vmul.f32 %v2234, %v2296
        %v2528 = vmul.f32 %v2234, %v2300
        %v2529 = vmul.f32 %v2234, %v2304
        %v2530 = vmul.f32 %v2234, %v2308
        %v2531 = vmul.f32 %v2234, %v2312
        %v2532 = vmul.f32 %v2234, %v2316
        %v2533 = vmul.f32 %v2234, %v2320
        %v2534 = vmul.f32 %v2234, %v2324
        %v2535 = vmul.f32 %v2234, %v2328
        %v2536 = vmul.f32 %v2234, %v2332
        %v2537 = vmul.f32 %v2234, %v2336
        %v2538 = vmul.f32 %v2234, %v2340
        %v2539 = vmul.f32 %v2239, %v2272
        %v2540 = vmul.f32 %v2239, %v2276
        %v2541 = vmul.f32 %v2239, %v2280
        %v2542 = vmul.f32 %v2239, %v2284
        %v2543 = vmul.f32 %v2239, %v2288
        %v2544 = vmul.f32 %v2239, %v2292
        %v2545 = vmul.f32 %v2239, %v2296
        %v2546 = vmul.f32 %v2239, %v2300
        %v2547 = vmul.f32 %v2239, %v2304
        %v2548 = vmul.f32 %v2239, %v2308
        %v2549 = vmul.f32 %v2239, %v2312
        %v2550 = vmul.f32 %v2239, %v2316
        %v2551 = vmul.f32 %v2239, %v2320
        %v2552 = vmul.f32 %v2239, %v2324
        %v2553 = vmul.f32 %v2239, %v2328
        %v2554 = vmul.f32 %v2239, %v2332
        %v2555 = vmul.f32 %v2239, %v2336
        %v2556 = vmul.f32 %v2239, %v2340
        %v2557 = vmul.f32 %v2244, %v2272
        %v2558 = vmul.f32 %v2244, %v2276
        %v2559 = vmul.f32 %v2244, %v2280
        %v2560 = vmul.f32 %v2244, %v2284
        %v2561 = vmul.f32 %v2244, %v2288
        %v2562 = vmul.f32 %v2244, %v2292
        %v2563 = vmul.f32 %v2244, %v2296
        %v2564 = vmul.f32 %v2244, %v2300
        %v2565 = vmul.f32 %v2244, %v2304
        %v2566 = vmul.f32 %v2244, %v2308
        %v2567 = vmul.f32 %v2244, %v2312
        %v2568 = vmul.f32 %v2244, %v2316
        %v2569 = vmul.f32 %v2244, %v2320
        %v2570 = vmul.f32 %v2244, %v2324
        %v2571 = vmul.f32 %v2244, %v2328
        %v2572 = vmul.f32 %v2244, %v2332
        %v2573 = vmul.f32 %v2244, %v2336
        %v2574 = vmul.f32 %v2244, %v2340
        %v2575 = vmul.f32 %v2249, %v2272
        %v2576 = vmul.f32 %v2249, %v2276
        %v2577 = vmul.f32 %v2249, %v2280
        %v2578 = vmul.f32 %v2249, %v2284
        %v2579 = vmul.f32 %v2249, %v2288
        %v2580 = vmul.f32 %v2249, %v2292
        %v2581 = vmul.f32 %v2249, %v2296
        %v2582 = vmul.f32 %v2249, %v2300
        %v2583 = vmul.f32 %v2249, %v2304
        %v2584 = vmul.f32 %v2249, %v2308
        %v2585 = vmul.f32 %v2249, %v2312
        %v2586 = vmul.f32 %v2249, %v2316
        %v2587 = vmul.f32 %v2249, %v2320
        %v2588 = vmul.f32 %v2249, %v2324
        %v2589 = vmul.f32 %v2249, %v2328
        %v2590 = vmul.f32 %v2249, %v2332
        %v2591 = vmul.f32 %v2249, %v2336
        %v2592 = vmul.f32 %v2249, %v2340
        %v2593 = vmul.f32 %v2254, %v2272
        %v2594 = vmul.f32 %v2254, %v2276
        %v2595 = vmul.f32 %v2254, %v2280
        %v2596 = vmul.f32 %v2254, %v2284
        %v2597 = vmul.f32 %v2254, %v2288
        %v2598 = vmul.f32 %v2254, %v2292
        %v2599 = vmul.f32 %v2254, %v2296
        %v2600 = vmul.f32 %v2254, %v2300
        %v2601 = vmul.f32 %v2254, %v2304
        %v2602 = vmul.f32 %v2254, %v2308
        %v2603 = vmul.f32 %v2254, %v2312
        %v2604 = vmul.f32 %v2254, %v2316
        %v2605 = vmul.f32 %v2254, %v2320
        %v2606 = vmul.f32 %v2254, %v2324
        %v2607 = vmul.f32 %v2254, %v2328
        %v2608 = vmul.f32 %v2254, %v2332
        %v2609 = vmul.f32 %v2254, %v2336
        %v2610 = vmul.f32 %v2254, %v2340
        %v2611 = vmul.f32 %v2259, %v2272
        %v2612 = vmul.f32 %v2259, %v2276
        %v2613 = vmul.f32 %v2259, %v2280
        %v2614 = vmul.f32 %v2259, %v2284
        %v2615 = vmul.f32 %v2259, %v2288
        %v2616 = vmul.f32 %v2259, %v2292
        %v2617 = vmul.f32 %v2259, %v2296
        %v2618 = vmul.f32 %v2259, %v2300
        %v2619 = vmul.f32 %v2259, %v2304
        %v2620 = vmul.f32 %v2259, %v2308
        %v2621 = vmul.f32 %v2259, %v2312
        %v2622 = vmul.f32 %v2259, %v2316
        %v2623 = vmul.f32 %v2259, %v2320
        %v2624 = vmul.f32 %v2259, %v2324
        %v2625 = vmul.f32 %v2259, %v2328
        %v2626 = vmul.f32 %v2259, %v2332
        %v2627 = vmul.f32 %v2259, %v2336
        %v2628 = vmul.f32 %v2259, %v2340
        %v2629 = vmul.f32 %v2264, %v2272
        %v2630 = vmul.f32 %v2264, %v2276
        %v2631 = vmul.f32 %v2264, %v2280
        %v2632 = vmul.f32 %v2264, %v2284
        %v2633 = vmul.f32 %v2264, %v2288
        %v2634 = vmul.f32 %v2264, %v2292
        %v2635 = vmul.f32 %v2264, %v2296
        %v2636 = vmul.f32 %v2264, %v2300
        %v2637 = vmul.f32 %v2264, %v2304
        %v2638 = vmul.f32 %v2264, %v2308
        %v2639 = vmul.f32 %v2264, %v2312
        %v2640 = vmul.f32 %v2264, %v2316
        %v2641 = vmul.f32 %v2264, %v2320
        %v2642 = vmul.f32 %v2264, %v2324
        %v2643 = vmul.f32 %v2264, %v2328
        %v2644 = vmul.f32 %v2264, %v2332
        %v2645 = vmul.f32 %v2264, %v2336
        %v2646 = vmul.f32 %v2264, %v2340
        %s2647 = scalar_lea.vmem %s3, 1
        %v2648 = vld [vmem:[%s2647] ss:$4 sm:$0xff]
        %s2649 = scalar_lea.vmem %s3, 33
        %v2650 = vld [vmem:[%s2649] ss:$4 sm:$0xff]
        %s2651 = scalar_lea.vmem %s3, 65
        %v2652 = vld [vmem:[%s2651] ss:$4 sm:$0x3]
        %2653 = vset.pattern.permute.xlu0 1
        %2654 = vperm.xlu0 %2653, %v2165
        %v2655 = vpop.permute.xlu0 %2654
        %2657 = vset.pattern.permute.xlu0 1
        %2658 = vperm.xlu0 %2657, %v2166
        %v2659 = vpop.permute.xlu0 %2658
        %2661 = vset.pattern.permute.xlu0 1
        %2662 = vperm.xlu0 %2661, %v2167
        %v2663 = vpop.permute.xlu0 %2662
        %2665 = vset.pattern.permute.xlu0 1
        %2666 = vperm.xlu0 %2665, %v2168
        %v2667 = vpop.permute.xlu0 %2666
        %2669 = vset.pattern.permute.xlu0 1
        %2670 = vperm.xlu0 %2669, %v2169
        %v2671 = vpop.permute.xlu0 %2670
        %2673 = vset.pattern.permute.xlu0 1
        %2674 = vperm.xlu0 %2673, %v2170
        %v2675 = vpop.permute.xlu0 %2674
        %2677 = vset.pattern.permute.xlu0 1
        %2678 = vperm.xlu0 %2677, %v2171
        %v2679 = vpop.permute.xlu0 %2678
        %2681 = vset.pattern.permute.xlu0 1
        %2682 = vperm.xlu0 %2681, %v2172
        %v2683 = vpop.permute.xlu0 %2682
        %2685 = vset.pattern.permute.xlu0 1
        %2686 = vperm.xlu0 %2685, %v2173
        %v2687 = vpop.permute.xlu0 %2686
        %2689 = vset.pattern.permute.xlu0 1
        %2690 = vperm.xlu0 %2689, %v2174
        %v2691 = vpop.permute.xlu0 %2690
        %2693 = vset.pattern.permute.xlu0 1
        %2694 = vperm.xlu0 %2693, %v2175
        %v2695 = vpop.permute.xlu0 %2694
        %2697 = vset.pattern.permute.xlu0 1
        %2698 = vperm.xlu0 %2697, %v2176
        %v2699 = vpop.permute.xlu0 %2698
        %2701 = vset.pattern.permute.xlu0 1
        %2702 = vperm.xlu0 %2701, %v2177
        %v2703 = vpop.permute.xlu0 %2702
        %2705 = vset.pattern.permute.xlu0 1
        %2706 = vperm.xlu0 %2705, %v2178
        %v2707 = vpop.permute.xlu0 %2706
        %2709 = vset.pattern.permute.xlu0 1
        %2710 = vperm.xlu0 %2709, %v2179
        %v2711 = vpop.permute.xlu0 %2710
        %2713 = vset.pattern.permute.xlu0 1
        %2714 = vperm.xlu0 %2713, %v2180
        %v2715 = vpop.permute.xlu0 %2714
        %v2720 = vlaneseq
        %v2721 = vshrl.u32 %v2720, 7
        %v2722 = vsub.s32 0, %v2721
        %v2723 = vrot.slane %v2648, %v2722
        %v2724 = vlaneseq
        %v2725 = vshrl.u32 %v2724, 7
        %v2726 = vsub.s32 1, %v2725
        %v2727 = vrot.slane %v2648, %v2726
        %v2728 = vlaneseq
        %v2729 = vshrl.u32 %v2728, 7
        %v2730 = vsub.s32 2, %v2729
        %v2731 = vrot.slane %v2648, %v2730
        %v2732 = vlaneseq
        %v2733 = vshrl.u32 %v2732, 7
        %v2734 = vsub.s32 3, %v2733
        %v2735 = vrot.slane %v2648, %v2734
        %v2736 = vlaneseq
        %v2737 = vshrl.u32 %v2736, 7
        %v2738 = vsub.s32 4, %v2737
        %v2739 = vrot.slane %v2648, %v2738
        %v2740 = vlaneseq
        %v2741 = vshrl.u32 %v2740, 7
        %v2742 = vsub.s32 5, %v2741
        %v2743 = vrot.slane %v2648, %v2742
        %v2744 = vlaneseq
        %v2745 = vshrl.u32 %v2744, 7
        %v2746 = vsub.s32 6, %v2745
        %v2747 = vrot.slane %v2648, %v2746
        %v2748 = vlaneseq
        %v2749 = vshrl.u32 %v2748, 7
        %v2750 = vsub.s32 7, %v2749
        %v2751 = vrot.slane %v2648, %v2750
        %v2752 = vlaneseq
        %v2753 = vshrl.u32 %v2752, 7
        %v2754 = vsub.s32 0, %v2753
        %v2755 = vrot.slane %v2650, %v2754
        %v2756 = vlaneseq
        %v2757 = vshrl.u32 %v2756, 7
        %v2758 = vsub.s32 1, %v2757
        %v2759 = vrot.slane %v2650, %v2758
        %v2760 = vlaneseq
        %v2761 = vshrl.u32 %v2760, 7
        %v2762 = vsub.s32 2, %v2761
        %v2763 = vrot.slane %v2650, %v2762
        %v2764 = vlaneseq
        %v2765 = vshrl.u32 %v2764, 7
        %v2766 = vsub.s32 3, %v2765
        %v2767 = vrot.slane %v2650, %v2766
        %v2768 = vlaneseq
        %v2769 = vshrl.u32 %v2768, 7
        %v2770 = vsub.s32 4, %v2769
        %v2771 = vrot.slane %v2650, %v2770
        %v2772 = vlaneseq
        %v2773 = vshrl.u32 %v2772, 7
        %v2774 = vsub.s32 5, %v2773
        %v2775 = vrot.slane %v2650, %v2774
        %v2776 = vlaneseq
        %v2777 = vshrl.u32 %v2776, 7
        %v2778 = vsub.s32 6, %v2777
        %v2779 = vrot.slane %v2650, %v2778
        %v2780 = vlaneseq
        %v2781 = vshrl.u32 %v2780, 7
        %v2782 = vsub.s32 7, %v2781
        %v2783 = vrot.slane %v2650, %v2782
        %v2784 = vlaneseq
        %v2785 = vshrl.u32 %v2784, 7
        %v2786 = vsub.s32 0, %v2785
        %v2787 = vrot.slane %v2652, %v2786
        %v2788 = vlaneseq
        %v2789 = vshrl.u32 %v2788, 7
        %v2790 = vsub.s32 1, %v2789
        %v2791 = vrot.slane %v2652, %v2790
        %v2810 = vmul.f32 %v2655, %v2723
        %v2811 = vmul.f32 %v2655, %v2727
        %v2812 = vmul.f32 %v2655, %v2731
        %v2813 = vmul.f32 %v2655, %v2735
        %v2814 = vmul.f32 %v2655, %v2739
        %v2815 = vmul.f32 %v2655, %v2743
        %v2816 = vmul.f32 %v2655, %v2747
        %v2817 = vmul.f32 %v2655, %v2751
        %v2818 = vmul.f32 %v2655, %v2755
        %v2819 = vmul.f32 %v2655, %v2759
        %v2820 = vmul.f32 %v2655, %v2763
        %v2821 = vmul.f32 %v2655, %v2767
        %v2822 = vmul.f32 %v2655, %v2771
        %v2823 = vmul.f32 %v2655, %v2775
        %v2824 = vmul.f32 %v2655, %v2779
        %v2825 = vmul.f32 %v2655, %v2783
        %v2826 = vmul.f32 %v2655, %v2787
        %v2827 = vmul.f32 %v2655, %v2791
        %v2828 = vmul.f32 %v2659, %v2723
        %v2829 = vmul.f32 %v2659, %v2727
        %v2830 = vmul.f32 %v2659, %v2731
        %v2831 = vmul.f32 %v2659, %v2735
        %v2832 = vmul.f32 %v2659, %v2739
        %v2833 = vmul.f32 %v2659, %v2743
        %v2834 = vmul.f32 %v2659, %v2747
        %v2835 = vmul.f32 %v2659, %v2751
        %v2836 = vmul.f32 %v2659, %v2755
        %v2837 = vmul.f32 %v2659, %v2759
        %v2838 = vmul.f32 %v2659, %v2763
        %v2839 = vmul.f32 %v2659, %v2767
        %v2840 = vmul.f32 %v2659, %v2771
        %v2841 = vmul.f32 %v2659, %v2775
        %v2842 = vmul.f32 %v2659, %v2779
        %v2843 = vmul.f32 %v2659, %v2783
        %v2844 = vmul.f32 %v2659, %v2787
        %v2845 = vmul.f32 %v2659, %v2791
        %v2846 = vmul.f32 %v2663, %v2723
        %v2847 = vmul.f32 %v2663, %v2727
        %v2848 = vmul.f32 %v2663, %v2731
        %v2849 = vmul.f32 %v2663, %v2735
        %v2850 = vmul.f32 %v2663, %v2739
        %v2851 = vmul.f32 %v2663, %v2743
        %v2852 = vmul.f32 %v2663, %v2747
        %v2853 = vmul.f32 %v2663, %v2751
        %v2854 = vmul.f32 %v2663, %v2755
        %v2855 = vmul.f32 %v2663, %v2759
        %v2856 = vmul.f32 %v2663, %v2763
        %v2857 = vmul.f32 %v2663, %v2767
        %v2858 = vmul.f32 %v2663, %v2771
        %v2859 = vmul.f32 %v2663, %v2775
        %v2860 = vmul.f32 %v2663, %v2779
        %v2861 = vmul.f32 %v2663, %v2783
        %v2862 = vmul.f32 %v2663, %v2787
        %v2863 = vmul.f32 %v2663, %v2791
        %v2864 = vmul.f32 %v2667, %v2723
        %v2865 = vmul.f32 %v2667, %v2727
        %v2866 = vmul.f32 %v2667, %v2731
        %v2867 = vmul.f32 %v2667, %v2735
        %v2868 = vmul.f32 %v2667, %v2739
        %v2869 = vmul.f32 %v2667, %v2743
        %v2870 = vmul.f32 %v2667, %v2747
        %v2871 = vmul.f32 %v2667, %v2751
        %v2872 = vmul.f32 %v2667, %v2755
        %v2873 = vmul.f32 %v2667, %v2759
        %v2874 = vmul.f32 %v2667, %v2763
        %v2875 = vmul.f32 %v2667, %v2767
        %v2876 = vmul.f32 %v2667, %v2771
        %v2877 = vmul.f32 %v2667, %v2775
        %v2878 = vmul.f32 %v2667, %v2779
        %v2879 = vmul.f32 %v2667, %v2783
        %v2880 = vmul.f32 %v2667, %v2787
        %v2881 = vmul.f32 %v2667, %v2791
        %v2882 = vmul.f32 %v2671, %v2723
        %v2883 = vmul.f32 %v2671, %v2727
        %v2884 = vmul.f32 %v2671, %v2731
        %v2885 = vmul.f32 %v2671, %v2735
        %v2886 = vmul.f32 %v2671, %v2739
        %v2887 = vmul.f32 %v2671, %v2743
        %v2888 = vmul.f32 %v2671, %v2747
        %v2889 = vmul.f32 %v2671, %v2751
        %v2890 = vmul.f32 %v2671, %v2755
        %v2891 = vmul.f32 %v2671, %v2759
        %v2892 = vmul.f32 %v2671, %v2763
        %v2893 = vmul.f32 %v2671, %v2767
        %v2894 = vmul.f32 %v2671, %v2771
        %v2895 = vmul.f32 %v2671, %v2775
        %v2896 = vmul.f32 %v2671, %v2779
        %v2897 = vmul.f32 %v2671, %v2783
        %v2898 = vmul.f32 %v2671, %v2787
        %v2899 = vmul.f32 %v2671, %v2791
        %v2900 = vmul.f32 %v2675, %v2723
        %v2901 = vmul.f32 %v2675, %v2727
        %v2902 = vmul.f32 %v2675, %v2731
        %v2903 = vmul.f32 %v2675, %v2735
        %v2904 = vmul.f32 %v2675, %v2739
        %v2905 = vmul.f32 %v2675, %v2743
        %v2906 = vmul.f32 %v2675, %v2747
        %v2907 = vmul.f32 %v2675, %v2751
        %v2908 = vmul.f32 %v2675, %v2755
        %v2909 = vmul.f32 %v2675, %v2759
        %v2910 = vmul.f32 %v2675, %v2763
        %v2911 = vmul.f32 %v2675, %v2767
        %v2912 = vmul.f32 %v2675, %v2771
        %v2913 = vmul.f32 %v2675, %v2775
        %v2914 = vmul.f32 %v2675, %v2779
        %v2915 = vmul.f32 %v2675, %v2783
        %v2916 = vmul.f32 %v2675, %v2787
        %v2917 = vmul.f32 %v2675, %v2791
        %v2918 = vmul.f32 %v2679, %v2723
        %v2919 = vmul.f32 %v2679, %v2727
        %v2920 = vmul.f32 %v2679, %v2731
        %v2921 = vmul.f32 %v2679, %v2735
        %v2922 = vmul.f32 %v2679, %v2739
        %v2923 = vmul.f32 %v2679, %v2743
        %v2924 = vmul.f32 %v2679, %v2747
        %v2925 = vmul.f32 %v2679, %v2751
        %v2926 = vmul.f32 %v2679, %v2755
        %v2927 = vmul.f32 %v2679, %v2759
        %v2928 = vmul.f32 %v2679, %v2763
        %v2929 = vmul.f32 %v2679, %v2767
        %v2930 = vmul.f32 %v2679, %v2771
        %v2931 = vmul.f32 %v2679, %v2775
        %v2932 = vmul.f32 %v2679, %v2779
        %v2933 = vmul.f32 %v2679, %v2783
        %v2934 = vmul.f32 %v2679, %v2787
        %v2935 = vmul.f32 %v2679, %v2791
        %v2936 = vmul.f32 %v2683, %v2723
        %v2937 = vmul.f32 %v2683, %v2727
        %v2938 = vmul.f32 %v2683, %v2731
        %v2939 = vmul.f32 %v2683, %v2735
        %v2940 = vmul.f32 %v2683, %v2739
        %v2941 = vmul.f32 %v2683, %v2743
        %v2942 = vmul.f32 %v2683, %v2747
        %v2943 = vmul.f32 %v2683, %v2751
        %v2944 = vmul.f32 %v2683, %v2755
        %v2945 = vmul.f32 %v2683, %v2759
        %v2946 = vmul.f32 %v2683, %v2763
        %v2947 = vmul.f32 %v2683, %v2767
        %v2948 = vmul.f32 %v2683, %v2771
        %v2949 = vmul.f32 %v2683, %v2775
        %v2950 = vmul.f32 %v2683, %v2779
        %v2951 = vmul.f32 %v2683, %v2783
        %v2952 = vmul.f32 %v2683, %v2787
        %v2953 = vmul.f32 %v2683, %v2791
        %v2954 = vmul.f32 %v2687, %v2723
        %v2955 = vmul.f32 %v2687, %v2727
        %v2956 = vmul.f32 %v2687, %v2731
        %v2957 = vmul.f32 %v2687, %v2735
        %v2958 = vmul.f32 %v2687, %v2739
        %v2959 = vmul.f32 %v2687, %v2743
        %v2960 = vmul.f32 %v2687, %v2747
        %v2961 = vmul.f32 %v2687, %v2751
        %v2962 = vmul.f32 %v2687, %v2755
        %v2963 = vmul.f32 %v2687, %v2759
        %v2964 = vmul.f32 %v2687, %v2763
        %v2965 = vmul.f32 %v2687, %v2767
        %v2966 = vmul.f32 %v2687, %v2771
        %v2967 = vmul.f32 %v2687, %v2775
        %v2968 = vmul.f32 %v2687, %v2779
        %v2969 = vmul.f32 %v2687, %v2783
        %v2970 = vmul.f32 %v2687, %v2787
        %v2971 = vmul.f32 %v2687, %v2791
        %v2972 = vmul.f32 %v2691, %v2723
        %v2973 = vmul.f32 %v2691, %v2727
        %v2974 = vmul.f32 %v2691, %v2731
        %v2975 = vmul.f32 %v2691, %v2735
        %v2976 = vmul.f32 %v2691, %v2739
        %v2977 = vmul.f32 %v2691, %v2743
        %v2978 = vmul.f32 %v2691, %v2747
        %v2979 = vmul.f32 %v2691, %v2751
        %v2980 = vmul.f32 %v2691, %v2755
        %v2981 = vmul.f32 %v2691, %v2759
        %v2982 = vmul.f32 %v2691, %v2763
        %v2983 = vmul.f32 %v2691, %v2767
        %v2984 = vmul.f32 %v2691, %v2771
        %v2985 = vmul.f32 %v2691, %v2775
        %v2986 = vmul.f32 %v2691, %v2779
        %v2987 = vmul.f32 %v2691, %v2783
        %v2988 = vmul.f32 %v2691, %v2787
        %v2989 = vmul.f32 %v2691, %v2791
        %v2990 = vmul.f32 %v2695, %v2723
        %v2991 = vmul.f32 %v2695, %v2727
        %v2992 = vmul.f32 %v2695, %v2731
        %v2993 = vmul.f32 %v2695, %v2735
        %v2994 = vmul.f32 %v2695, %v2739
        %v2995 = vmul.f32 %v2695, %v2743
        %v2996 = vmul.f32 %v2695, %v2747
        %v2997 = vmul.f32 %v2695, %v2751
        %v2998 = vmul.f32 %v2695, %v2755
        %v2999 = vmul.f32 %v2695, %v2759
        %v3000 = vmul.f32 %v2695, %v2763
        %v3001 = vmul.f32 %v2695, %v2767
        %v3002 = vmul.f32 %v2695, %v2771
        %v3003 = vmul.f32 %v2695, %v2775
        %v3004 = vmul.f32 %v2695, %v2779
        %v3005 = vmul.f32 %v2695, %v2783
        %v3006 = vmul.f32 %v2695, %v2787
        %v3007 = vmul.f32 %v2695, %v2791
        %v3008 = vmul.f32 %v2699, %v2723
        %v3009 = vmul.f32 %v2699, %v2727
        %v3010 = vmul.f32 %v2699, %v2731
        %v3011 = vmul.f32 %v2699, %v2735
        %v3012 = vmul.f32 %v2699, %v2739
        %v3013 = vmul.f32 %v2699, %v2743
        %v3014 = vmul.f32 %v2699, %v2747
        %v3015 = vmul.f32 %v2699, %v2751
        %v3016 = vmul.f32 %v2699, %v2755
        %v3017 = vmul.f32 %v2699, %v2759
        %v3018 = vmul.f32 %v2699, %v2763
        %v3019 = vmul.f32 %v2699, %v2767
        %v3020 = vmul.f32 %v2699, %v2771
        %v3021 = vmul.f32 %v2699, %v2775
        %v3022 = vmul.f32 %v2699, %v2779
        %v3023 = vmul.f32 %v2699, %v2783
        %v3024 = vmul.f32 %v2699, %v2787
        %v3025 = vmul.f32 %v2699, %v2791
        %v3026 = vmul.f32 %v2703, %v2723
        %v3027 = vmul.f32 %v2703, %v2727
        %v3028 = vmul.f32 %v2703, %v2731
        %v3029 = vmul.f32 %v2703, %v2735
        %v3030 = vmul.f32 %v2703, %v2739
        %v3031 = vmul.f32 %v2703, %v2743
        %v3032 = vmul.f32 %v2703, %v2747
        %v3033 = vmul.f32 %v2703, %v2751
        %v3034 = vmul.f32 %v2703, %v2755
        %v3035 = vmul.f32 %v2703, %v2759
        %v3036 = vmul.f32 %v2703, %v2763
        %v3037 = vmul.f32 %v2703, %v2767
        %v3038 = vmul.f32 %v2703, %v2771
        %v3039 = vmul.f32 %v2703, %v2775
        %v3040 = vmul.f32 %v2703, %v2779
        %v3041 = vmul.f32 %v2703, %v2783
        %v3042 = vmul.f32 %v2703, %v2787
        %v3043 = vmul.f32 %v2703, %v2791
        %v3044 = vmul.f32 %v2707, %v2723
        %v3045 = vmul.f32 %v2707, %v2727
        %v3046 = vmul.f32 %v2707, %v2731
        %v3047 = vmul.f32 %v2707, %v2735
        %v3048 = vmul.f32 %v2707, %v2739
        %v3049 = vmul.f32 %v2707, %v2743
        %v3050 = vmul.f32 %v2707, %v2747
        %v3051 = vmul.f32 %v2707, %v2751
        %v3052 = vmul.f32 %v2707, %v2755
        %v3053 = vmul.f32 %v2707, %v2759
        %v3054 = vmul.f32 %v2707, %v2763
        %v3055 = vmul.f32 %v2707, %v2767
        %v3056 = vmul.f32 %v2707, %v2771
        %v3057 = vmul.f32 %v2707, %v2775
        %v3058 = vmul.f32 %v2707, %v2779
        %v3059 = vmul.f32 %v2707, %v2783
        %v3060 = vmul.f32 %v2707, %v2787
        %v3061 = vmul.f32 %v2707, %v2791
        %v3062 = vmul.f32 %v2711, %v2723
        %v3063 = vmul.f32 %v2711, %v2727
        %v3064 = vmul.f32 %v2711, %v2731
        %v3065 = vmul.f32 %v2711, %v2735
        %v3066 = vmul.f32 %v2711, %v2739
        %v3067 = vmul.f32 %v2711, %v2743
        %v3068 = vmul.f32 %v2711, %v2747
        %v3069 = vmul.f32 %v2711, %v2751
        %v3070 = vmul.f32 %v2711, %v2755
        %v3071 = vmul.f32 %v2711, %v2759
        %v3072 = vmul.f32 %v2711, %v2763
        %v3073 = vmul.f32 %v2711, %v2767
        %v3074 = vmul.f32 %v2711, %v2771
        %v3075 = vmul.f32 %v2711, %v2775
        %v3076 = vmul.f32 %v2711, %v2779
        %v3077 = vmul.f32 %v2711, %v2783
        %v3078 = vmul.f32 %v2711, %v2787
        %v3079 = vmul.f32 %v2711, %v2791
        %v3080 = vmul.f32 %v2715, %v2723
        %v3081 = vmul.f32 %v2715, %v2727
        %v3082 = vmul.f32 %v2715, %v2731
        %v3083 = vmul.f32 %v2715, %v2735
        %v3084 = vmul.f32 %v2715, %v2739
        %v3085 = vmul.f32 %v2715, %v2743
        %v3086 = vmul.f32 %v2715, %v2747
        %v3087 = vmul.f32 %v2715, %v2751
        %v3088 = vmul.f32 %v2715, %v2755
        %v3089 = vmul.f32 %v2715, %v2759
        %v3090 = vmul.f32 %v2715, %v2763
        %v3091 = vmul.f32 %v2715, %v2767
        %v3092 = vmul.f32 %v2715, %v2771
        %v3093 = vmul.f32 %v2715, %v2775
        %v3094 = vmul.f32 %v2715, %v2779
        %v3095 = vmul.f32 %v2715, %v2783
        %v3096 = vmul.f32 %v2715, %v2787
        %v3097 = vmul.f32 %v2715, %v2791
        %v3098 = vadd.f32 %v2359, %v2810
        %v3099 = vadd.f32 %v2360, %v2811
        %v3100 = vadd.f32 %v2361, %v2812
        %v3101 = vadd.f32 %v2362, %v2813
        %v3102 = vadd.f32 %v2363, %v2814
        %v3103 = vadd.f32 %v2364, %v2815
        %v3104 = vadd.f32 %v2365, %v2816
        %v3105 = vadd.f32 %v2366, %v2817
        %v3106 = vadd.f32 %v2367, %v2818
        %v3107 = vadd.f32 %v2368, %v2819
        %v3108 = vadd.f32 %v2369, %v2820
        %v3109 = vadd.f32 %v2370, %v2821
        %v3110 = vadd.f32 %v2371, %v2822
        %v3111 = vadd.f32 %v2372, %v2823
        %v3112 = vadd.f32 %v2373, %v2824
        %v3113 = vadd.f32 %v2374, %v2825
        %v3114 = vadd.f32 %v2375, %v2826
        %v3115 = vadd.f32 %v2376, %v2827
        %v3116 = vadd.f32 %v2377, %v2828
        %v3117 = vadd.f32 %v2378, %v2829
        %v3118 = vadd.f32 %v2379, %v2830
        %v3119 = vadd.f32 %v2380, %v2831
        %v3120 = vadd.f32 %v2381, %v2832
        %v3121 = vadd.f32 %v2382, %v2833
        %v3122 = vadd.f32 %v2383, %v2834
        %v3123 = vadd.f32 %v2384, %v2835
        %v3124 = vadd.f32 %v2385, %v2836
        %v3125 = vadd.f32 %v2386, %v2837
        %v3126 = vadd.f32 %v2387, %v2838
        %v3127 = vadd.f32 %v2388, %v2839
        %v3128 = vadd.f32 %v2389, %v2840
        %v3129 = vadd.f32 %v2390, %v2841
        %v3130 = vadd.f32 %v2391, %v2842
        %v3131 = vadd.f32 %v2392, %v2843
        %v3132 = vadd.f32 %v2393, %v2844
        %v3133 = vadd.f32 %v2394, %v2845
        %v3134 = vadd.f32 %v2395, %v2846
        %v3135 = vadd.f32 %v2396, %v2847
        %v3136 = vadd.f32 %v2397, %v2848
        %v3137 = vadd.f32 %v2398, %v2849
        %v3138 = vadd.f32 %v2399, %v2850
        %v3139 = vadd.f32 %v2400, %v2851
        %v3140 = vadd.f32 %v2401, %v2852
        %v3141 = vadd.f32 %v2402, %v2853
        %v3142 = vadd.f32 %v2403, %v2854
        %v3143 = vadd.f32 %v2404, %v2855
        %v3144 = vadd.f32 %v2405, %v2856
        %v3145 = vadd.f32 %v2406, %v2857
        %v3146 = vadd.f32 %v2407, %v2858
        %v3147 = vadd.f32 %v2408, %v2859
        %v3148 = vadd.f32 %v2409, %v2860
        %v3149 = vadd.f32 %v2410, %v2861
        %v3150 = vadd.f32 %v2411, %v2862
        %v3151 = vadd.f32 %v2412, %v2863
        %v3152 = vadd.f32 %v2413, %v2864
        %v3153 = vadd.f32 %v2414, %v2865
        %v3154 = vadd.f32 %v2415, %v2866
        %v3155 = vadd.f32 %v2416, %v2867
        %v3156 = vadd.f32 %v2417, %v2868
        %v3157 = vadd.f32 %v2418, %v2869
        %v3158 = vadd.f32 %v2419, %v2870
        %v3159 = vadd.f32 %v2420, %v2871
        %v3160 = vadd.f32 %v2421, %v2872
        %v3161 = vadd.f32 %v2422, %v2873
        %v3162 = vadd.f32 %v2423, %v2874
        %v3163 = vadd.f32 %v2424, %v2875
        %v3164 = vadd.f32 %v2425, %v2876
        %v3165 = vadd.f32 %v2426, %v2877
        %v3166 = vadd.f32 %v2427, %v2878
        %v3167 = vadd.f32 %v2428, %v2879
        %v3168 = vadd.f32 %v2429, %v2880
        %v3169 = vadd.f32 %v2430, %v2881
        %v3170 = vadd.f32 %v2431, %v2882
        %v3171 = vadd.f32 %v2432, %v2883
        %v3172 = vadd.f32 %v2433, %v2884
        %v3173 = vadd.f32 %v2434, %v2885
        %v3174 = vadd.f32 %v2435, %v2886
        %v3175 = vadd.f32 %v2436, %v2887
        %v3176 = vadd.f32 %v2437, %v2888
        %v3177 = vadd.f32 %v2438, %v2889
        %v3178 = vadd.f32 %v2439, %v2890
        %v3179 = vadd.f32 %v2440, %v2891
        %v3180 = vadd.f32 %v2441, %v2892
        %v3181 = vadd.f32 %v2442, %v2893
        %v3182 = vadd.f32 %v2443, %v2894
        %v3183 = vadd.f32 %v2444, %v2895
        %v3184 = vadd.f32 %v2445, %v2896
        %v3185 = vadd.f32 %v2446, %v2897
        %v3186 = vadd.f32 %v2447, %v2898
        %v3187 = vadd.f32 %v2448, %v2899
        %v3188 = vadd.f32 %v2449, %v2900
        %v3189 = vadd.f32 %v2450, %v2901
        %v3190 = vadd.f32 %v2451, %v2902
        %v3191 = vadd.f32 %v2452, %v2903
        %v3192 = vadd.f32 %v2453, %v2904
        %v3193 = vadd.f32 %v2454, %v2905
        %v3194 = vadd.f32 %v2455, %v2906
        %v3195 = vadd.f32 %v2456, %v2907
        %v3196 = vadd.f32 %v2457, %v2908
        %v3197 = vadd.f32 %v2458, %v2909
        %v3198 = vadd.f32 %v2459, %v2910
        %v3199 = vadd.f32 %v2460, %v2911
        %v3200 = vadd.f32 %v2461, %v2912
        %v3201 = vadd.f32 %v2462, %v2913
        %v3202 = vadd.f32 %v2463, %v2914
        %v3203 = vadd.f32 %v2464, %v2915
        %v3204 = vadd.f32 %v2465, %v2916
        %v3205 = vadd.f32 %v2466, %v2917
        %v3206 = vadd.f32 %v2467, %v2918
        %v3207 = vadd.f32 %v2468, %v2919
        %v3208 = vadd.f32 %v2469, %v2920
        %v3209 = vadd.f32 %v2470, %v2921
        %v3210 = vadd.f32 %v2471, %v2922
        %v3211 = vadd.f32 %v2472, %v2923
        %v3212 = vadd.f32 %v2473, %v2924
        %v3213 = vadd.f32 %v2474, %v2925
        %v3214 = vadd.f32 %v2475, %v2926
        %v3215 = vadd.f32 %v2476, %v2927
        %v3216 = vadd.f32 %v2477, %v2928
        %v3217 = vadd.f32 %v2478, %v2929
        %v3218 = vadd.f32 %v2479, %v2930
        %v3219 = vadd.f32 %v2480, %v2931
        %v3220 = vadd.f32 %v2481, %v2932
        %v3221 = vadd.f32 %v2482, %v2933
        %v3222 = vadd.f32 %v2483, %v2934
        %v3223 = vadd.f32 %v2484, %v2935
        %v3224 = vadd.f32 %v2485, %v2936
        %v3225 = vadd.f32 %v2486, %v2937
        %v3226 = vadd.f32 %v2487, %v2938
        %v3227 = vadd.f32 %v2488, %v2939
        %v3228 = vadd.f32 %v2489, %v2940
        %v3229 = vadd.f32 %v2490, %v2941
        %v3230 = vadd.f32 %v2491, %v2942
        %v3231 = vadd.f32 %v2492, %v2943
        %v3232 = vadd.f32 %v2493, %v2944
        %v3233 = vadd.f32 %v2494, %v2945
        %v3234 = vadd.f32 %v2495, %v2946
        %v3235 = vadd.f32 %v2496, %v2947
        %v3236 = vadd.f32 %v2497, %v2948
        %v3237 = vadd.f32 %v2498, %v2949
        %v3238 = vadd.f32 %v2499, %v2950
        %v3239 = vadd.f32 %v2500, %v2951
        %v3240 = vadd.f32 %v2501, %v2952
        %v3241 = vadd.f32 %v2502, %v2953
        %v3242 = vadd.f32 %v2503, %v2954
        %v3243 = vadd.f32 %v2504, %v2955
        %v3244 = vadd.f32 %v2505, %v2956
        %v3245 = vadd.f32 %v2506, %v2957
        %v3246 = vadd.f32 %v2507, %v2958
        %v3247 = vadd.f32 %v2508, %v2959
        %v3248 = vadd.f32 %v2509, %v2960
        %v3249 = vadd.f32 %v2510, %v2961
        %v3250 = vadd.f32 %v2511, %v2962
        %v3251 = vadd.f32 %v2512, %v2963
        %v3252 = vadd.f32 %v2513, %v2964
        %v3253 = vadd.f32 %v2514, %v2965
        %v3254 = vadd.f32 %v2515, %v2966
        %v3255 = vadd.f32 %v2516, %v2967
        %v3256 = vadd.f32 %v2517, %v2968
        %v3257 = vadd.f32 %v2518, %v2969
        %v3258 = vadd.f32 %v2519, %v2970
        %v3259 = vadd.f32 %v2520, %v2971
        %v3260 = vadd.f32 %v2521, %v2972
        %v3261 = vadd.f32 %v2522, %v2973
        %v3262 = vadd.f32 %v2523, %v2974
        %v3263 = vadd.f32 %v2524, %v2975
        %v3264 = vadd.f32 %v2525, %v2976
        %v3265 = vadd.f32 %v2526, %v2977
        %v3266 = vadd.f32 %v2527, %v2978
        %v3267 = vadd.f32 %v2528, %v2979
        %v3268 = vadd.f32 %v2529, %v2980
        %v3269 = vadd.f32 %v2530, %v2981
        %v3270 = vadd.f32 %v2531, %v2982
        %v3271 = vadd.f32 %v2532, %v2983
        %v3272 = vadd.f32 %v2533, %v2984
        %v3273 = vadd.f32 %v2534, %v2985
        %v3274 = vadd.f32 %v2535, %v2986
        %v3275 = vadd.f32 %v2536, %v2987
        %v3276 = vadd.f32 %v2537, %v2988
        %v3277 = vadd.f32 %v2538, %v2989
        %v3278 = vadd.f32 %v2539, %v2990
        %v3279 = vadd.f32 %v2540, %v2991
        %v3280 = vadd.f32 %v2541, %v2992
        %v3281 = vadd.f32 %v2542, %v2993
        %v3282 = vadd.f32 %v2543, %v2994
        %v3283 = vadd.f32 %v2544, %v2995
        %v3284 = vadd.f32 %v2545, %v2996
        %v3285 = vadd.f32 %v2546, %v2997
        %v3286 = vadd.f32 %v2547, %v2998
        %v3287 = vadd.f32 %v2548, %v2999
        %v3288 = vadd.f32 %v2549, %v3000
        %v3289 = vadd.f32 %v2550, %v3001
        %v3290 = vadd.f32 %v2551, %v3002
        %v3291 = vadd.f32 %v2552, %v3003
        %v3292 = vadd.f32 %v2553, %v3004
        %v3293 = vadd.f32 %v2554, %v3005
        %v3294 = vadd.f32 %v2555, %v3006
        %v3295 = vadd.f32 %v2556, %v3007
        %v3296 = vadd.f32 %v2557, %v3008
        %v3297 = vadd.f32 %v2558, %v3009
        %v3298 = vadd.f32 %v2559, %v3010
        %v3299 = vadd.f32 %v2560, %v3011
        %v3300 = vadd.f32 %v2561, %v3012
        %v3301 = vadd.f32 %v2562, %v3013
        %v3302 = vadd.f32 %v2563, %v3014
        %v3303 = vadd.f32 %v2564, %v3015
        %v3304 = vadd.f32 %v2565, %v3016
        %v3305 = vadd.f32 %v2566, %v3017
        %v3306 = vadd.f32 %v2567, %v3018
        %v3307 = vadd.f32 %v2568, %v3019
        %v3308 = vadd.f32 %v2569, %v3020
        %v3309 = vadd.f32 %v2570, %v3021
        %v3310 = vadd.f32 %v2571, %v3022
        %v3311 = vadd.f32 %v2572, %v3023
        %v3312 = vadd.f32 %v2573, %v3024
        %v3313 = vadd.f32 %v2574, %v3025
        %v3314 = vadd.f32 %v2575, %v3026
        %v3315 = vadd.f32 %v2576, %v3027
        %v3316 = vadd.f32 %v2577, %v3028
        %v3317 = vadd.f32 %v2578, %v3029
        %v3318 = vadd.f32 %v2579, %v3030
        %v3319 = vadd.f32 %v2580, %v3031
        %v3320 = vadd.f32 %v2581, %v3032
        %v3321 = vadd.f32 %v2582, %v3033
        %v3322 = vadd.f32 %v2583, %v3034
        %v3323 = vadd.f32 %v2584, %v3035
        %v3324 = vadd.f32 %v2585, %v3036
        %v3325 = vadd.f32 %v2586, %v3037
        %v3326 = vadd.f32 %v2587, %v3038
        %v3327 = vadd.f32 %v2588, %v3039
        %v3328 = vadd.f32 %v2589, %v3040
        %v3329 = vadd.f32 %v2590, %v3041
        %v3330 = vadd.f32 %v2591, %v3042
        %v3331 = vadd.f32 %v2592, %v3043
        %v3332 = vadd.f32 %v2593, %v3044
        %v3333 = vadd.f32 %v2594, %v3045
        %v3334 = vadd.f32 %v2595, %v3046
        %v3335 = vadd.f32 %v2596, %v3047
        %v3336 = vadd.f32 %v2597, %v3048
        %v3337 = vadd.f32 %v2598, %v3049
        %v3338 = vadd.f32 %v2599, %v3050
        %v3339 = vadd.f32 %v2600, %v3051
        %v3340 = vadd.f32 %v2601, %v3052
        %v3341 = vadd.f32 %v2602, %v3053
        %v3342 = vadd.f32 %v2603, %v3054
        %v3343 = vadd.f32 %v2604, %v3055
        %v3344 = vadd.f32 %v2605, %v3056
        %v3345 = vadd.f32 %v2606, %v3057
        %v3346 = vadd.f32 %v2607, %v3058
        %v3347 = vadd.f32 %v2608, %v3059
        %v3348 = vadd.f32 %v2609, %v3060
        %v3349 = vadd.f32 %v2610, %v3061
        %v3350 = vadd.f32 %v2611, %v3062
        %v3351 = vadd.f32 %v2612, %v3063
        %v3352 = vadd.f32 %v2613, %v3064
        %v3353 = vadd.f32 %v2614, %v3065
        %v3354 = vadd.f32 %v2615, %v3066
        %v3355 = vadd.f32 %v2616, %v3067
        %v3356 = vadd.f32 %v2617, %v3068
        %v3357 = vadd.f32 %v2618, %v3069
        %v3358 = vadd.f32 %v2619, %v3070
        %v3359 = vadd.f32 %v2620, %v3071
        %v3360 = vadd.f32 %v2621, %v3072
        %v3361 = vadd.f32 %v2622, %v3073
        %v3362 = vadd.f32 %v2623, %v3074
        %v3363 = vadd.f32 %v2624, %v3075
        %v3364 = vadd.f32 %v2625, %v3076
        %v3365 = vadd.f32 %v2626, %v3077
        %v3366 = vadd.f32 %v2627, %v3078
        %v3367 = vadd.f32 %v2628, %v3079
        %v3368 = vadd.f32 %v2629, %v3080
        %v3369 = vadd.f32 %v2630, %v3081
        %v3370 = vadd.f32 %v2631, %v3082
        %v3371 = vadd.f32 %v2632, %v3083
        %v3372 = vadd.f32 %v2633, %v3084
        %v3373 = vadd.f32 %v2634, %v3085
        %v3374 = vadd.f32 %v2635, %v3086
        %v3375 = vadd.f32 %v2636, %v3087
        %v3376 = vadd.f32 %v2637, %v3088
        %v3377 = vadd.f32 %v2638, %v3089
        %v3378 = vadd.f32 %v2639, %v3090
        %v3379 = vadd.f32 %v2640, %v3091
        %v3380 = vadd.f32 %v2641, %v3092
        %v3381 = vadd.f32 %v2642, %v3093
        %v3382 = vadd.f32 %v2643, %v3094
        %v3383 = vadd.f32 %v2644, %v3095
        %v3384 = vadd.f32 %v2645, %v3096
        %v3385 = vadd.f32 %v2646, %v3097
        %s3386 = scalar_lea.vmem %s3, 2
        %v3387 = vld [vmem:[%s3386] ss:$4 sm:$0xff]
        %s3388 = scalar_lea.vmem %s3, 34
        %v3389 = vld [vmem:[%s3388] ss:$4 sm:$0xff]
        %s3390 = scalar_lea.vmem %s3, 66
        %v3391 = vld [vmem:[%s3390] ss:$4 sm:$0x3]
        %3392 = vset.pattern.permute.xlu0 2
        %3393 = vperm.xlu0 %3392, %v2165
        %v3394 = vpop.permute.xlu0 %3393
        %3396 = vset.pattern.permute.xlu0 2
        %3397 = vperm.xlu0 %3396, %v2166
        %v3398 = vpop.permute.xlu0 %3397
        %3400 = vset.pattern.permute.xlu0 2
        %3401 = vperm.xlu0 %3400, %v2167
        %v3402 = vpop.permute.xlu0 %3401
        %3404 = vset.pattern.permute.xlu0 2
        %3405 = vperm.xlu0 %3404, %v2168
        %v3406 = vpop.permute.xlu0 %3405
        %3408 = vset.pattern.permute.xlu0 2
        %3409 = vperm.xlu0 %3408, %v2169
        %v3410 = vpop.permute.xlu0 %3409
        %3412 = vset.pattern.permute.xlu0 2
        %3413 = vperm.xlu0 %3412, %v2170
        %v3414 = vpop.permute.xlu0 %3413
        %3416 = vset.pattern.permute.xlu0 2
        %3417 = vperm.xlu0 %3416, %v2171
        %v3418 = vpop.permute.xlu0 %3417
        %3420 = vset.pattern.permute.xlu0 2
        %3421 = vperm.xlu0 %3420, %v2172
        %v3422 = vpop.permute.xlu0 %3421
        %3424 = vset.pattern.permute.xlu0 2
        %3425 = vperm.xlu0 %3424, %v2173
        %v3426 = vpop.permute.xlu0 %3425
        %3428 = vset.pattern.permute.xlu0 2
        %3429 = vperm.xlu0 %3428, %v2174
        %v3430 = vpop.permute.xlu0 %3429
        %3432 = vset.pattern.permute.xlu0 2
        %3433 = vperm.xlu0 %3432, %v2175
        %v3434 = vpop.permute.xlu0 %3433
        %3436 = vset.pattern.permute.xlu0 2
        %3437 = vperm.xlu0 %3436, %v2176
        %v3438 = vpop.permute.xlu0 %3437
        %3440 = vset.pattern.permute.xlu0 2
        %3441 = vperm.xlu0 %3440, %v2177
        %v3442 = vpop.permute.xlu0 %3441
        %3444 = vset.pattern.permute.xlu0 2
        %3445 = vperm.xlu0 %3444, %v2178
        %v3446 = vpop.permute.xlu0 %3445
        %3448 = vset.pattern.permute.xlu0 2
        %3449 = vperm.xlu0 %3448, %v2179
        %v3450 = vpop.permute.xlu0 %3449
        %3452 = vset.pattern.permute.xlu0 2
        %3453 = vperm.xlu0 %3452, %v2180
        %v3454 = vpop.permute.xlu0 %3453
        %v3459 = vlaneseq
        %v3460 = vshrl.u32 %v3459, 7
        %v3461 = vsub.s32 0, %v3460
        %v3462 = vrot.slane %v3387, %v3461
        %v3463 = vlaneseq
        %v3464 = vshrl.u32 %v3463, 7
        %v3465 = vsub.s32 1, %v3464
        %v3466 = vrot.slane %v3387, %v3465
        %v3467 = vlaneseq
        %v3468 = vshrl.u32 %v3467, 7
        %v3469 = vsub.s32 2, %v3468
        %v3470 = vrot.slane %v3387, %v3469
        %v3471 = vlaneseq
        %v3472 = vshrl.u32 %v3471, 7
        %v3473 = vsub.s32 3, %v3472
        %v3474 = vrot.slane %v3387, %v3473
        %v3475 = vlaneseq
        %v3476 = vshrl.u32 %v3475, 7
        %v3477 = vsub.s32 4, %v3476
        %v3478 = vrot.slane %v3387, %v3477
        %v3479 = vlaneseq
        %v3480 = vshrl.u32 %v3479, 7
        %v3481 = vsub.s32 5, %v3480
        %v3482 = vrot.slane %v3387, %v3481
        %v3483 = vlaneseq
        %v3484 = vshrl.u32 %v3483, 7
        %v3485 = vsub.s32 6, %v3484
        %v3486 = vrot.slane %v3387, %v3485
        %v3487 = vlaneseq
        %v3488 = vshrl.u32 %v3487, 7
        %v3489 = vsub.s32 7, %v3488
        %v3490 = vrot.slane %v3387, %v3489
        %v3491 = vlaneseq
        %v3492 = vshrl.u32 %v3491, 7
        %v3493 = vsub.s32 0, %v3492
        %v3494 = vrot.slane %v3389, %v3493
        %v3495 = vlaneseq
        %v3496 = vshrl.u32 %v3495, 7
        %v3497 = vsub.s32 1, %v3496
        %v3498 = vrot.slane %v3389, %v3497
        %v3499 = vlaneseq
        %v3500 = vshrl.u32 %v3499, 7
        %v3501 = vsub.s32 2, %v3500
        %v3502 = vrot.slane %v3389, %v3501
        %v3503 = vlaneseq
        %v3504 = vshrl.u32 %v3503, 7
        %v3505 = vsub.s32 3, %v3504
        %v3506 = vrot.slane %v3389, %v3505
        %v3507 = vlaneseq
        %v3508 = vshrl.u32 %v3507, 7
        %v3509 = vsub.s32 4, %v3508
        %v3510 = vrot.slane %v3389, %v3509
        %v3511 = vlaneseq
        %v3512 = vshrl.u32 %v3511, 7
        %v3513 = vsub.s32 5, %v3512
        %v3514 = vrot.slane %v3389, %v3513
        %v3515 = vlaneseq
        %v3516 = vshrl.u32 %v3515, 7
        %v3517 = vsub.s32 6, %v3516
        %v3518 = vrot.slane %v3389, %v3517
        %v3519 = vlaneseq
        %v3520 = vshrl.u32 %v3519, 7
        %v3521 = vsub.s32 7, %v3520
        %v3522 = vrot.slane %v3389, %v3521
        %v3523 = vlaneseq
        %v3524 = vshrl.u32 %v3523, 7
        %v3525 = vsub.s32 0, %v3524
        %v3526 = vrot.slane %v3391, %v3525
        %v3527 = vlaneseq
        %v3528 = vshrl.u32 %v3527, 7
        %v3529 = vsub.s32 1, %v3528
        %v3530 = vrot.slane %v3391, %v3529
        %v3549 = vmul.f32 %v3394, %v3462
        %v3550 = vmul.f32 %v3394, %v3466
        %v3551 = vmul.f32 %v3394, %v3470
        %v3552 = vmul.f32 %v3394, %v3474
        %v3553 = vmul.f32 %v3394, %v3478
        %v3554 = vmul.f32 %v3394, %v3482
        %v3555 = vmul.f32 %v3394, %v3486
        %v3556 = vmul.f32 %v3394, %v3490
        %v3557 = vmul.f32 %v3394, %v3494
        %v3558 = vmul.f32 %v3394, %v3498
        %v3559 = vmul.f32 %v3394, %v3502
        %v3560 = vmul.f32 %v3394, %v3506
        %v3561 = vmul.f32 %v3394, %v3510
        %v3562 = vmul.f32 %v3394, %v3514
        %v3563 = vmul.f32 %v3394, %v3518
        %v3564 = vmul.f32 %v3394, %v3522
        %v3565 = vmul.f32 %v3394, %v3526
        %v3566 = vmul.f32 %v3394, %v3530
        %v3567 = vmul.f32 %v3398, %v3462
        %v3568 = vmul.f32 %v3398, %v3466
        %v3569 = vmul.f32 %v3398, %v3470
        %v3570 = vmul.f32 %v3398, %v3474
        %v3571 = vmul.f32 %v3398, %v3478
        %v3572 = vmul.f32 %v3398, %v3482
        %v3573 = vmul.f32 %v3398, %v3486
        %v3574 = vmul.f32 %v3398, %v3490
        %v3575 = vmul.f32 %v3398, %v3494
        %v3576 = vmul.f32 %v3398, %v3498
        %v3577 = vmul.f32 %v3398, %v3502
        %v3578 = vmul.f32 %v3398, %v3506
        %v3579 = vmul.f32 %v3398, %v3510
        %v3580 = vmul.f32 %v3398, %v3514
        %v3581 = vmul.f32 %v3398, %v3518
        %v3582 = vmul.f32 %v3398, %v3522
        %v3583 = vmul.f32 %v3398, %v3526
        %v3584 = vmul.f32 %v3398, %v3530
        %v3585 = vmul.f32 %v3402, %v3462
        %v3586 = vmul.f32 %v3402, %v3466
        %v3587 = vmul.f32 %v3402, %v3470
        %v3588 = vmul.f32 %v3402, %v3474
        %v3589 = vmul.f32 %v3402, %v3478
        %v3590 = vmul.f32 %v3402, %v3482
        %v3591 = vmul.f32 %v3402, %v3486
        %v3592 = vmul.f32 %v3402, %v3490
        %v3593 = vmul.f32 %v3402, %v3494
        %v3594 = vmul.f32 %v3402, %v3498
        %v3595 = vmul.f32 %v3402, %v3502
        %v3596 = vmul.f32 %v3402, %v3506
        %v3597 = vmul.f32 %v3402, %v3510
        %v3598 = vmul.f32 %v3402, %v3514
        %v3599 = vmul.f32 %v3402, %v3518
        %v3600 = vmul.f32 %v3402, %v3522
        %v3601 = vmul.f32 %v3402, %v3526
        %v3602 = vmul.f32 %v3402, %v3530
        %v3603 = vmul.f32 %v3406, %v3462
        %v3604 = vmul.f32 %v3406, %v3466
        %v3605 = vmul.f32 %v3406, %v3470
        %v3606 = vmul.f32 %v3406, %v3474
        %v3607 = vmul.f32 %v3406, %v3478
        %v3608 = vmul.f32 %v3406, %v3482
        %v3609 = vmul.f32 %v3406, %v3486
        %v3610 = vmul.f32 %v3406, %v3490
        %v3611 = vmul.f32 %v3406, %v3494
        %v3612 = vmul.f32 %v3406, %v3498
        %v3613 = vmul.f32 %v3406, %v3502
        %v3614 = vmul.f32 %v3406, %v3506
        %v3615 = vmul.f32 %v3406, %v3510
        %v3616 = vmul.f32 %v3406, %v3514
        %v3617 = vmul.f32 %v3406, %v3518
        %v3618 = vmul.f32 %v3406, %v3522
        %v3619 = vmul.f32 %v3406, %v3526
        %v3620 = vmul.f32 %v3406, %v3530
        %v3621 = vmul.f32 %v3410, %v3462
        %v3622 = vmul.f32 %v3410, %v3466
        %v3623 = vmul.f32 %v3410, %v3470
        %v3624 = vmul.f32 %v3410, %v3474
        %v3625 = vmul.f32 %v3410, %v3478
        %v3626 = vmul.f32 %v3410, %v3482
        %v3627 = vmul.f32 %v3410, %v3486
        %v3628 = vmul.f32 %v3410, %v3490
        %v3629 = vmul.f32 %v3410, %v3494
        %v3630 = vmul.f32 %v3410, %v3498
        %v3631 = vmul.f32 %v3410, %v3502
        %v3632 = vmul.f32 %v3410, %v3506
        %v3633 = vmul.f32 %v3410, %v3510
        %v3634 = vmul.f32 %v3410, %v3514
        %v3635 = vmul.f32 %v3410, %v3518
        %v3636 = vmul.f32 %v3410, %v3522
        %v3637 = vmul.f32 %v3410, %v3526
        %v3638 = vmul.f32 %v3410, %v3530
        %v3639 = vmul.f32 %v3414, %v3462
        %v3640 = vmul.f32 %v3414, %v3466
        %v3641 = vmul.f32 %v3414, %v3470
        %v3642 = vmul.f32 %v3414, %v3474
        %v3643 = vmul.f32 %v3414, %v3478
        %v3644 = vmul.f32 %v3414, %v3482
        %v3645 = vmul.f32 %v3414, %v3486
        %v3646 = vmul.f32 %v3414, %v3490
        %v3647 = vmul.f32 %v3414, %v3494
        %v3648 = vmul.f32 %v3414, %v3498
        %v3649 = vmul.f32 %v3414, %v3502
        %v3650 = vmul.f32 %v3414, %v3506
        %v3651 = vmul.f32 %v3414, %v3510
        %v3652 = vmul.f32 %v3414, %v3514
        %v3653 = vmul.f32 %v3414, %v3518
        %v3654 = vmul.f32 %v3414, %v3522
        %v3655 = vmul.f32 %v3414, %v3526
        %v3656 = vmul.f32 %v3414, %v3530
        %v3657 = vmul.f32 %v3418, %v3462
        %v3658 = vmul.f32 %v3418, %v3466
        %v3659 = vmul.f32 %v3418, %v3470
        %v3660 = vmul.f32 %v3418, %v3474
        %v3661 = vmul.f32 %v3418, %v3478
        %v3662 = vmul.f32 %v3418, %v3482
        %v3663 = vmul.f32 %v3418, %v3486
        %v3664 = vmul.f32 %v3418, %v3490
        %v3665 = vmul.f32 %v3418, %v3494
        %v3666 = vmul.f32 %v3418, %v3498
        %v3667 = vmul.f32 %v3418, %v3502
        %v3668 = vmul.f32 %v3418, %v3506
        %v3669 = vmul.f32 %v3418, %v3510
        %v3670 = vmul.f32 %v3418, %v3514
        %v3671 = vmul.f32 %v3418, %v3518
        %v3672 = vmul.f32 %v3418, %v3522
        %v3673 = vmul.f32 %v3418, %v3526
        %v3674 = vmul.f32 %v3418, %v3530
        %v3675 = vmul.f32 %v3422, %v3462
        %v3676 = vmul.f32 %v3422, %v3466
        %v3677 = vmul.f32 %v3422, %v3470
        %v3678 = vmul.f32 %v3422, %v3474
        %v3679 = vmul.f32 %v3422, %v3478
        %v3680 = vmul.f32 %v3422, %v3482
        %v3681 = vmul.f32 %v3422, %v3486
        %v3682 = vmul.f32 %v3422, %v3490
        %v3683 = vmul.f32 %v3422, %v3494
        %v3684 = vmul.f32 %v3422, %v3498
        %v3685 = vmul.f32 %v3422, %v3502
        %v3686 = vmul.f32 %v3422, %v3506
        %v3687 = vmul.f32 %v3422, %v3510
        %v3688 = vmul.f32 %v3422, %v3514
        %v3689 = vmul.f32 %v3422, %v3518
        %v3690 = vmul.f32 %v3422, %v3522
        %v3691 = vmul.f32 %v3422, %v3526
        %v3692 = vmul.f32 %v3422, %v3530
        %v3693 = vmul.f32 %v3426, %v3462
        %v3694 = vmul.f32 %v3426, %v3466
        %v3695 = vmul.f32 %v3426, %v3470
        %v3696 = vmul.f32 %v3426, %v3474
        %v3697 = vmul.f32 %v3426, %v3478
        %v3698 = vmul.f32 %v3426, %v3482
        %v3699 = vmul.f32 %v3426, %v3486
        %v3700 = vmul.f32 %v3426, %v3490
        %v3701 = vmul.f32 %v3426, %v3494
        %v3702 = vmul.f32 %v3426, %v3498
        %v3703 = vmul.f32 %v3426, %v3502
        %v3704 = vmul.f32 %v3426, %v3506
        %v3705 = vmul.f32 %v3426, %v3510
        %v3706 = vmul.f32 %v3426, %v3514
        %v3707 = vmul.f32 %v3426, %v3518
        %v3708 = vmul.f32 %v3426, %v3522
        %v3709 = vmul.f32 %v3426, %v3526
        %v3710 = vmul.f32 %v3426, %v3530
        %v3711 = vmul.f32 %v3430, %v3462
        %v3712 = vmul.f32 %v3430, %v3466
        %v3713 = vmul.f32 %v3430, %v3470
        %v3714 = vmul.f32 %v3430, %v3474
        %v3715 = vmul.f32 %v3430, %v3478
        %v3716 = vmul.f32 %v3430, %v3482
        %v3717 = vmul.f32 %v3430, %v3486
        %v3718 = vmul.f32 %v3430, %v3490
        %v3719 = vmul.f32 %v3430, %v3494
        %v3720 = vmul.f32 %v3430, %v3498
        %v3721 = vmul.f32 %v3430, %v3502
        %v3722 = vmul.f32 %v3430, %v3506
        %v3723 = vmul.f32 %v3430, %v3510
        %v3724 = vmul.f32 %v3430, %v3514
        %v3725 = vmul.f32 %v3430, %v3518
        %v3726 = vmul.f32 %v3430, %v3522
        %v3727 = vmul.f32 %v3430, %v3526
        %v3728 = vmul.f32 %v3430, %v3530
        %v3729 = vmul.f32 %v3434, %v3462
        %v3730 = vmul.f32 %v3434, %v3466
        %v3731 = vmul.f32 %v3434, %v3470
        %v3732 = vmul.f32 %v3434, %v3474
        %v3733 = vmul.f32 %v3434, %v3478
        %v3734 = vmul.f32 %v3434, %v3482
        %v3735 = vmul.f32 %v3434, %v3486
        %v3736 = vmul.f32 %v3434, %v3490
        %v3737 = vmul.f32 %v3434, %v3494
        %v3738 = vmul.f32 %v3434, %v3498
        %v3739 = vmul.f32 %v3434, %v3502
        %v3740 = vmul.f32 %v3434, %v3506
        %v3741 = vmul.f32 %v3434, %v3510
        %v3742 = vmul.f32 %v3434, %v3514
        %v3743 = vmul.f32 %v3434, %v3518
        %v3744 = vmul.f32 %v3434, %v3522
        %v3745 = vmul.f32 %v3434, %v3526
        %v3746 = vmul.f32 %v3434, %v3530
        %v3747 = vmul.f32 %v3438, %v3462
        %v3748 = vmul.f32 %v3438, %v3466
        %v3749 = vmul.f32 %v3438, %v3470
        %v3750 = vmul.f32 %v3438, %v3474
        %v3751 = vmul.f32 %v3438, %v3478
        %v3752 = vmul.f32 %v3438, %v3482
        %v3753 = vmul.f32 %v3438, %v3486
        %v3754 = vmul.f32 %v3438, %v3490
        %v3755 = vmul.f32 %v3438, %v3494
        %v3756 = vmul.f32 %v3438, %v3498
        %v3757 = vmul.f32 %v3438, %v3502
        %v3758 = vmul.f32 %v3438, %v3506
        %v3759 = vmul.f32 %v3438, %v3510
        %v3760 = vmul.f32 %v3438, %v3514
        %v3761 = vmul.f32 %v3438, %v3518
        %v3762 = vmul.f32 %v3438, %v3522
        %v3763 = vmul.f32 %v3438, %v3526
        %v3764 = vmul.f32 %v3438, %v3530
        %v3765 = vmul.f32 %v3442, %v3462
        %v3766 = vmul.f32 %v3442, %v3466
        %v3767 = vmul.f32 %v3442, %v3470
        %v3768 = vmul.f32 %v3442, %v3474
        %v3769 = vmul.f32 %v3442, %v3478
        %v3770 = vmul.f32 %v3442, %v3482
        %v3771 = vmul.f32 %v3442, %v3486
        %v3772 = vmul.f32 %v3442, %v3490
        %v3773 = vmul.f32 %v3442, %v3494
        %v3774 = vmul.f32 %v3442, %v3498
        %v3775 = vmul.f32 %v3442, %v3502
        %v3776 = vmul.f32 %v3442, %v3506
        %v3777 = vmul.f32 %v3442, %v3510
        %v3778 = vmul.f32 %v3442, %v3514
        %v3779 = vmul.f32 %v3442, %v3518
        %v3780 = vmul.f32 %v3442, %v3522
        %v3781 = vmul.f32 %v3442, %v3526
        %v3782 = vmul.f32 %v3442, %v3530
        %v3783 = vmul.f32 %v3446, %v3462
        %v3784 = vmul.f32 %v3446, %v3466
        %v3785 = vmul.f32 %v3446, %v3470
        %v3786 = vmul.f32 %v3446, %v3474
        %v3787 = vmul.f32 %v3446, %v3478
        %v3788 = vmul.f32 %v3446, %v3482
        %v3789 = vmul.f32 %v3446, %v3486
        %v3790 = vmul.f32 %v3446, %v3490
        %v3791 = vmul.f32 %v3446, %v3494
        %v3792 = vmul.f32 %v3446, %v3498
        %v3793 = vmul.f32 %v3446, %v3502
        %v3794 = vmul.f32 %v3446, %v3506
        %v3795 = vmul.f32 %v3446, %v3510
        %v3796 = vmul.f32 %v3446, %v3514
        %v3797 = vmul.f32 %v3446, %v3518
        %v3798 = vmul.f32 %v3446, %v3522
        %v3799 = vmul.f32 %v3446, %v3526
        %v3800 = vmul.f32 %v3446, %v3530
        %v3801 = vmul.f32 %v3450, %v3462
        %v3802 = vmul.f32 %v3450, %v3466
        %v3803 = vmul.f32 %v3450, %v3470
        %v3804 = vmul.f32 %v3450, %v3474
        %v3805 = vmul.f32 %v3450, %v3478
        %v3806 = vmul.f32 %v3450, %v3482
        %v3807 = vmul.f32 %v3450, %v3486
        %v3808 = vmul.f32 %v3450, %v3490
        %v3809 = vmul.f32 %v3450, %v3494
        %v3810 = vmul.f32 %v3450, %v3498
        %v3811 = vmul.f32 %v3450, %v3502
        %v3812 = vmul.f32 %v3450, %v3506
        %v3813 = vmul.f32 %v3450, %v3510
        %v3814 = vmul.f32 %v3450, %v3514
        %v3815 = vmul.f32 %v3450, %v3518
        %v3816 = vmul.f32 %v3450, %v3522
        %v3817 = vmul.f32 %v3450, %v3526
        %v3818 = vmul.f32 %v3450, %v3530
        %v3819 = vmul.f32 %v3454, %v3462
        %v3820 = vmul.f32 %v3454, %v3466
        %v3821 = vmul.f32 %v3454, %v3470
        %v3822 = vmul.f32 %v3454, %v3474
        %v3823 = vmul.f32 %v3454, %v3478
        %v3824 = vmul.f32 %v3454, %v3482
        %v3825 = vmul.f32 %v3454, %v3486
        %v3826 = vmul.f32 %v3454, %v3490
        %v3827 = vmul.f32 %v3454, %v3494
        %v3828 = vmul.f32 %v3454, %v3498
        %v3829 = vmul.f32 %v3454, %v3502
        %v3830 = vmul.f32 %v3454, %v3506
        %v3831 = vmul.f32 %v3454, %v3510
        %v3832 = vmul.f32 %v3454, %v3514
        %v3833 = vmul.f32 %v3454, %v3518
        %v3834 = vmul.f32 %v3454, %v3522
        %v3835 = vmul.f32 %v3454, %v3526
        %v3836 = vmul.f32 %v3454, %v3530
        %v3837 = vadd.f32 %v3098, %v3549
        %v3838 = vadd.f32 %v3099, %v3550
        %v3839 = vadd.f32 %v3100, %v3551
        %v3840 = vadd.f32 %v3101, %v3552
        %v3841 = vadd.f32 %v3102, %v3553
        %v3842 = vadd.f32 %v3103, %v3554
        %v3843 = vadd.f32 %v3104, %v3555
        %v3844 = vadd.f32 %v3105, %v3556
        %v3845 = vadd.f32 %v3106, %v3557
        %v3846 = vadd.f32 %v3107, %v3558
        %v3847 = vadd.f32 %v3108, %v3559
        %v3848 = vadd.f32 %v3109, %v3560
        %v3849 = vadd.f32 %v3110, %v3561
        %v3850 = vadd.f32 %v3111, %v3562
        %v3851 = vadd.f32 %v3112, %v3563
        %v3852 = vadd.f32 %v3113, %v3564
        %v3853 = vadd.f32 %v3114, %v3565
        %v3854 = vadd.f32 %v3115, %v3566
        %v3855 = vadd.f32 %v3116, %v3567
        %v3856 = vadd.f32 %v3117, %v3568
        %v3857 = vadd.f32 %v3118, %v3569
        %v3858 = vadd.f32 %v3119, %v3570
        %v3859 = vadd.f32 %v3120, %v3571
        %v3860 = vadd.f32 %v3121, %v3572
        %v3861 = vadd.f32 %v3122, %v3573
        %v3862 = vadd.f32 %v3123, %v3574
        %v3863 = vadd.f32 %v3124, %v3575
        %v3864 = vadd.f32 %v3125, %v3576
        %v3865 = vadd.f32 %v3126, %v3577
        %v3866 = vadd.f32 %v3127, %v3578
        %v3867 = vadd.f32 %v3128, %v3579
        %v3868 = vadd.f32 %v3129, %v3580
        %v3869 = vadd.f32 %v3130, %v3581
        %v3870 = vadd.f32 %v3131, %v3582
        %v3871 = vadd.f32 %v3132, %v3583
        %v3872 = vadd.f32 %v3133, %v3584
        %v3873 = vadd.f32 %v3134, %v3585
        %v3874 = vadd.f32 %v3135, %v3586
        %v3875 = vadd.f32 %v3136, %v3587
        %v3876 = vadd.f32 %v3137, %v3588
        %v3877 = vadd.f32 %v3138, %v3589
        %v3878 = vadd.f32 %v3139, %v3590
        %v3879 = vadd.f32 %v3140, %v3591
        %v3880 = vadd.f32 %v3141, %v3592
        %v3881 = vadd.f32 %v3142, %v3593
        %v3882 = vadd.f32 %v3143, %v3594
        %v3883 = vadd.f32 %v3144, %v3595
        %v3884 = vadd.f32 %v3145, %v3596
        %v3885 = vadd.f32 %v3146, %v3597
        %v3886 = vadd.f32 %v3147, %v3598
        %v3887 = vadd.f32 %v3148, %v3599
        %v3888 = vadd.f32 %v3149, %v3600
        %v3889 = vadd.f32 %v3150, %v3601
        %v3890 = vadd.f32 %v3151, %v3602
        %v3891 = vadd.f32 %v3152, %v3603
        %v3892 = vadd.f32 %v3153, %v3604
        %v3893 = vadd.f32 %v3154, %v3605
        %v3894 = vadd.f32 %v3155, %v3606
        %v3895 = vadd.f32 %v3156, %v3607
        %v3896 = vadd.f32 %v3157, %v3608
        %v3897 = vadd.f32 %v3158, %v3609
        %v3898 = vadd.f32 %v3159, %v3610
        %v3899 = vadd.f32 %v3160, %v3611
        %v3900 = vadd.f32 %v3161, %v3612
        %v3901 = vadd.f32 %v3162, %v3613
        %v3902 = vadd.f32 %v3163, %v3614
        %v3903 = vadd.f32 %v3164, %v3615
        %v3904 = vadd.f32 %v3165, %v3616
        %v3905 = vadd.f32 %v3166, %v3617
        %v3906 = vadd.f32 %v3167, %v3618
        %v3907 = vadd.f32 %v3168, %v3619
        %v3908 = vadd.f32 %v3169, %v3620
        %v3909 = vadd.f32 %v3170, %v3621
        %v3910 = vadd.f32 %v3171, %v3622
        %v3911 = vadd.f32 %v3172, %v3623
        %v3912 = vadd.f32 %v3173, %v3624
        %v3913 = vadd.f32 %v3174, %v3625
        %v3914 = vadd.f32 %v3175, %v3626
        %v3915 = vadd.f32 %v3176, %v3627
        %v3916 = vadd.f32 %v3177, %v3628
        %v3917 = vadd.f32 %v3178, %v3629
        %v3918 = vadd.f32 %v3179, %v3630
        %v3919 = vadd.f32 %v3180, %v3631
        %v3920 = vadd.f32 %v3181, %v3632
        %v3921 = vadd.f32 %v3182, %v3633
        %v3922 = vadd.f32 %v3183, %v3634
        %v3923 = vadd.f32 %v3184, %v3635
        %v3924 = vadd.f32 %v3185, %v3636
        %v3925 = vadd.f32 %v3186, %v3637
        %v3926 = vadd.f32 %v3187, %v3638
        %v3927 = vadd.f32 %v3188, %v3639
        %v3928 = vadd.f32 %v3189, %v3640
        %v3929 = vadd.f32 %v3190, %v3641
        %v3930 = vadd.f32 %v3191, %v3642
        %v3931 = vadd.f32 %v3192, %v3643
        %v3932 = vadd.f32 %v3193, %v3644
        %v3933 = vadd.f32 %v3194, %v3645
        %v3934 = vadd.f32 %v3195, %v3646
        %v3935 = vadd.f32 %v3196, %v3647
        %v3936 = vadd.f32 %v3197, %v3648
        %v3937 = vadd.f32 %v3198, %v3649
        %v3938 = vadd.f32 %v3199, %v3650
        %v3939 = vadd.f32 %v3200, %v3651
        %v3940 = vadd.f32 %v3201, %v3652
        %v3941 = vadd.f32 %v3202, %v3653
        %v3942 = vadd.f32 %v3203, %v3654
        %v3943 = vadd.f32 %v3204, %v3655
        %v3944 = vadd.f32 %v3205, %v3656
        %v3945 = vadd.f32 %v3206, %v3657
        %v3946 = vadd.f32 %v3207, %v3658
        %v3947 = vadd.f32 %v3208, %v3659
        %v3948 = vadd.f32 %v3209, %v3660
        %v3949 = vadd.f32 %v3210, %v3661
        %v3950 = vadd.f32 %v3211, %v3662
        %v3951 = vadd.f32 %v3212, %v3663
        %v3952 = vadd.f32 %v3213, %v3664
        %v3953 = vadd.f32 %v3214, %v3665
        %v3954 = vadd.f32 %v3215, %v3666
        %v3955 = vadd.f32 %v3216, %v3667
        %v3956 = vadd.f32 %v3217, %v3668
        %v3957 = vadd.f32 %v3218, %v3669
        %v3958 = vadd.f32 %v3219, %v3670
        %v3959 = vadd.f32 %v3220, %v3671
        %v3960 = vadd.f32 %v3221, %v3672
        %v3961 = vadd.f32 %v3222, %v3673
        %v3962 = vadd.f32 %v3223, %v3674
        %v3963 = vadd.f32 %v3224, %v3675
        %v3964 = vadd.f32 %v3225, %v3676
        %v3965 = vadd.f32 %v3226, %v3677
        %v3966 = vadd.f32 %v3227, %v3678
        %v3967 = vadd.f32 %v3228, %v3679
        %v3968 = vadd.f32 %v3229, %v3680
        %v3969 = vadd.f32 %v3230, %v3681
        %v3970 = vadd.f32 %v3231, %v3682
        %v3971 = vadd.f32 %v3232, %v3683
        %v3972 = vadd.f32 %v3233, %v3684
        %v3973 = vadd.f32 %v3234, %v3685
        %v3974 = vadd.f32 %v3235, %v3686
        %v3975 = vadd.f32 %v3236, %v3687
        %v3976 = vadd.f32 %v3237, %v3688
        %v3977 = vadd.f32 %v3238, %v3689
        %v3978 = vadd.f32 %v3239, %v3690
        %v3979 = vadd.f32 %v3240, %v3691
        %v3980 = vadd.f32 %v3241, %v3692
        %v3981 = vadd.f32 %v3242, %v3693
        %v3982 = vadd.f32 %v3243, %v3694
        %v3983 = vadd.f32 %v3244, %v3695
        %v3984 = vadd.f32 %v3245, %v3696
        %v3985 = vadd.f32 %v3246, %v3697
        %v3986 = vadd.f32 %v3247, %v3698
        %v3987 = vadd.f32 %v3248, %v3699
        %v3988 = vadd.f32 %v3249, %v3700
        %v3989 = vadd.f32 %v3250, %v3701
        %v3990 = vadd.f32 %v3251, %v3702
        %v3991 = vadd.f32 %v3252, %v3703
        %v3992 = vadd.f32 %v3253, %v3704
        %v3993 = vadd.f32 %v3254, %v3705
        %v3994 = vadd.f32 %v3255, %v3706
        %v3995 = vadd.f32 %v3256, %v3707
        %v3996 = vadd.f32 %v3257, %v3708
        %v3997 = vadd.f32 %v3258, %v3709
        %v3998 = vadd.f32 %v3259, %v3710
        %v3999 = vadd.f32 %v3260, %v3711
        %v4000 = vadd.f32 %v3261, %v3712
        %v4001 = vadd.f32 %v3262, %v3713
        %v4002 = vadd.f32 %v3263, %v3714
        %v4003 = vadd.f32 %v3264, %v3715
        %v4004 = vadd.f32 %v3265, %v3716
        %v4005 = vadd.f32 %v3266, %v3717
        %v4006 = vadd.f32 %v3267, %v3718
        %v4007 = vadd.f32 %v3268, %v3719
        %v4008 = vadd.f32 %v3269, %v3720
        %v4009 = vadd.f32 %v3270, %v3721
        %v4010 = vadd.f32 %v3271, %v3722
        %v4011 = vadd.f32 %v3272, %v3723
        %v4012 = vadd.f32 %v3273, %v3724
        %v4013 = vadd.f32 %v3274, %v3725
        %v4014 = vadd.f32 %v3275, %v3726
        %v4015 = vadd.f32 %v3276, %v3727
        %v4016 = vadd.f32 %v3277, %v3728
        %v4017 = vadd.f32 %v3278, %v3729
        %v4018 = vadd.f32 %v3279, %v3730
        %v4019 = vadd.f32 %v3280, %v3731
        %v4020 = vadd.f32 %v3281, %v3732
        %v4021 = vadd.f32 %v3282, %v3733
        %v4022 = vadd.f32 %v3283, %v3734
        %v4023 = vadd.f32 %v3284, %v3735
        %v4024 = vadd.f32 %v3285, %v3736
        %v4025 = vadd.f32 %v3286, %v3737
        %v4026 = vadd.f32 %v3287, %v3738
        %v4027 = vadd.f32 %v3288, %v3739
        %v4028 = vadd.f32 %v3289, %v3740
        %v4029 = vadd.f32 %v3290, %v3741
        %v4030 = vadd.f32 %v3291, %v3742
        %v4031 = vadd.f32 %v3292, %v3743
        %v4032 = vadd.f32 %v3293, %v3744
        %v4033 = vadd.f32 %v3294, %v3745
        %v4034 = vadd.f32 %v3295, %v3746
        %v4035 = vadd.f32 %v3296, %v3747
        %v4036 = vadd.f32 %v3297, %v3748
        %v4037 = vadd.f32 %v3298, %v3749
        %v4038 = vadd.f32 %v3299, %v3750
        %v4039 = vadd.f32 %v3300, %v3751
        %v4040 = vadd.f32 %v3301, %v3752
        %v4041 = vadd.f32 %v3302, %v3753
        %v4042 = vadd.f32 %v3303, %v3754
        %v4043 = vadd.f32 %v3304, %v3755
        %v4044 = vadd.f32 %v3305, %v3756
        %v4045 = vadd.f32 %v3306, %v3757
        %v4046 = vadd.f32 %v3307, %v3758
        %v4047 = vadd.f32 %v3308, %v3759
        %v4048 = vadd.f32 %v3309, %v3760
        %v4049 = vadd.f32 %v3310, %v3761
        %v4050 = vadd.f32 %v3311, %v3762
        %v4051 = vadd.f32 %v3312, %v3763
        %v4052 = vadd.f32 %v3313, %v3764
        %v4053 = vadd.f32 %v3314, %v3765
        %v4054 = vadd.f32 %v3315, %v3766
        %v4055 = vadd.f32 %v3316, %v3767
        %v4056 = vadd.f32 %v3317, %v3768
        %v4057 = vadd.f32 %v3318, %v3769
        %v4058 = vadd.f32 %v3319, %v3770
        %v4059 = vadd.f32 %v3320, %v3771
        %v4060 = vadd.f32 %v3321, %v3772
        %v4061 = vadd.f32 %v3322, %v3773
        %v4062 = vadd.f32 %v3323, %v3774
        %v4063 = vadd.f32 %v3324, %v3775
        %v4064 = vadd.f32 %v3325, %v3776
        %v4065 = vadd.f32 %v3326, %v3777
        %v4066 = vadd.f32 %v3327, %v3778
        %v4067 = vadd.f32 %v3328, %v3779
        %v4068 = vadd.f32 %v3329, %v3780
        %v4069 = vadd.f32 %v3330, %v3781
        %v4070 = vadd.f32 %v3331, %v3782
        %v4071 = vadd.f32 %v3332, %v3783
        %v4072 = vadd.f32 %v3333, %v3784
        %v4073 = vadd.f32 %v3334, %v3785
        %v4074 = vadd.f32 %v3335, %v3786
        %v4075 = vadd.f32 %v3336, %v3787
        %v4076 = vadd.f32 %v3337, %v3788
        %v4077 = vadd.f32 %v3338, %v3789
        %v4078 = vadd.f32 %v3339, %v3790
        %v4079 = vadd.f32 %v3340, %v3791
        %v4080 = vadd.f32 %v3341, %v3792
        %v4081 = vadd.f32 %v3342, %v3793
        %v4082 = vadd.f32 %v3343, %v3794
        %v4083 = vadd.f32 %v3344, %v3795
        %v4084 = vadd.f32 %v3345, %v3796
        %v4085 = vadd.f32 %v3346, %v3797
        %v4086 = vadd.f32 %v3347, %v3798
        %v4087 = vadd.f32 %v3348, %v3799
        %v4088 = vadd.f32 %v3349, %v3800
        %v4089 = vadd.f32 %v3350, %v3801
        %v4090 = vadd.f32 %v3351, %v3802
        %v4091 = vadd.f32 %v3352, %v3803
        %v4092 = vadd.f32 %v3353, %v3804
        %v4093 = vadd.f32 %v3354, %v3805
        %v4094 = vadd.f32 %v3355, %v3806
        %v4095 = vadd.f32 %v3356, %v3807
        %v4096 = vadd.f32 %v3357, %v3808
        %v4097 = vadd.f32 %v3358, %v3809
        %v4098 = vadd.f32 %v3359, %v3810
        %v4099 = vadd.f32 %v3360, %v3811
        %v4100 = vadd.f32 %v3361, %v3812
        %v4101 = vadd.f32 %v3362, %v3813
        %v4102 = vadd.f32 %v3363, %v3814
        %v4103 = vadd.f32 %v3364, %v3815
        %v4104 = vadd.f32 %v3365, %v3816
        %v4105 = vadd.f32 %v3366, %v3817
        %v4106 = vadd.f32 %v3367, %v3818
        %v4107 = vadd.f32 %v3368, %v3819
        %v4108 = vadd.f32 %v3369, %v3820
        %v4109 = vadd.f32 %v3370, %v3821
        %v4110 = vadd.f32 %v3371, %v3822
        %v4111 = vadd.f32 %v3372, %v3823
        %v4112 = vadd.f32 %v3373, %v3824
        %v4113 = vadd.f32 %v3374, %v3825
        %v4114 = vadd.f32 %v3375, %v3826
        %v4115 = vadd.f32 %v3376, %v3827
        %v4116 = vadd.f32 %v3377, %v3828
        %v4117 = vadd.f32 %v3378, %v3829
        %v4118 = vadd.f32 %v3379, %v3830
        %v4119 = vadd.f32 %v3380, %v3831
        %v4120 = vadd.f32 %v3381, %v3832
        %v4121 = vadd.f32 %v3382, %v3833
        %v4122 = vadd.f32 %v3383, %v3834
        %v4123 = vadd.f32 %v3384, %v3835
        %v4124 = vadd.f32 %v3385, %v3836
        %v4125 = vld [vmem:[%s4] sm:$0xff]
        %v4126 = vld [vmem:[%s4 + $0x8] sm:$0xff]
        %v4127 = vld [vmem:[%s4 + $0x10] sm:$0x3]
        %v4131 = vlaneseq
        %v4132 = vshrl.u32 %v4131, 7
        %v4133 = vsub.s32 0, %v4132
        %v4134 = vrot.slane %v4125, %v4133
        %v4135 = vlaneseq
        %v4136 = vshrl.u32 %v4135, 7
        %v4137 = vsub.s32 1, %v4136
        %v4138 = vrot.slane %v4125, %v4137
        %v4139 = vlaneseq
        %v4140 = vshrl.u32 %v4139, 7
        %v4141 = vsub.s32 2, %v4140
        %v4142 = vrot.slane %v4125, %v4141
        %v4143 = vlaneseq
        %v4144 = vshrl.u32 %v4143, 7
        %v4145 = vsub.s32 3, %v4144
        %v4146 = vrot.slane %v4125, %v4145
        %v4147 = vlaneseq
        %v4148 = vshrl.u32 %v4147, 7
        %v4149 = vsub.s32 4, %v4148
        %v4150 = vrot.slane %v4125, %v4149
        %v4151 = vlaneseq
        %v4152 = vshrl.u32 %v4151, 7
        %v4153 = vsub.s32 5, %v4152
        %v4154 = vrot.slane %v4125, %v4153
        %v4155 = vlaneseq
        %v4156 = vshrl.u32 %v4155, 7
        %v4157 = vsub.s32 6, %v4156
        %v4158 = vrot.slane %v4125, %v4157
        %v4159 = vlaneseq
        %v4160 = vshrl.u32 %v4159, 7
        %v4161 = vsub.s32 7, %v4160
        %v4162 = vrot.slane %v4125, %v4161
        %v4163 = vlaneseq
        %v4164 = vshrl.u32 %v4163, 7
        %v4165 = vsub.s32 0, %v4164
        %v4166 = vrot.slane %v4126, %v4165
        %v4167 = vlaneseq
        %v4168 = vshrl.u32 %v4167, 7
        %v4169 = vsub.s32 1, %v4168
        %v4170 = vrot.slane %v4126, %v4169
        %v4171 = vlaneseq
        %v4172 = vshrl.u32 %v4171, 7
        %v4173 = vsub.s32 2, %v4172
        %v4174 = vrot.slane %v4126, %v4173
        %v4175 = vlaneseq
        %v4176 = vshrl.u32 %v4175, 7
        %v4177 = vsub.s32 3, %v4176
        %v4178 = vrot.slane %v4126, %v4177
        %v4179 = vlaneseq
        %v4180 = vshrl.u32 %v4179, 7
        %v4181 = vsub.s32 4, %v4180
        %v4182 = vrot.slane %v4126, %v4181
        %v4183 = vlaneseq
        %v4184 = vshrl.u32 %v4183, 7
        %v4185 = vsub.s32 5, %v4184
        %v4186 = vrot.slane %v4126, %v4185
        %v4187 = vlaneseq
        %v4188 = vshrl.u32 %v4187, 7
        %v4189 = vsub.s32 6, %v4188
        %v4190 = vrot.slane %v4126, %v4189
        %v4191 = vlaneseq
        %v4192 = vshrl.u32 %v4191, 7
        %v4193 = vsub.s32 7, %v4192
        %v4194 = vrot.slane %v4126, %v4193
        %v4195 = vlaneseq
        %v4196 = vshrl.u32 %v4195, 7
        %v4197 = vsub.s32 0, %v4196
        %v4198 = vrot.slane %v4127, %v4197
        %v4199 = vlaneseq
        %v4200 = vshrl.u32 %v4199, 7
        %v4201 = vsub.s32 1, %v4200
        %v4202 = vrot.slane %v4127, %v4201
        %v4221 = vadd.f32 %v3837, %v4134
        %v4222 = vadd.f32 %v3838, %v4138
        %v4223 = vadd.f32 %v3839, %v4142
        %v4224 = vadd.f32 %v3840, %v4146
        %v4225 = vadd.f32 %v3841, %v4150
        %v4226 = vadd.f32 %v3842, %v4154
        %v4227 = vadd.f32 %v3843, %v4158
        %v4228 = vadd.f32 %v3844, %v4162
        %v4229 = vadd.f32 %v3845, %v4166
        %v4230 = vadd.f32 %v3846, %v4170
        %v4231 = vadd.f32 %v3847, %v4174
        %v4232 = vadd.f32 %v3848, %v4178
        %v4233 = vadd.f32 %v3849, %v4182
        %v4234 = vadd.f32 %v3850, %v4186
        %v4235 = vadd.f32 %v3851, %v4190
        %v4236 = vadd.f32 %v3852, %v4194
        %v4237 = vadd.f32 %v3853, %v4198
        %v4238 = vadd.f32 %v3854, %v4202
        %v4239 = vadd.f32 %v3855, %v4134
        %v4240 = vadd.f32 %v3856, %v4138
        %v4241 = vadd.f32 %v3857, %v4142
        %v4242 = vadd.f32 %v3858, %v4146
        %v4243 = vadd.f32 %v3859, %v4150
        %v4244 = vadd.f32 %v3860, %v4154
        %v4245 = vadd.f32 %v3861, %v4158
        %v4246 = vadd.f32 %v3862, %v4162
        %v4247 = vadd.f32 %v3863, %v4166
        %v4248 = vadd.f32 %v3864, %v4170
        %v4249 = vadd.f32 %v3865, %v4174
        %v4250 = vadd.f32 %v3866, %v4178
        %v4251 = vadd.f32 %v3867, %v4182
        %v4252 = vadd.f32 %v3868, %v4186
        %v4253 = vadd.f32 %v3869, %v4190
        %v4254 = vadd.f32 %v3870, %v4194
        %v4255 = vadd.f32 %v3871, %v4198
        %v4256 = vadd.f32 %v3872, %v4202
        %v4257 = vadd.f32 %v3873, %v4134
        %v4258 = vadd.f32 %v3874, %v4138
        %v4259 = vadd.f32 %v3875, %v4142
        %v4260 = vadd.f32 %v3876, %v4146
        %v4261 = vadd.f32 %v3877, %v4150
        %v4262 = vadd.f32 %v3878, %v4154
        %v4263 = vadd.f32 %v3879, %v4158
        %v4264 = vadd.f32 %v3880, %v4162
        %v4265 = vadd.f32 %v3881, %v4166
        %v4266 = vadd.f32 %v3882, %v4170
        %v4267 = vadd.f32 %v3883, %v4174
        %v4268 = vadd.f32 %v3884, %v4178
        %v4269 = vadd.f32 %v3885, %v4182
        %v4270 = vadd.f32 %v3886, %v4186
        %v4271 = vadd.f32 %v3887, %v4190
        %v4272 = vadd.f32 %v3888, %v4194
        %v4273 = vadd.f32 %v3889, %v4198
        %v4274 = vadd.f32 %v3890, %v4202
        %v4275 = vadd.f32 %v3891, %v4134
        %v4276 = vadd.f32 %v3892, %v4138
        %v4277 = vadd.f32 %v3893, %v4142
        %v4278 = vadd.f32 %v3894, %v4146
        %v4279 = vadd.f32 %v3895, %v4150
        %v4280 = vadd.f32 %v3896, %v4154
        %v4281 = vadd.f32 %v3897, %v4158
        %v4282 = vadd.f32 %v3898, %v4162
        %v4283 = vadd.f32 %v3899, %v4166
        %v4284 = vadd.f32 %v3900, %v4170
        %v4285 = vadd.f32 %v3901, %v4174
        %v4286 = vadd.f32 %v3902, %v4178
        %v4287 = vadd.f32 %v3903, %v4182
        %v4288 = vadd.f32 %v3904, %v4186
        %v4289 = vadd.f32 %v3905, %v4190
        %v4290 = vadd.f32 %v3906, %v4194
        %v4291 = vadd.f32 %v3907, %v4198
        %v4292 = vadd.f32 %v3908, %v4202
        %v4293 = vadd.f32 %v3909, %v4134
        %v4294 = vadd.f32 %v3910, %v4138
        %v4295 = vadd.f32 %v3911, %v4142
        %v4296 = vadd.f32 %v3912, %v4146
        %v4297 = vadd.f32 %v3913, %v4150
        %v4298 = vadd.f32 %v3914, %v4154
        %v4299 = vadd.f32 %v3915, %v4158
        %v4300 = vadd.f32 %v3916, %v4162
        %v4301 = vadd.f32 %v3917, %v4166
        %v4302 = vadd.f32 %v3918, %v4170
        %v4303 = vadd.f32 %v3919, %v4174
        %v4304 = vadd.f32 %v3920, %v4178
        %v4305 = vadd.f32 %v3921, %v4182
        %v4306 = vadd.f32 %v3922, %v4186
        %v4307 = vadd.f32 %v3923, %v4190
        %v4308 = vadd.f32 %v3924, %v4194
        %v4309 = vadd.f32 %v3925, %v4198
        %v4310 = vadd.f32 %v3926, %v4202
        %v4311 = vadd.f32 %v3927, %v4134
        %v4312 = vadd.f32 %v3928, %v4138
        %v4313 = vadd.f32 %v3929, %v4142
        %v4314 = vadd.f32 %v3930, %v4146
        %v4315 = vadd.f32 %v3931, %v4150
        %v4316 = vadd.f32 %v3932, %v4154
        %v4317 = vadd.f32 %v3933, %v4158
        %v4318 = vadd.f32 %v3934, %v4162
        %v4319 = vadd.f32 %v3935, %v4166
        %v4320 = vadd.f32 %v3936, %v4170
        %v4321 = vadd.f32 %v3937, %v4174
        %v4322 = vadd.f32 %v3938, %v4178
        %v4323 = vadd.f32 %v3939, %v4182
        %v4324 = vadd.f32 %v3940, %v4186
        %v4325 = vadd.f32 %v3941, %v4190
        %v4326 = vadd.f32 %v3942, %v4194
        %v4327 = vadd.f32 %v3943, %v4198
        %v4328 = vadd.f32 %v3944, %v4202
        %v4329 = vadd.f32 %v3945, %v4134
        %v4330 = vadd.f32 %v3946, %v4138
        %v4331 = vadd.f32 %v3947, %v4142
        %v4332 = vadd.f32 %v3948, %v4146
        %v4333 = vadd.f32 %v3949, %v4150
        %v4334 = vadd.f32 %v3950, %v4154
        %v4335 = vadd.f32 %v3951, %v4158
        %v4336 = vadd.f32 %v3952, %v4162
        %v4337 = vadd.f32 %v3953, %v4166
        %v4338 = vadd.f32 %v3954, %v4170
        %v4339 = vadd.f32 %v3955, %v4174
        %v4340 = vadd.f32 %v3956, %v4178
        %v4341 = vadd.f32 %v3957, %v4182
        %v4342 = vadd.f32 %v3958, %v4186
        %v4343 = vadd.f32 %v3959, %v4190
        %v4344 = vadd.f32 %v3960, %v4194
        %v4345 = vadd.f32 %v3961, %v4198
        %v4346 = vadd.f32 %v3962, %v4202
        %v4347 = vadd.f32 %v3963, %v4134
        %v4348 = vadd.f32 %v3964, %v4138
        %v4349 = vadd.f32 %v3965, %v4142
        %v4350 = vadd.f32 %v3966, %v4146
        %v4351 = vadd.f32 %v3967, %v4150
        %v4352 = vadd.f32 %v3968, %v4154
        %v4353 = vadd.f32 %v3969, %v4158
        %v4354 = vadd.f32 %v3970, %v4162
        %v4355 = vadd.f32 %v3971, %v4166
        %v4356 = vadd.f32 %v3972, %v4170
        %v4357 = vadd.f32 %v3973, %v4174
        %v4358 = vadd.f32 %v3974, %v4178
        %v4359 = vadd.f32 %v3975, %v4182
        %v4360 = vadd.f32 %v3976, %v4186
        %v4361 = vadd.f32 %v3977, %v4190
        %v4362 = vadd.f32 %v3978, %v4194
        %v4363 = vadd.f32 %v3979, %v4198
        %v4364 = vadd.f32 %v3980, %v4202
        %v4365 = vadd.f32 %v3981, %v4134
        %v4366 = vadd.f32 %v3982, %v4138
        %v4367 = vadd.f32 %v3983, %v4142
        %v4368 = vadd.f32 %v3984, %v4146
        %v4369 = vadd.f32 %v3985, %v4150
        %v4370 = vadd.f32 %v3986, %v4154
        %v4371 = vadd.f32 %v3987, %v4158
        %v4372 = vadd.f32 %v3988, %v4162
        %v4373 = vadd.f32 %v3989, %v4166
        %v4374 = vadd.f32 %v3990, %v4170
        %v4375 = vadd.f32 %v3991, %v4174
        %v4376 = vadd.f32 %v3992, %v4178
        %v4377 = vadd.f32 %v3993, %v4182
        %v4378 = vadd.f32 %v3994, %v4186
        %v4379 = vadd.f32 %v3995, %v4190
        %v4380 = vadd.f32 %v3996, %v4194
        %v4381 = vadd.f32 %v3997, %v4198
        %v4382 = vadd.f32 %v3998, %v4202
        %v4383 = vadd.f32 %v3999, %v4134
        %v4384 = vadd.f32 %v4000, %v4138
        %v4385 = vadd.f32 %v4001, %v4142
        %v4386 = vadd.f32 %v4002, %v4146
        %v4387 = vadd.f32 %v4003, %v4150
        %v4388 = vadd.f32 %v4004, %v4154
        %v4389 = vadd.f32 %v4005, %v4158
        %v4390 = vadd.f32 %v4006, %v4162
        %v4391 = vadd.f32 %v4007, %v4166
        %v4392 = vadd.f32 %v4008, %v4170
        %v4393 = vadd.f32 %v4009, %v4174
        %v4394 = vadd.f32 %v4010, %v4178
        %v4395 = vadd.f32 %v4011, %v4182
        %v4396 = vadd.f32 %v4012, %v4186
        %v4397 = vadd.f32 %v4013, %v4190
        %v4398 = vadd.f32 %v4014, %v4194
        %v4399 = vadd.f32 %v4015, %v4198
        %v4400 = vadd.f32 %v4016, %v4202
        %v4401 = vadd.f32 %v4017, %v4134
        %v4402 = vadd.f32 %v4018, %v4138
        %v4403 = vadd.f32 %v4019, %v4142
        %v4404 = vadd.f32 %v4020, %v4146
        %v4405 = vadd.f32 %v4021, %v4150
        %v4406 = vadd.f32 %v4022, %v4154
        %v4407 = vadd.f32 %v4023, %v4158
        %v4408 = vadd.f32 %v4024, %v4162
        %v4409 = vadd.f32 %v4025, %v4166
        %v4410 = vadd.f32 %v4026, %v4170
        %v4411 = vadd.f32 %v4027, %v4174
        %v4412 = vadd.f32 %v4028, %v4178
        %v4413 = vadd.f32 %v4029, %v4182
        %v4414 = vadd.f32 %v4030, %v4186
        %v4415 = vadd.f32 %v4031, %v4190
        %v4416 = vadd.f32 %v4032, %v4194
        %v4417 = vadd.f32 %v4033, %v4198
        %v4418 = vadd.f32 %v4034, %v4202
        %v4419 = vadd.f32 %v4035, %v4134
        %v4420 = vadd.f32 %v4036, %v4138
        %v4421 = vadd.f32 %v4037, %v4142
        %v4422 = vadd.f32 %v4038, %v4146
        %v4423 = vadd.f32 %v4039, %v4150
        %v4424 = vadd.f32 %v4040, %v4154
        %v4425 = vadd.f32 %v4041, %v4158
        %v4426 = vadd.f32 %v4042, %v4162
        %v4427 = vadd.f32 %v4043, %v4166
        %v4428 = vadd.f32 %v4044, %v4170
        %v4429 = vadd.f32 %v4045, %v4174
        %v4430 = vadd.f32 %v4046, %v4178
        %v4431 = vadd.f32 %v4047, %v4182
        %v4432 = vadd.f32 %v4048, %v4186
        %v4433 = vadd.f32 %v4049, %v4190
        %v4434 = vadd.f32 %v4050, %v4194
        %v4435 = vadd.f32 %v4051, %v4198
        %v4436 = vadd.f32 %v4052, %v4202
        %v4437 = vadd.f32 %v4053, %v4134
        %v4438 = vadd.f32 %v4054, %v4138
        %v4439 = vadd.f32 %v4055, %v4142
        %v4440 = vadd.f32 %v4056, %v4146
        %v4441 = vadd.f32 %v4057, %v4150
        %v4442 = vadd.f32 %v4058, %v4154
        %v4443 = vadd.f32 %v4059, %v4158
        %v4444 = vadd.f32 %v4060, %v4162
        %v4445 = vadd.f32 %v4061, %v4166
        %v4446 = vadd.f32 %v4062, %v4170
        %v4447 = vadd.f32 %v4063, %v4174
        %v4448 = vadd.f32 %v4064, %v4178
        %v4449 = vadd.f32 %v4065, %v4182
        %v4450 = vadd.f32 %v4066, %v4186
        %v4451 = vadd.f32 %v4067, %v4190
        %v4452 = vadd.f32 %v4068, %v4194
        %v4453 = vadd.f32 %v4069, %v4198
        %v4454 = vadd.f32 %v4070, %v4202
        %v4455 = vadd.f32 %v4071, %v4134
        %v4456 = vadd.f32 %v4072, %v4138
        %v4457 = vadd.f32 %v4073, %v4142
        %v4458 = vadd.f32 %v4074, %v4146
        %v4459 = vadd.f32 %v4075, %v4150
        %v4460 = vadd.f32 %v4076, %v4154
        %v4461 = vadd.f32 %v4077, %v4158
        %v4462 = vadd.f32 %v4078, %v4162
        %v4463 = vadd.f32 %v4079, %v4166
        %v4464 = vadd.f32 %v4080, %v4170
        %v4465 = vadd.f32 %v4081, %v4174
        %v4466 = vadd.f32 %v4082, %v4178
        %v4467 = vadd.f32 %v4083, %v4182
        %v4468 = vadd.f32 %v4084, %v4186
        %v4469 = vadd.f32 %v4085, %v4190
        %v4470 = vadd.f32 %v4086, %v4194
        %v4471 = vadd.f32 %v4087, %v4198
        %v4472 = vadd.f32 %v4088, %v4202
        %v4473 = vadd.f32 %v4089, %v4134
        %v4474 = vadd.f32 %v4090, %v4138
        %v4475 = vadd.f32 %v4091, %v4142
        %v4476 = vadd.f32 %v4092, %v4146
        %v4477 = vadd.f32 %v4093, %v4150
        %v4478 = vadd.f32 %v4094, %v4154
        %v4479 = vadd.f32 %v4095, %v4158
        %v4480 = vadd.f32 %v4096, %v4162
        %v4481 = vadd.f32 %v4097, %v4166
        %v4482 = vadd.f32 %v4098, %v4170
        %v4483 = vadd.f32 %v4099, %v4174
        %v4484 = vadd.f32 %v4100, %v4178
        %v4485 = vadd.f32 %v4101, %v4182
        %v4486 = vadd.f32 %v4102, %v4186
        %v4487 = vadd.f32 %v4103, %v4190
        %v4488 = vadd.f32 %v4104, %v4194
        %v4489 = vadd.f32 %v4105, %v4198
        %v4490 = vadd.f32 %v4106, %v4202
        %v4491 = vadd.f32 %v4107, %v4134
        %v4492 = vadd.f32 %v4108, %v4138
        %v4493 = vadd.f32 %v4109, %v4142
        %v4494 = vadd.f32 %v4110, %v4146
        %v4495 = vadd.f32 %v4111, %v4150
        %v4496 = vadd.f32 %v4112, %v4154
        %v4497 = vadd.f32 %v4113, %v4158
        %v4498 = vadd.f32 %v4114, %v4162
        %v4499 = vadd.f32 %v4115, %v4166
        %v4500 = vadd.f32 %v4116, %v4170
        %v4501 = vadd.f32 %v4117, %v4174
        %v4502 = vadd.f32 %v4118, %v4178
        %v4503 = vadd.f32 %v4119, %v4182
        %v4504 = vadd.f32 %v4120, %v4186
        %v4505 = vadd.f32 %v4121, %v4190
        %v4506 = vadd.f32 %v4122, %v4194
        %v4507 = vadd.f32 %v4123, %v4198
        %v4508 = vadd.f32 %v4124, %v4202
        %v4509 = vmax.f32 %v4221, 0.0
        %v4510 = vmax.f32 %v4222, 0.0
        %v4511 = vmax.f32 %v4223, 0.0
        %v4512 = vmax.f32 %v4224, 0.0
        %v4513 = vmax.f32 %v4225, 0.0
        %v4514 = vmax.f32 %v4226, 0.0
        %v4515 = vmax.f32 %v4227, 0.0
        %v4516 = vmax.f32 %v4228, 0.0
        %v4517 = vmax.f32 %v4229, 0.0
        %v4518 = vmax.f32 %v4230, 0.0
        %v4519 = vmax.f32 %v4231, 0.0
        %v4520 = vmax.f32 %v4232, 0.0
        %v4521 = vmax.f32 %v4233, 0.0
        %v4522 = vmax.f32 %v4234, 0.0
        %v4523 = vmax.f32 %v4235, 0.0
        %v4524 = vmax.f32 %v4236, 0.0
        %v4525 = vmax.f32 %v4237, 0.0
        %v4526 = vmax.f32 %v4238, 0.0
        %v4527 = vmax.f32 %v4239, 0.0
        %v4528 = vmax.f32 %v4240, 0.0
        %v4529 = vmax.f32 %v4241, 0.0
        %v4530 = vmax.f32 %v4242, 0.0
        %v4531 = vmax.f32 %v4243, 0.0
        %v4532 = vmax.f32 %v4244, 0.0
        %v4533 = vmax.f32 %v4245, 0.0
        %v4534 = vmax.f32 %v4246, 0.0
        %v4535 = vmax.f32 %v4247, 0.0
        %v4536 = vmax.f32 %v4248, 0.0
        %v4537 = vmax.f32 %v4249, 0.0
        %v4538 = vmax.f32 %v4250, 0.0
        %v4539 = vmax.f32 %v4251, 0.0
        %v4540 = vmax.f32 %v4252, 0.0
        %v4541 = vmax.f32 %v4253, 0.0
        %v4542 = vmax.f32 %v4254, 0.0
        %v4543 = vmax.f32 %v4255, 0.0
        %v4544 = vmax.f32 %v4256, 0.0
        %v4545 = vmax.f32 %v4257, 0.0
        %v4546 = vmax.f32 %v4258, 0.0
        %v4547 = vmax.f32 %v4259, 0.0
        %v4548 = vmax.f32 %v4260, 0.0
        %v4549 = vmax.f32 %v4261, 0.0
        %v4550 = vmax.f32 %v4262, 0.0
        %v4551 = vmax.f32 %v4263, 0.0
        %v4552 = vmax.f32 %v4264, 0.0
        %v4553 = vmax.f32 %v4265, 0.0
        %v4554 = vmax.f32 %v4266, 0.0
        %v4555 = vmax.f32 %v4267, 0.0
        %v4556 = vmax.f32 %v4268, 0.0
        %v4557 = vmax.f32 %v4269, 0.0
        %v4558 = vmax.f32 %v4270, 0.0
        %v4559 = vmax.f32 %v4271, 0.0
        %v4560 = vmax.f32 %v4272, 0.0
        %v4561 = vmax.f32 %v4273, 0.0
        %v4562 = vmax.f32 %v4274, 0.0
        %v4563 = vmax.f32 %v4275, 0.0
        %v4564 = vmax.f32 %v4276, 0.0
        %v4565 = vmax.f32 %v4277, 0.0
        %v4566 = vmax.f32 %v4278, 0.0
        %v4567 = vmax.f32 %v4279, 0.0
        %v4568 = vmax.f32 %v4280, 0.0
        %v4569 = vmax.f32 %v4281, 0.0
        %v4570 = vmax.f32 %v4282, 0.0
        %v4571 = vmax.f32 %v4283, 0.0
        %v4572 = vmax.f32 %v4284, 0.0
        %v4573 = vmax.f32 %v4285, 0.0
        %v4574 = vmax.f32 %v4286, 0.0
        %v4575 = vmax.f32 %v4287, 0.0
        %v4576 = vmax.f32 %v4288, 0.0
        %v4577 = vmax.f32 %v4289, 0.0
        %v4578 = vmax.f32 %v4290, 0.0
        %v4579 = vmax.f32 %v4291, 0.0
        %v4580 = vmax.f32 %v4292, 0.0
        %v4581 = vmax.f32 %v4293, 0.0
        %v4582 = vmax.f32 %v4294, 0.0
        %v4583 = vmax.f32 %v4295, 0.0
        %v4584 = vmax.f32 %v4296, 0.0
        %v4585 = vmax.f32 %v4297, 0.0
        %v4586 = vmax.f32 %v4298, 0.0
        %v4587 = vmax.f32 %v4299, 0.0
        %v4588 = vmax.f32 %v4300, 0.0
        %v4589 = vmax.f32 %v4301, 0.0
        %v4590 = vmax.f32 %v4302, 0.0
        %v4591 = vmax.f32 %v4303, 0.0
        %v4592 = vmax.f32 %v4304, 0.0
        %v4593 = vmax.f32 %v4305, 0.0
        %v4594 = vmax.f32 %v4306, 0.0
        %v4595 = vmax.f32 %v4307, 0.0
        %v4596 = vmax.f32 %v4308, 0.0
        %v4597 = vmax.f32 %v4309, 0.0
        %v4598 = vmax.f32 %v4310, 0.0
        %v4599 = vmax.f32 %v4311, 0.0
        %v4600 = vmax.f32 %v4312, 0.0
        %v4601 = vmax.f32 %v4313, 0.0
        %v4602 = vmax.f32 %v4314, 0.0
        %v4603 = vmax.f32 %v4315, 0.0
        %v4604 = vmax.f32 %v4316, 0.0
        %v4605 = vmax.f32 %v4317, 0.0
        %v4606 = vmax.f32 %v4318, 0.0
        %v4607 = vmax.f32 %v4319, 0.0
        %v4608 = vmax.f32 %v4320, 0.0
        %v4609 = vmax.f32 %v4321, 0.0
        %v4610 = vmax.f32 %v4322, 0.0
        %v4611 = vmax.f32 %v4323, 0.0
        %v4612 = vmax.f32 %v4324, 0.0
        %v4613 = vmax.f32 %v4325, 0.0
        %v4614 = vmax.f32 %v4326, 0.0
        %v4615 = vmax.f32 %v4327, 0.0
        %v4616 = vmax.f32 %v4328, 0.0
        %v4617 = vmax.f32 %v4329, 0.0
        %v4618 = vmax.f32 %v4330, 0.0
        %v4619 = vmax.f32 %v4331, 0.0
        %v4620 = vmax.f32 %v4332, 0.0
        %v4621 = vmax.f32 %v4333, 0.0
        %v4622 = vmax.f32 %v4334, 0.0
        %v4623 = vmax.f32 %v4335, 0.0
        %v4624 = vmax.f32 %v4336, 0.0
        %v4625 = vmax.f32 %v4337, 0.0
        %v4626 = vmax.f32 %v4338, 0.0
        %v4627 = vmax.f32 %v4339, 0.0
        %v4628 = vmax.f32 %v4340, 0.0
        %v4629 = vmax.f32 %v4341, 0.0
        %v4630 = vmax.f32 %v4342, 0.0
        %v4631 = vmax.f32 %v4343, 0.0
        %v4632 = vmax.f32 %v4344, 0.0
        %v4633 = vmax.f32 %v4345, 0.0
        %v4634 = vmax.f32 %v4346, 0.0
        %v4635 = vmax.f32 %v4347, 0.0
        %v4636 = vmax.f32 %v4348, 0.0
        %v4637 = vmax.f32 %v4349, 0.0
        %v4638 = vmax.f32 %v4350, 0.0
        %v4639 = vmax.f32 %v4351, 0.0
        %v4640 = vmax.f32 %v4352, 0.0
        %v4641 = vmax.f32 %v4353, 0.0
        %v4642 = vmax.f32 %v4354, 0.0
        %v4643 = vmax.f32 %v4355, 0.0
        %v4644 = vmax.f32 %v4356, 0.0
        %v4645 = vmax.f32 %v4357, 0.0
        %v4646 = vmax.f32 %v4358, 0.0
        %v4647 = vmax.f32 %v4359, 0.0
        %v4648 = vmax.f32 %v4360, 0.0
        %v4649 = vmax.f32 %v4361, 0.0
        %v4650 = vmax.f32 %v4362, 0.0
        %v4651 = vmax.f32 %v4363, 0.0
        %v4652 = vmax.f32 %v4364, 0.0
        %v4653 = vmax.f32 %v4365, 0.0
        %v4654 = vmax.f32 %v4366, 0.0
        %v4655 = vmax.f32 %v4367, 0.0
        %v4656 = vmax.f32 %v4368, 0.0
        %v4657 = vmax.f32 %v4369, 0.0
        %v4658 = vmax.f32 %v4370, 0.0
        %v4659 = vmax.f32 %v4371, 0.0
        %v4660 = vmax.f32 %v4372, 0.0
        %v4661 = vmax.f32 %v4373, 0.0
        %v4662 = vmax.f32 %v4374, 0.0
        %v4663 = vmax.f32 %v4375, 0.0
        %v4664 = vmax.f32 %v4376, 0.0
        %v4665 = vmax.f32 %v4377, 0.0
        %v4666 = vmax.f32 %v4378, 0.0
        %v4667 = vmax.f32 %v4379, 0.0
        %v4668 = vmax.f32 %v4380, 0.0
        %v4669 = vmax.f32 %v4381, 0.0
        %v4670 = vmax.f32 %v4382, 0.0
        %v4671 = vmax.f32 %v4383, 0.0
        %v4672 = vmax.f32 %v4384, 0.0
        %v4673 = vmax.f32 %v4385, 0.0
        %v4674 = vmax.f32 %v4386, 0.0
        %v4675 = vmax.f32 %v4387, 0.0
        %v4676 = vmax.f32 %v4388, 0.0
        %v4677 = vmax.f32 %v4389, 0.0
        %v4678 = vmax.f32 %v4390, 0.0
        %v4679 = vmax.f32 %v4391, 0.0
        %v4680 = vmax.f32 %v4392, 0.0
        %v4681 = vmax.f32 %v4393, 0.0
        %v4682 = vmax.f32 %v4394, 0.0
        %v4683 = vmax.f32 %v4395, 0.0
        %v4684 = vmax.f32 %v4396, 0.0
        %v4685 = vmax.f32 %v4397, 0.0
        %v4686 = vmax.f32 %v4398, 0.0
        %v4687 = vmax.f32 %v4399, 0.0
        %v4688 = vmax.f32 %v4400, 0.0
        %v4689 = vmax.f32 %v4401, 0.0
        %v4690 = vmax.f32 %v4402, 0.0
        %v4691 = vmax.f32 %v4403, 0.0
        %v4692 = vmax.f32 %v4404, 0.0
        %v4693 = vmax.f32 %v4405, 0.0
        %v4694 = vmax.f32 %v4406, 0.0
        %v4695 = vmax.f32 %v4407, 0.0
        %v4696 = vmax.f32 %v4408, 0.0
        %v4697 = vmax.f32 %v4409, 0.0
        %v4698 = vmax.f32 %v4410, 0.0
        %v4699 = vmax.f32 %v4411, 0.0
        %v4700 = vmax.f32 %v4412, 0.0
        %v4701 = vmax.f32 %v4413, 0.0
        %v4702 = vmax.f32 %v4414, 0.0
        %v4703 = vmax.f32 %v4415, 0.0
        %v4704 = vmax.f32 %v4416, 0.0
        %v4705 = vmax.f32 %v4417, 0.0
        %v4706 = vmax.f32 %v4418, 0.0
        %v4707 = vmax.f32 %v4419, 0.0
        %v4708 = vmax.f32 %v4420, 0.0
        %v4709 = vmax.f32 %v4421, 0.0
        %v4710 = vmax.f32 %v4422, 0.0
        %v4711 = vmax.f32 %v4423, 0.0
        %v4712 = vmax.f32 %v4424, 0.0
        %v4713 = vmax.f32 %v4425, 0.0
        %v4714 = vmax.f32 %v4426, 0.0
        %v4715 = vmax.f32 %v4427, 0.0
        %v4716 = vmax.f32 %v4428, 0.0
        %v4717 = vmax.f32 %v4429, 0.0
        %v4718 = vmax.f32 %v4430, 0.0
        %v4719 = vmax.f32 %v4431, 0.0
        %v4720 = vmax.f32 %v4432, 0.0
        %v4721 = vmax.f32 %v4433, 0.0
        %v4722 = vmax.f32 %v4434, 0.0
        %v4723 = vmax.f32 %v4435, 0.0
        %v4724 = vmax.f32 %v4436, 0.0
        %v4725 = vmax.f32 %v4437, 0.0
        %v4726 = vmax.f32 %v4438, 0.0
        %v4727 = vmax.f32 %v4439, 0.0
        %v4728 = vmax.f32 %v4440, 0.0
        %v4729 = vmax.f32 %v4441, 0.0
        %v4730 = vmax.f32 %v4442, 0.0
        %v4731 = vmax.f32 %v4443, 0.0
        %v4732 = vmax.f32 %v4444, 0.0
        %v4733 = vmax.f32 %v4445, 0.0
        %v4734 = vmax.f32 %v4446, 0.0
        %v4735 = vmax.f32 %v4447, 0.0
        %v4736 = vmax.f32 %v4448, 0.0
        %v4737 = vmax.f32 %v4449, 0.0
        %v4738 = vmax.f32 %v4450, 0.0
        %v4739 = vmax.f32 %v4451, 0.0
        %v4740 = vmax.f32 %v4452, 0.0
        %v4741 = vmax.f32 %v4453, 0.0
        %v4742 = vmax.f32 %v4454, 0.0
        %v4743 = vmax.f32 %v4455, 0.0
        %v4744 = vmax.f32 %v4456, 0.0
        %v4745 = vmax.f32 %v4457, 0.0
        %v4746 = vmax.f32 %v4458, 0.0
        %v4747 = vmax.f32 %v4459, 0.0
        %v4748 = vmax.f32 %v4460, 0.0
        %v4749 = vmax.f32 %v4461, 0.0
        %v4750 = vmax.f32 %v4462, 0.0
        %v4751 = vmax.f32 %v4463, 0.0
        %v4752 = vmax.f32 %v4464, 0.0
        %v4753 = vmax.f32 %v4465, 0.0
        %v4754 = vmax.f32 %v4466, 0.0
        %v4755 = vmax.f32 %v4467, 0.0
        %v4756 = vmax.f32 %v4468, 0.0
        %v4757 = vmax.f32 %v4469, 0.0
        %v4758 = vmax.f32 %v4470, 0.0
        %v4759 = vmax.f32 %v4471, 0.0
        %v4760 = vmax.f32 %v4472, 0.0
        %v4761 = vmax.f32 %v4473, 0.0
        %v4762 = vmax.f32 %v4474, 0.0
        %v4763 = vmax.f32 %v4475, 0.0
        %v4764 = vmax.f32 %v4476, 0.0
        %v4765 = vmax.f32 %v4477, 0.0
        %v4766 = vmax.f32 %v4478, 0.0
        %v4767 = vmax.f32 %v4479, 0.0
        %v4768 = vmax.f32 %v4480, 0.0
        %v4769 = vmax.f32 %v4481, 0.0
        %v4770 = vmax.f32 %v4482, 0.0
        %v4771 = vmax.f32 %v4483, 0.0
        %v4772 = vmax.f32 %v4484, 0.0
        %v4773 = vmax.f32 %v4485, 0.0
        %v4774 = vmax.f32 %v4486, 0.0
        %v4775 = vmax.f32 %v4487, 0.0
        %v4776 = vmax.f32 %v4488, 0.0
        %v4777 = vmax.f32 %v4489, 0.0
        %v4778 = vmax.f32 %v4490, 0.0
        %v4779 = vmax.f32 %v4491, 0.0
        %v4780 = vmax.f32 %v4492, 0.0
        %v4781 = vmax.f32 %v4493, 0.0
        %v4782 = vmax.f32 %v4494, 0.0
        %v4783 = vmax.f32 %v4495, 0.0
        %v4784 = vmax.f32 %v4496, 0.0
        %v4785 = vmax.f32 %v4497, 0.0
        %v4786 = vmax.f32 %v4498, 0.0
        %v4787 = vmax.f32 %v4499, 0.0
        %v4788 = vmax.f32 %v4500, 0.0
        %v4789 = vmax.f32 %v4501, 0.0
        %v4790 = vmax.f32 %v4502, 0.0
        %v4791 = vmax.f32 %v4503, 0.0
        %v4792 = vmax.f32 %v4504, 0.0
        %v4793 = vmax.f32 %v4505, 0.0
        %v4794 = vmax.f32 %v4506, 0.0
        %v4795 = vmax.f32 %v4507, 0.0
        %v4796 = vmax.f32 %v4508, 0.0
        %v4797 = vld [vmem:[#allocation2] sm:$0xff]
        %v4798 = vld [vmem:[#allocation2 + $0x8] sm:$0xff]
        %v4799 = vld [vmem:[#allocation2 + $0x10] sm:$0x3]
        %v4800 = vadd.f32 %v4509, %v4527
        %v4801 = vadd.f32 %v4800, %v4545
        %v4802 = vadd.f32 %v4801, %v4563
        %v4803 = vadd.f32 %v4802, %v4581
        %v4804 = vadd.f32 %v4803, %v4599
        %v4805 = vadd.f32 %v4804, %v4617
        %v4806 = vadd.f32 %v4805, %v4635
        %v4807 = vadd.f32 %v4806, %v4653
        %v4808 = vadd.f32 %v4807, %v4671
        %v4809 = vadd.f32 %v4808, %v4689
        %v4810 = vadd.f32 %v4809, %v4707
        %v4811 = vadd.f32 %v4810, %v4725
        %v4812 = vadd.f32 %v4811, %v4743
        %v4813 = vadd.f32 %v4812, %v4761
        %v4814 = vadd.f32 %v4813, %v4779
        %v4815 = vrot.slane %v4814, 4
        %v4816 = vadd.f32 %v4814, %v4815
        %v4817 = vrot.slane %v4816, 2
        %v4818 = vadd.f32 %v4816, %v4817
        %v4819 = vrot.slane %v4818, 1
        %v4820 = vadd.f32 %v4818, %v4819
        %v4821 = vadd.f32 %v4510, %v4528
        %v4822 = vadd.f32 %v4821, %v4546
        %v4823 = vadd.f32 %v4822, %v4564
        %v4824 = vadd.f32 %v4823, %v4582
        %v4825 = vadd.f32 %v4824, %v4600
        %v4826 = vadd.f32 %v4825, %v4618
        %v4827 = vadd.f32 %v4826, %v4636
        %v4828 = vadd.f32 %v4827, %v4654
        %v4829 = vadd.f32 %v4828, %v4672
        %v4830 = vadd.f32 %v4829, %v4690
        %v4831 = vadd.f32 %v4830, %v4708
        %v4832 = vadd.f32 %v4831, %v4726
        %v4833 = vadd.f32 %v4832, %v4744
        %v4834 = vadd.f32 %v4833, %v4762
        %v4835 = vadd.f32 %v4834, %v4780
        %v4836 = vrot.slane %v4835, 4
        %v4837 = vadd.f32 %v4835, %v4836
        %v4838 = vrot.slane %v4837, 2
        %v4839 = vadd.f32 %v4837, %v4838
        %v4840 = vrot.slane %v4839, 1
        %v4841 = vadd.f32 %v4839, %v4840
        %v4842 = vadd.f32 %v4511, %v4529
        %v4843 = vadd.f32 %v4842, %v4547
        %v4844 = vadd.f32 %v4843, %v4565
        %v4845 = vadd.f32 %v4844, %v4583
        %v4846 = vadd.f32 %v4845, %v4601
        %v4847 = vadd.f32 %v4846, %v4619
        %v4848 = vadd.f32 %v4847, %v4637
        %v4849 = vadd.f32 %v4848, %v4655
        %v4850 = vadd.f32 %v4849, %v4673
        %v4851 = vadd.f32 %v4850, %v4691
        %v4852 = vadd.f32 %v4851, %v4709
        %v4853 = vadd.f32 %v4852, %v4727
        %v4854 = vadd.f32 %v4853, %v4745
        %v4855 = vadd.f32 %v4854, %v4763
        %v4856 = vadd.f32 %v4855, %v4781
        %v4857 = vrot.slane %v4856, 4
        %v4858 = vadd.f32 %v4856, %v4857
        %v4859 = vrot.slane %v4858, 2
        %v4860 = vadd.f32 %v4858, %v4859
        %v4861 = vrot.slane %v4860, 1
        %v4862 = vadd.f32 %v4860, %v4861
        %v4863 = vadd.f32 %v4512, %v4530
        %v4864 = vadd.f32 %v4863, %v4548
        %v4865 = vadd.f32 %v4864, %v4566
        %v4866 = vadd.f32 %v4865, %v4584
        %v4867 = vadd.f32 %v4866, %v4602
        %v4868 = vadd.f32 %v4867, %v4620
        %v4869 = vadd.f32 %v4868, %v4638
        %v4870 = vadd.f32 %v4869, %v4656
        %v4871 = vadd.f32 %v4870, %v4674
        %v4872 = vadd.f32 %v4871, %v4692
        %v4873 = vadd.f32 %v4872, %v4710
        %v4874 = vadd.f32 %v4873, %v4728
        %v4875 = vadd.f32 %v4874, %v4746
        %v4876 = vadd.f32 %v4875, %v4764
        %v4877 = vadd.f32 %v4876, %v4782
        %v4878 = vrot.slane %v4877, 4
        %v4879 = vadd.f32 %v4877, %v4878
        %v4880 = vrot.slane %v4879, 2
        %v4881 = vadd.f32 %v4879, %v4880
        %v4882 = vrot.slane %v4881, 1
        %v4883 = vadd.f32 %v4881, %v4882
        %v4884 = vadd.f32 %v4513, %v4531
        %v4885 = vadd.f32 %v4884, %v4549
        %v4886 = vadd.f32 %v4885, %v4567
        %v4887 = vadd.f32 %v4886, %v4585
        %v4888 = vadd.f32 %v4887, %v4603
        %v4889 = vadd.f32 %v4888, %v4621
        %v4890 = vadd.f32 %v4889, %v4639
        %v4891 = vadd.f32 %v4890, %v4657
        %v4892 = vadd.f32 %v4891, %v4675
        %v4893 = vadd.f32 %v4892, %v4693
        %v4894 = vadd.f32 %v4893, %v4711
        %v4895 = vadd.f32 %v4894, %v4729
        %v4896 = vadd.f32 %v4895, %v4747
        %v4897 = vadd.f32 %v4896, %v4765
        %v4898 = vadd.f32 %v4897, %v4783
        %v4899 = vrot.slane %v4898, 4
        %v4900 = vadd.f32 %v4898, %v4899
        %v4901 = vrot.slane %v4900, 2
        %v4902 = vadd.f32 %v4900, %v4901
        %v4903 = vrot.slane %v4902, 1
        %v4904 = vadd.f32 %v4902, %v4903
        %v4905 = vadd.f32 %v4514, %v4532
        %v4906 = vadd.f32 %v4905, %v4550
        %v4907 = vadd.f32 %v4906, %v4568
        %v4908 = vadd.f32 %v4907, %v4586
        %v4909 = vadd.f32 %v4908, %v4604
        %v4910 = vadd.f32 %v4909, %v4622
        %v4911 = vadd.f32 %v4910, %v4640
        %v4912 = vadd.f32 %v4911, %v4658
        %v4913 = vadd.f32 %v4912, %v4676
        %v4914 = vadd.f32 %v4913, %v4694
        %v4915 = vadd.f32 %v4914, %v4712
        %v4916 = vadd.f32 %v4915, %v4730
        %v4917 = vadd.f32 %v4916, %v4748
        %v4918 = vadd.f32 %v4917, %v4766
        %v4919 = vadd.f32 %v4918, %v4784
        %v4920 = vrot.slane %v4919, 4
        %v4921 = vadd.f32 %v4919, %v4920
        %v4922 = vrot.slane %v4921, 2
        %v4923 = vadd.f32 %v4921, %v4922
        %v4924 = vrot.slane %v4923, 1
        %v4925 = vadd.f32 %v4923, %v4924
        %v4926 = vadd.f32 %v4515, %v4533
        %v4927 = vadd.f32 %v4926, %v4551
        %v4928 = vadd.f32 %v4927, %v4569
        %v4929 = vadd.f32 %v4928, %v4587
        %v4930 = vadd.f32 %v4929, %v4605
        %v4931 = vadd.f32 %v4930, %v4623
        %v4932 = vadd.f32 %v4931, %v4641
        %v4933 = vadd.f32 %v4932, %v4659
        %v4934 = vadd.f32 %v4933, %v4677
        %v4935 = vadd.f32 %v4934, %v4695
        %v4936 = vadd.f32 %v4935, %v4713
        %v4937 = vadd.f32 %v4936, %v4731
        %v4938 = vadd.f32 %v4937, %v4749
        %v4939 = vadd.f32 %v4938, %v4767
        %v4940 = vadd.f32 %v4939, %v4785
        %v4941 = vrot.slane %v4940, 4
        %v4942 = vadd.f32 %v4940, %v4941
        %v4943 = vrot.slane %v4942, 2
        %v4944 = vadd.f32 %v4942, %v4943
        %v4945 = vrot.slane %v4944, 1
        %v4946 = vadd.f32 %v4944, %v4945
        %v4947 = vadd.f32 %v4516, %v4534
        %v4948 = vadd.f32 %v4947, %v4552
        %v4949 = vadd.f32 %v4948, %v4570
        %v4950 = vadd.f32 %v4949, %v4588
        %v4951 = vadd.f32 %v4950, %v4606
        %v4952 = vadd.f32 %v4951, %v4624
        %v4953 = vadd.f32 %v4952, %v4642
        %v4954 = vadd.f32 %v4953, %v4660
        %v4955 = vadd.f32 %v4954, %v4678
        %v4956 = vadd.f32 %v4955, %v4696
        %v4957 = vadd.f32 %v4956, %v4714
        %v4958 = vadd.f32 %v4957, %v4732
        %v4959 = vadd.f32 %v4958, %v4750
        %v4960 = vadd.f32 %v4959, %v4768
        %v4961 = vadd.f32 %v4960, %v4786
        %v4962 = vrot.slane %v4961, 4
        %v4963 = vadd.f32 %v4961, %v4962
        %v4964 = vrot.slane %v4963, 2
        %v4965 = vadd.f32 %v4963, %v4964
        %v4966 = vrot.slane %v4965, 1
        %v4967 = vadd.f32 %v4965, %v4966
        %v4968 = vadd.f32 %v4517, %v4535
        %v4969 = vadd.f32 %v4968, %v4553
        %v4970 = vadd.f32 %v4969, %v4571
        %v4971 = vadd.f32 %v4970, %v4589
        %v4972 = vadd.f32 %v4971, %v4607
        %v4973 = vadd.f32 %v4972, %v4625
        %v4974 = vadd.f32 %v4973, %v4643
        %v4975 = vadd.f32 %v4974, %v4661
        %v4976 = vadd.f32 %v4975, %v4679
        %v4977 = vadd.f32 %v4976, %v4697
        %v4978 = vadd.f32 %v4977, %v4715
        %v4979 = vadd.f32 %v4978, %v4733
        %v4980 = vadd.f32 %v4979, %v4751
        %v4981 = vadd.f32 %v4980, %v4769
        %v4982 = vadd.f32 %v4981, %v4787
        %v4983 = vrot.slane %v4982, 4
        %v4984 = vadd.f32 %v4982, %v4983
        %v4985 = vrot.slane %v4984, 2
        %v4986 = vadd.f32 %v4984, %v4985
        %v4987 = vrot.slane %v4986, 1
        %v4988 = vadd.f32 %v4986, %v4987
        %v4989 = vadd.f32 %v4518, %v4536
        %v4990 = vadd.f32 %v4989, %v4554
        %v4991 = vadd.f32 %v4990, %v4572
        %v4992 = vadd.f32 %v4991, %v4590
        %v4993 = vadd.f32 %v4992, %v4608
        %v4994 = vadd.f32 %v4993, %v4626
        %v4995 = vadd.f32 %v4994, %v4644
        %v4996 = vadd.f32 %v4995, %v4662
        %v4997 = vadd.f32 %v4996, %v4680
        %v4998 = vadd.f32 %v4997, %v4698
        %v4999 = vadd.f32 %v4998, %v4716
        %v5000 = vadd.f32 %v4999, %v4734
        %v5001 = vadd.f32 %v5000, %v4752
        %v5002 = vadd.f32 %v5001, %v4770
        %v5003 = vadd.f32 %v5002, %v4788
        %v5004 = vrot.slane %v5003, 4
        %v5005 = vadd.f32 %v5003, %v5004
        %v5006 = vrot.slane %v5005, 2
        %v5007 = vadd.f32 %v5005, %v5006
        %v5008 = vrot.slane %v5007, 1
        %v5009 = vadd.f32 %v5007, %v5008
        %v5010 = vadd.f32 %v4519, %v4537
        %v5011 = vadd.f32 %v5010, %v4555
        %v5012 = vadd.f32 %v5011, %v4573
        %v5013 = vadd.f32 %v5012, %v4591
        %v5014 = vadd.f32 %v5013, %v4609
        %v5015 = vadd.f32 %v5014, %v4627
        %v5016 = vadd.f32 %v5015, %v4645
        %v5017 = vadd.f32 %v5016, %v4663
        %v5018 = vadd.f32 %v5017, %v4681
        %v5019 = vadd.f32 %v5018, %v4699
        %v5020 = vadd.f32 %v5019, %v4717
        %v5021 = vadd.f32 %v5020, %v4735
        %v5022 = vadd.f32 %v5021, %v4753
        %v5023 = vadd.f32 %v5022, %v4771
        %v5024 = vadd.f32 %v5023, %v4789
        %v5025 = vrot.slane %v5024, 4
        %v5026 = vadd.f32 %v5024, %v5025
        %v5027 = vrot.slane %v5026, 2
        %v5028 = vadd.f32 %v5026, %v5027
        %v5029 = vrot.slane %v5028, 1
        %v5030 = vadd.f32 %v5028, %v5029
        %v5031 = vadd.f32 %v4520, %v4538
        %v5032 = vadd.f32 %v5031, %v4556
        %v5033 = vadd.f32 %v5032, %v4574
        %v5034 = vadd.f32 %v5033, %v4592
        %v5035 = vadd.f32 %v5034, %v4610
        %v5036 = vadd.f32 %v5035, %v4628
        %v5037 = vadd.f32 %v5036, %v4646
        %v5038 = vadd.f32 %v5037, %v4664
        %v5039 = vadd.f32 %v5038, %v4682
        %v5040 = vadd.f32 %v5039, %v4700
        %v5041 = vadd.f32 %v5040, %v4718
        %v5042 = vadd.f32 %v5041, %v4736
        %v5043 = vadd.f32 %v5042, %v4754
        %v5044 = vadd.f32 %v5043, %v4772
        %v5045 = vadd.f32 %v5044, %v4790
        %v5046 = vrot.slane %v5045, 4
        %v5047 = vadd.f32 %v5045, %v5046
        %v5048 = vrot.slane %v5047, 2
        %v5049 = vadd.f32 %v5047, %v5048
        %v5050 = vrot.slane %v5049, 1
        %v5051 = vadd.f32 %v5049, %v5050
        %v5052 = vadd.f32 %v4521, %v4539
        %v5053 = vadd.f32 %v5052, %v4557
        %v5054 = vadd.f32 %v5053, %v4575
        %v5055 = vadd.f32 %v5054, %v4593
        %v5056 = vadd.f32 %v5055, %v4611
        %v5057 = vadd.f32 %v5056, %v4629
        %v5058 = vadd.f32 %v5057, %v4647
        %v5059 = vadd.f32 %v5058, %v4665
        %v5060 = vadd.f32 %v5059, %v4683
        %v5061 = vadd.f32 %v5060, %v4701
        %v5062 = vadd.f32 %v5061, %v4719
        %v5063 = vadd.f32 %v5062, %v4737
        %v5064 = vadd.f32 %v5063, %v4755
        %v5065 = vadd.f32 %v5064, %v4773
        %v5066 = vadd.f32 %v5065, %v4791
        %v5067 = vrot.slane %v5066, 4
        %v5068 = vadd.f32 %v5066, %v5067
        %v5069 = vrot.slane %v5068, 2
        %v5070 = vadd.f32 %v5068, %v5069
        %v5071 = vrot.slane %v5070, 1
        %v5072 = vadd.f32 %v5070, %v5071
        %v5073 = vadd.f32 %v4522, %v4540
        %v5074 = vadd.f32 %v5073, %v4558
        %v5075 = vadd.f32 %v5074, %v4576
        %v5076 = vadd.f32 %v5075, %v4594
        %v5077 = vadd.f32 %v5076, %v4612
        %v5078 = vadd.f32 %v5077, %v4630
        %v5079 = vadd.f32 %v5078, %v4648
        %v5080 = vadd.f32 %v5079, %v4666
        %v5081 = vadd.f32 %v5080, %v4684
        %v5082 = vadd.f32 %v5081, %v4702
        %v5083 = vadd.f32 %v5082, %v4720
        %v5084 = vadd.f32 %v5083, %v4738
        %v5085 = vadd.f32 %v5084, %v4756
        %v5086 = vadd.f32 %v5085, %v4774
        %v5087 = vadd.f32 %v5086, %v4792
        %v5088 = vrot.slane %v5087, 4
        %v5089 = vadd.f32 %v5087, %v5088
        %v5090 = vrot.slane %v5089, 2
        %v5091 = vadd.f32 %v5089, %v5090
        %v5092 = vrot.slane %v5091, 1
        %v5093 = vadd.f32 %v5091, %v5092
        %v5094 = vadd.f32 %v4523, %v4541
        %v5095 = vadd.f32 %v5094, %v4559
        %v5096 = vadd.f32 %v5095, %v4577
        %v5097 = vadd.f32 %v5096, %v4595
        %v5098 = vadd.f32 %v5097, %v4613
        %v5099 = vadd.f32 %v5098, %v4631
        %v5100 = vadd.f32 %v5099, %v4649
        %v5101 = vadd.f32 %v5100, %v4667
        %v5102 = vadd.f32 %v5101, %v4685
        %v5103 = vadd.f32 %v5102, %v4703
        %v5104 = vadd.f32 %v5103, %v4721
        %v5105 = vadd.f32 %v5104, %v4739
        %v5106 = vadd.f32 %v5105, %v4757
        %v5107 = vadd.f32 %v5106, %v4775
        %v5108 = vadd.f32 %v5107, %v4793
        %v5109 = vrot.slane %v5108, 4
        %v5110 = vadd.f32 %v5108, %v5109
        %v5111 = vrot.slane %v5110, 2
        %v5112 = vadd.f32 %v5110, %v5111
        %v5113 = vrot.slane %v5112, 1
        %v5114 = vadd.f32 %v5112, %v5113
        %v5115 = vadd.f32 %v4524, %v4542
        %v5116 = vadd.f32 %v5115, %v4560
        %v5117 = vadd.f32 %v5116, %v4578
        %v5118 = vadd.f32 %v5117, %v4596
        %v5119 = vadd.f32 %v5118, %v4614
        %v5120 = vadd.f32 %v5119, %v4632
        %v5121 = vadd.f32 %v5120, %v4650
        %v5122 = vadd.f32 %v5121, %v4668
        %v5123 = vadd.f32 %v5122, %v4686
        %v5124 = vadd.f32 %v5123, %v4704
        %v5125 = vadd.f32 %v5124, %v4722
        %v5126 = vadd.f32 %v5125, %v4740
        %v5127 = vadd.f32 %v5126, %v4758
        %v5128 = vadd.f32 %v5127, %v4776
        %v5129 = vadd.f32 %v5128, %v4794
        %v5130 = vrot.slane %v5129, 4
        %v5131 = vadd.f32 %v5129, %v5130
        %v5132 = vrot.slane %v5131, 2
        %v5133 = vadd.f32 %v5131, %v5132
        %v5134 = vrot.slane %v5133, 1
        %v5135 = vadd.f32 %v5133, %v5134
        %v5136 = vadd.f32 %v4525, %v4543
        %v5137 = vadd.f32 %v5136, %v4561
        %v5138 = vadd.f32 %v5137, %v4579
        %v5139 = vadd.f32 %v5138, %v4597
        %v5140 = vadd.f32 %v5139, %v4615
        %v5141 = vadd.f32 %v5140, %v4633
        %v5142 = vadd.f32 %v5141, %v4651
        %v5143 = vadd.f32 %v5142, %v4669
        %v5144 = vadd.f32 %v5143, %v4687
        %v5145 = vadd.f32 %v5144, %v4705
        %v5146 = vadd.f32 %v5145, %v4723
        %v5147 = vadd.f32 %v5146, %v4741
        %v5148 = vadd.f32 %v5147, %v4759
        %v5149 = vadd.f32 %v5148, %v4777
        %v5150 = vadd.f32 %v5149, %v4795
        %v5151 = vrot.slane %v5150, 4
        %v5152 = vadd.f32 %v5150, %v5151
        %v5153 = vrot.slane %v5152, 2
        %v5154 = vadd.f32 %v5152, %v5153
        %v5155 = vrot.slane %v5154, 1
        %v5156 = vadd.f32 %v5154, %v5155
        %vm5157 = vcmask 261120
        %v5158 = vsel %vm5157, %v4526, 0.0
        %v5159 = vsel %vm5157, %v4544, 0.0
        %v5160 = vadd.f32 %v5158, %v5159
        %v5161 = vsel %vm5157, %v4562, 0.0
        %v5162 = vadd.f32 %v5160, %v5161
        %v5163 = vsel %vm5157, %v4580, 0.0
        %v5164 = vadd.f32 %v5162, %v5163
        %v5165 = vsel %vm5157, %v4598, 0.0
        %v5166 = vadd.f32 %v5164, %v5165
        %v5167 = vsel %vm5157, %v4616, 0.0
        %v5168 = vadd.f32 %v5166, %v5167
        %v5169 = vsel %vm5157, %v4634, 0.0
        %v5170 = vadd.f32 %v5168, %v5169
        %v5171 = vsel %vm5157, %v4652, 0.0
        %v5172 = vadd.f32 %v5170, %v5171
        %v5173 = vsel %vm5157, %v4670, 0.0
        %v5174 = vadd.f32 %v5172, %v5173
        %v5175 = vsel %vm5157, %v4688, 0.0
        %v5176 = vadd.f32 %v5174, %v5175
        %v5177 = vsel %vm5157, %v4706, 0.0
        %v5178 = vadd.f32 %v5176, %v5177
        %v5179 = vsel %vm5157, %v4724, 0.0
        %v5180 = vadd.f32 %v5178, %v5179
        %v5181 = vsel %vm5157, %v4742, 0.0
        %v5182 = vadd.f32 %v5180, %v5181
        %v5183 = vsel %vm5157, %v4760, 0.0
        %v5184 = vadd.f32 %v5182, %v5183
        %v5185 = vsel %vm5157, %v4778, 0.0
        %v5186 = vadd.f32 %v5184, %v5185
        %v5187 = vsel %vm5157, %v4796, 0.0
        %v5188 = vadd.f32 %v5186, %v5187
        %v5189 = vrot.slane %v5188, 4
        %v5190 = vadd.f32 %v5188, %v5189
        %v5191 = vrot.slane %v5190, 2
        %v5192 = vadd.f32 %v5190, %v5191
        %v5193 = vrot.slane %v5192, 1
        %v5194 = vadd.f32 %v5192, %v5193
        %v5213 = vcombine.low %v4820, %v4841
        %v5214 = vcombine.low %v4862, %v4883
        %v5215 = vcombine.low %v4904, %v4925
        %v5216 = vcombine.low %v4946, %v4967
        %v5218 = vunpack.c.l.s4 1966171168
        %v5219 = vunpack.c.0.s8 %v5218
        %v5220 = vlaneseq
        %v5221 = vshrl.u32 %v5220, 7
        %v5222 = vsub.s32 %v5219, %v5221
        %v5223 = vrot.slane %v5213, %v5222
        %v5225 = vunpack.c.l.s4 1966171168
        %v5226 = vunpack.c.0.s8 %v5225
        %v5227 = vlaneseq
        %v5228 = vshrl.u32 %v5227, 7
        %v5229 = vsub.s32 %v5226, %v5228
        %v5230 = vrot.slane %v5214, %v5229
        %v5232 = vunpack.c.l.s4 1966171168
        %v5233 = vunpack.c.0.s8 %v5232
        %v5234 = vlaneseq
        %v5235 = vshrl.u32 %v5234, 7
        %v5236 = vsub.s32 %v5233, %v5235
        %v5237 = vrot.slane %v5215, %v5236
        %v5239 = vunpack.c.l.s4 1966171168
        %v5240 = vunpack.c.0.s8 %v5239
        %v5241 = vlaneseq
        %v5242 = vshrl.u32 %v5241, 7
        %v5243 = vsub.s32 %v5240, %v5242
        %v5244 = vrot.slane %v5216, %v5243
        %v5245 = vcombine.low %v5223, %v5230
        %v5246 = vcombine.low %v5237, %v5244
        %v5248 = vunpack.c.l.s4 1966171168
        %v5249 = vunpack.c.0.s8 %v5248
        %v5250 = vlaneseq
        %v5251 = vshrl.u32 %v5250, 7
        %v5252 = vsub.s32 %v5249, %v5251
        %v5253 = vrot.slane %v5245, %v5252
        %v5255 = vunpack.c.l.s4 1966171168
        %v5256 = vunpack.c.0.s8 %v5255
        %v5257 = vlaneseq
        %v5258 = vshrl.u32 %v5257, 7
        %v5259 = vsub.s32 %v5256, %v5258
        %v5260 = vrot.slane %v5246, %v5259
        %v5261 = vcombine.low %v5253, %v5260
        %v5262 = vcombine.low %v4988, %v5009
        %v5263 = vcombine.low %v5030, %v5051
        %v5264 = vcombine.low %v5072, %v5093
        %v5265 = vcombine.low %v5114, %v5135
        %v5267 = vunpack.c.l.s4 1966171168
        %v5268 = vunpack.c.0.s8 %v5267
        %v5269 = vlaneseq
        %v5270 = vshrl.u32 %v5269, 7
        %v5271 = vsub.s32 %v5268, %v5270
        %v5272 = vrot.slane %v5262, %v5271
        %v5274 = vunpack.c.l.s4 1966171168
        %v5275 = vunpack.c.0.s8 %v5274
        %v5276 = vlaneseq
        %v5277 = vshrl.u32 %v5276, 7
        %v5278 = vsub.s32 %v5275, %v5277
        %v5279 = vrot.slane %v5263, %v5278
        %v5281 = vunpack.c.l.s4 1966171168
        %v5282 = vunpack.c.0.s8 %v5281
        %v5283 = vlaneseq
        %v5284 = vshrl.u32 %v5283, 7
        %v5285 = vsub.s32 %v5282, %v5284
        %v5286 = vrot.slane %v5264, %v5285
        %v5288 = vunpack.c.l.s4 1966171168
        %v5289 = vunpack.c.0.s8 %v5288
        %v5290 = vlaneseq
        %v5291 = vshrl.u32 %v5290, 7
        %v5292 = vsub.s32 %v5289, %v5291
        %v5293 = vrot.slane %v5265, %v5292
        %v5294 = vcombine.low %v5272, %v5279
        %v5295 = vcombine.low %v5286, %v5293
        %v5297 = vunpack.c.l.s4 1966171168
        %v5298 = vunpack.c.0.s8 %v5297
        %v5299 = vlaneseq
        %v5300 = vshrl.u32 %v5299, 7
        %v5301 = vsub.s32 %v5298, %v5300
        %v5302 = vrot.slane %v5294, %v5301
        %v5304 = vunpack.c.l.s4 1966171168
        %v5305 = vunpack.c.0.s8 %v5304
        %v5306 = vlaneseq
        %v5307 = vshrl.u32 %v5306, 7
        %v5308 = vsub.s32 %v5305, %v5307
        %v5309 = vrot.slane %v5295, %v5308
        %v5310 = vcombine.low %v5302, %v5309
        %v5311 = vcombine.low %v5156, %v5194
        %v5313 = vunpack.c.l.s4 1966171168
        %v5314 = vunpack.c.0.s8 %v5313
        %v5315 = vlaneseq
        %v5316 = vshrl.u32 %v5315, 7
        %v5317 = vsub.s32 %v5314, %v5316
        %v5318 = vrot.slane %v5311, %v5317
        %v5320 = vunpack.c.l.s4 1966171168
        %v5321 = vunpack.c.0.s8 %v5320
        %v5322 = vlaneseq
        %v5323 = vshrl.u32 %v5322, 7
        %v5324 = vsub.s32 %v5321, %v5323
        %v5325 = vrot.slane %v5318, %v5324
        %v5329 = vadd.f32 %v4797, %v5261
        %v5330 = vadd.f32 %v4798, %v5310
        %v5331 = vadd.f32 %v4799, %v5325
        %5332 = vst [vmem:[#allocation2] sm:$0xff] %v5329
        %5333 = vst [vmem:[#allocation2 + $0x8] sm:$0xff] %v5330
        %v5334 = vlaneseq
        %vm5335 = vcmp.ge.s32.totalorder %v5334, 0
        %vm5336 = vcmp.lt.s32.totalorder %v5334, 160
        %vm5337 = vmand %vm5335, %vm5336
        %5338 = vst.msk [vmem:[#allocation2 + $0x10] sm:$0x3] %vm5337, %v5331
        %p5339 = scmp.eq.s32.totalorder %s26, 1
        // Predicated region
        $region53: #{two_inputs_net_forward.1} parent=47 // pred_check
          %p5340 = pneg %p5339
        $region54: #{two_inputs_net_forward.1} parent=47 // pred_check_branch
          %5342 = sbr.rel (%p5340) target = $region56
        $region55: #{two_inputs_net_forward.1} parent=47 // pred_region
          %v5343 = vld [vmem:[#allocation2] sm:$0xff]
          %v5344 = vld [vmem:[#allocation2 + $0x8] sm:$0xff]
          %v5345 = vld [vmem:[#allocation2 + $0x10] sm:$0x3]
          %v5346 = vmul.f32 %v5343, 0.00390625
          %v5347 = vmul.f32 %v5344, 0.00390625
          %v5348 = vmul.f32 %v5345, 0.00390625
          %v5349 = vld [vmem:[%s5] sm:$0xff]
          %v5350 = vld [vmem:[%s5 + $0x8] sm:$0xff]
          %v5351 = vld [vmem:[%s5 + $0x10] sm:$0xff]
          %v5352 = vld [vmem:[%s5 + $0x18] sm:$0xff]
          %v5353 = vld [vmem:[%s5 + $0x20] sm:$0xff]
          %v5354 = vld [vmem:[%s5 + $0x28] sm:$0xff]
          %v5355 = vld [vmem:[%s5 + $0x30] sm:$0xff]
          %v5356 = vld [vmem:[%s5 + $0x38] sm:$0xff]
          %v5357 = vld [vmem:[%s5 + $0x40] sm:$0xff]
          %v5358 = vld [vmem:[%s5 + $0x48] sm:$0xff]
          %v5359 = vld [vmem:[%s5 + $0x50] sm:$0xff]
          %v5360 = vld [vmem:[%s5 + $0x58] sm:$0xff]
          %v5361 = vld [vmem:[%s5 + $0x60] sm:$0xff]
          %v5362 = vld [vmem:[%s5 + $0x68] sm:$0xff]
          %v5363 = vld [vmem:[%s5 + $0x70] sm:$0xff]
          %v5364 = vld [vmem:[%s5 + $0x78] sm:$0xff]
          %v5365 = vld [vmem:[%s5 + $0x80] sm:$0xff]
          %v5366 = vld [vmem:[%s5 + $0x88] sm:$0xff]
          %v5367 = vld [vmem:[%s5 + $0x90] sm:$0xff]
          %v5368 = vld [vmem:[%s5 + $0x98] sm:$0xff]
          %v5369 = vld [vmem:[%s5 + $0xa0] sm:$0xff]
          %v5370 = vld [vmem:[%s5 + $0xa8] sm:$0xff]
          %v5371 = vld [vmem:[%s5 + $0xb0] sm:$0xff]
          %v5372 = vld [vmem:[%s5 + $0xb8] sm:$0xff]
          %v5373 = vld [vmem:[%s5 + $0xc0] sm:$0xff]
          %v5374 = vld [vmem:[%s5 + $0xc8] sm:$0xff]
          %v5375 = vld [vmem:[%s5 + $0xd0] sm:$0xff]
          %v5376 = vld [vmem:[%s5 + $0xd8] sm:$0xff]
          %v5377 = vld [vmem:[%s5 + $0xe0] sm:$0xff]
          %v5378 = vld [vmem:[%s5 + $0xe8] sm:$0xff]
          %v5379 = vld [vmem:[%s5 + $0xf0] sm:$0xff]
          %v5380 = vld [vmem:[%s5 + $0xf8] sm:$0xff]
          %v5381 = vld [vmem:[%s5 + $0x100] sm:$0xff]
          %v5382 = vld [vmem:[%s5 + $0x108] sm:$0xff]
          %v5383 = vld [vmem:[%s5 + $0x110] sm:$0xff]
          %v5384 = vld [vmem:[%s5 + $0x118] sm:$0xff]
          %v5385 = vld [vmem:[%s5 + $0x120] sm:$0xff]
          %v5386 = vld [vmem:[%s5 + $0x128] sm:$0xff]
          %v5387 = vld [vmem:[%s5 + $0x130] sm:$0xff]
          %v5388 = vld [vmem:[%s5 + $0x138] sm:$0xff]
          %v5389 = vld [vmem:[%s5 + $0x140] sm:$0xff]
          %v5390 = vld [vmem:[%s5 + $0x148] sm:$0xff]
          %v5391 = vld [vmem:[%s5 + $0x150] sm:$0xff]
          %v5392 = vld [vmem:[%s5 + $0x158] sm:$0xff]
          %v5393 = vld [vmem:[%s5 + $0x160] sm:$0xff]
          %v5394 = vld [vmem:[%s5 + $0x168] sm:$0xff]
          %v5395 = vld [vmem:[%s5 + $0x170] sm:$0xff]
          %v5396 = vld [vmem:[%s5 + $0x178] sm:$0xff]
          %v5397 = vld [vmem:[%s5 + $0x180] sm:$0xff]
          %v5398 = vld [vmem:[%s5 + $0x188] sm:$0xff]
          %v5399 = vld [vmem:[%s5 + $0x190] sm:$0xff]
          %v5400 = vld [vmem:[%s5 + $0x198] sm:$0xff]
          %v5401 = vld [vmem:[%s5 + $0x1a0] sm:$0xff]
          %v5402 = vld [vmem:[%s5 + $0x1a8] sm:$0xff]
          %v5403 = vld [vmem:[%s5 + $0x1b0] sm:$0xff]
          %v5404 = vld [vmem:[%s5 + $0x1b8] sm:$0xff]
          %v5405 = vld [vmem:[%s5 + $0x1c0] sm:$0xff]
          %v5406 = vld [vmem:[%s5 + $0x1c8] sm:$0xff]
          %v5407 = vld [vmem:[%s5 + $0x1d0] sm:$0xff]
          %v5408 = vld [vmem:[%s5 + $0x1d8] sm:$0xff]
          %v5409 = vld [vmem:[%s5 + $0x1e0] sm:$0xff]
          %v5410 = vld [vmem:[%s5 + $0x1e8] sm:$0xff]
          %v5411 = vld [vmem:[%s5 + $0x1f0] sm:$0xff]
          %v5412 = vld [vmem:[%s5 + $0x1f8] sm:$0xff]
          %v5413 = vld [vmem:[%s5 + $0x200] sm:$0xff]
          %v5414 = vld [vmem:[%s5 + $0x208] sm:$0xff]
          %v5415 = vld [vmem:[%s5 + $0x210] sm:$0xff]
          %v5416 = vld [vmem:[%s5 + $0x218] sm:$0xff]
          %v5417 = vld [vmem:[%s5 + $0x220] sm:$0xff]
          %v5418 = vld [vmem:[%s5 + $0x228] sm:$0xff]
          %v5419 = vld [vmem:[%s5 + $0x230] sm:$0xff]
          %v5420 = vld [vmem:[%s5 + $0x238] sm:$0xff]
          %v5421 = vld [vmem:[%s5 + $0x240] sm:$0xff]
          %v5422 = vld [vmem:[%s5 + $0x248] sm:$0xff]
          %v5423 = vld [vmem:[%s5 + $0x250] sm:$0xff]
          %v5424 = vld [vmem:[%s5 + $0x258] sm:$0xff]
          %v5425 = vld [vmem:[%s5 + $0x260] sm:$0xff]
          %v5426 = vld [vmem:[%s5 + $0x268] sm:$0xff]
          %v5427 = vld [vmem:[%s5 + $0x270] sm:$0xff]
          %v5428 = vld [vmem:[%s5 + $0x278] sm:$0xff]
          %v5429 = vld [vmem:[%s5 + $0x280] sm:$0xff]
          %v5430 = vld [vmem:[%s5 + $0x288] sm:$0xff]
          %v5431 = vld [vmem:[%s5 + $0x290] sm:$0xff]
          %v5432 = vld [vmem:[%s5 + $0x298] sm:$0xff]
          %v5433 = vld [vmem:[%s5 + $0x2a0] sm:$0xff]
          %v5434 = vld [vmem:[%s5 + $0x2a8] sm:$0xff]
          %v5435 = vld [vmem:[%s5 + $0x2b0] sm:$0xff]
          %v5436 = vld [vmem:[%s5 + $0x2b8] sm:$0xff]
          %v5437 = vld [vmem:[%s5 + $0x2c0] sm:$0xff]
          %v5438 = vld [vmem:[%s5 + $0x2c8] sm:$0xff]
          %v5439 = vld [vmem:[%s5 + $0x2d0] sm:$0xff]
          %v5440 = vld [vmem:[%s5 + $0x2d8] sm:$0xff]
          %v5441 = vld [vmem:[%s5 + $0x2e0] sm:$0xff]
          %v5442 = vld [vmem:[%s5 + $0x2e8] sm:$0xff]
          %v5443 = vld [vmem:[%s5 + $0x2f0] sm:$0xff]
          %v5444 = vld [vmem:[%s5 + $0x2f8] sm:$0xff]
          %v5445 = vld [vmem:[%s5 + $0x300] sm:$0xff]
          %v5446 = vld [vmem:[%s5 + $0x308] sm:$0xff]
          %v5447 = vld [vmem:[%s5 + $0x310] sm:$0xff]
          %v5448 = vld [vmem:[%s5 + $0x318] sm:$0xff]
          %v5449 = vld [vmem:[%s5 + $0x320] sm:$0xff]
          %v5450 = vld [vmem:[%s5 + $0x328] sm:$0xff]
          %v5451 = vld [vmem:[%s5 + $0x330] sm:$0xff]
          %v5452 = vld [vmem:[%s5 + $0x338] sm:$0xff]
          %v5453 = vld [vmem:[%s5 + $0x340] sm:$0xff]
          %v5454 = vld [vmem:[%s5 + $0x348] sm:$0xff]
          %v5455 = vld [vmem:[%s5 + $0x350] sm:$0xff]
          %v5456 = vld [vmem:[%s5 + $0x358] sm:$0xff]
          %v5457 = vld [vmem:[%s5 + $0x360] sm:$0xff]
          %v5458 = vld [vmem:[%s5 + $0x368] sm:$0xff]
          %v5459 = vld [vmem:[%s5 + $0x370] sm:$0xff]
          %v5460 = vld [vmem:[%s5 + $0x378] sm:$0xff]
          %v5461 = vld [vmem:[%s5 + $0x380] sm:$0xff]
          %v5462 = vld [vmem:[%s5 + $0x388] sm:$0xff]
          %v5463 = vld [vmem:[%s5 + $0x390] sm:$0xff]
          %v5464 = vld [vmem:[%s5 + $0x398] sm:$0xff]
          %v5465 = vld [vmem:[%s5 + $0x3a0] sm:$0xff]
          %v5466 = vld [vmem:[%s5 + $0x3a8] sm:$0xff]
          %v5467 = vld [vmem:[%s5 + $0x3b0] sm:$0xff]
          %v5468 = vld [vmem:[%s5 + $0x3b8] sm:$0xff]
          %v5469 = vld [vmem:[%s5 + $0x3c0] sm:$0xff]
          %v5470 = vld [vmem:[%s5 + $0x3c8] sm:$0xff]
          %v5471 = vld [vmem:[%s5 + $0x3d0] sm:$0xff]
          %v5472 = vld [vmem:[%s5 + $0x3d8] sm:$0xff]
          %v5473 = vld [vmem:[%s5 + $0x3e0] sm:$0xff]
          %v5474 = vld [vmem:[%s5 + $0x3e8] sm:$0xff]
          %v5475 = vld [vmem:[%s5 + $0x3f0] sm:$0xff]
          %v5476 = vld [vmem:[%s5 + $0x3f8] sm:$0xff]
          %v5477 = vld [vmem:[%s5 + $0x400] sm:$0xff]
          %v5478 = vld [vmem:[%s5 + $0x408] sm:$0xff]
          %v5479 = vld [vmem:[%s5 + $0x410] sm:$0xff]
          %v5480 = vld [vmem:[%s5 + $0x418] sm:$0xff]
          %v5481 = vld [vmem:[%s5 + $0x420] sm:$0xff]
          %v5482 = vld [vmem:[%s5 + $0x428] sm:$0xff]
          %v5483 = vld [vmem:[%s5 + $0x430] sm:$0xff]
          %v5484 = vld [vmem:[%s5 + $0x438] sm:$0xff]
          %v5485 = vld [vmem:[%s5 + $0x440] sm:$0xff]
          %v5486 = vld [vmem:[%s5 + $0x448] sm:$0xff]
          %v5487 = vld [vmem:[%s5 + $0x450] sm:$0xff]
          %v5488 = vld [vmem:[%s5 + $0x458] sm:$0xff]
          %v5489 = vld [vmem:[%s5 + $0x460] sm:$0xff]
          %v5490 = vld [vmem:[%s5 + $0x468] sm:$0xff]
          %v5491 = vld [vmem:[%s5 + $0x470] sm:$0xff]
          %v5492 = vld [vmem:[%s5 + $0x478] sm:$0xff]
          %v5493 = vld [vmem:[%s5 + $0x480] sm:$0xff]
          %v5494 = vld [vmem:[%s5 + $0x488] sm:$0xff]
          %v5495 = vld [vmem:[%s5 + $0x490] sm:$0xff]
          %v5496 = vld [vmem:[%s5 + $0x498] sm:$0xff]
          %v5497 = vld [vmem:[%s5 + $0x4a0] sm:$0xff]
          %v5498 = vld [vmem:[%s5 + $0x4a8] sm:$0xff]
          %v5499 = vld [vmem:[%s5 + $0x4b0] sm:$0xff]
          %v5500 = vld [vmem:[%s5 + $0x4b8] sm:$0xff]
          %v5501 = vld [vmem:[%s5 + $0x4c0] sm:$0xff]
          %v5502 = vld [vmem:[%s5 + $0x4c8] sm:$0xff]
          %v5503 = vld [vmem:[%s5 + $0x4d0] sm:$0xff]
          %v5504 = vld [vmem:[%s5 + $0x4d8] sm:$0xff]
          %v5505 = vld [vmem:[%s5 + $0x4e0] sm:$0xff]
          %v5506 = vld [vmem:[%s5 + $0x4e8] sm:$0xff]
          %v5507 = vld [vmem:[%s5 + $0x4f0] sm:$0xff]
          %v5508 = vld [vmem:[%s5 + $0x4f8] sm:$0xff]
          %v5509 = vld [vmem:[%s5 + $0x500] sm:$0xff]
          %v5510 = vld [vmem:[%s5 + $0x508] sm:$0xff]
          %v5511 = vld [vmem:[%s5 + $0x510] sm:$0xff]
          %v5512 = vld [vmem:[%s5 + $0x518] sm:$0xff]
          %v5513 = vld [vmem:[%s5 + $0x520] sm:$0xff]
          %v5514 = vld [vmem:[%s5 + $0x528] sm:$0xff]
          %v5515 = vld [vmem:[%s5 + $0x530] sm:$0xff]
          %v5516 = vld [vmem:[%s5 + $0x538] sm:$0xff]
          %v5517 = vld [vmem:[%s5 + $0x540] sm:$0xff]
          %v5518 = vld [vmem:[%s5 + $0x548] sm:$0xff]
          %v5519 = vld [vmem:[%s5 + $0x550] sm:$0xff]
          %v5520 = vld [vmem:[%s5 + $0x558] sm:$0xff]
          %v5521 = vld [vmem:[%s5 + $0x560] sm:$0xff]
          %v5522 = vld [vmem:[%s5 + $0x568] sm:$0xff]
          %v5523 = vld [vmem:[%s5 + $0x570] sm:$0xff]
          %v5524 = vld [vmem:[%s5 + $0x578] sm:$0xff]
          %v5525 = vld [vmem:[%s5 + $0x580] sm:$0xff]
          %v5526 = vld [vmem:[%s5 + $0x588] sm:$0xff]
          %v5527 = vld [vmem:[%s5 + $0x590] sm:$0xff]
          %v5528 = vld [vmem:[%s5 + $0x598] sm:$0xff]
          %v5529 = vld [vmem:[%s5 + $0x5a0] sm:$0xff]
          %v5530 = vld [vmem:[%s5 + $0x5a8] sm:$0xff]
          %v5531 = vld [vmem:[%s5 + $0x5b0] sm:$0xff]
          %v5532 = vld [vmem:[%s5 + $0x5b8] sm:$0xff]
          %v5533 = vld [vmem:[%s5 + $0x5c0] sm:$0xff]
          %v5534 = vld [vmem:[%s5 + $0x5c8] sm:$0xff]
          %v5535 = vld [vmem:[%s5 + $0x5d0] sm:$0xff]
          %v5536 = vld [vmem:[%s5 + $0x5d8] sm:$0xff]
          %v5537 = vld [vmem:[%s5 + $0x5e0] sm:$0xff]
          %v5538 = vld [vmem:[%s5 + $0x5e8] sm:$0xff]
          %v5539 = vld [vmem:[%s5 + $0x5f0] sm:$0xff]
          %v5540 = vld [vmem:[%s5 + $0x5f8] sm:$0xff]
          %v5541 = vld [vmem:[%s5 + $0x600] sm:$0xff]
          %v5542 = vld [vmem:[%s5 + $0x608] sm:$0xff]
          %v5543 = vld [vmem:[%s5 + $0x610] sm:$0xff]
          %v5544 = vld [vmem:[%s5 + $0x618] sm:$0xff]
          %v5545 = vld [vmem:[%s5 + $0x620] sm:$0xff]
          %v5546 = vld [vmem:[%s5 + $0x628] sm:$0xff]
          %v5547 = vld [vmem:[%s5 + $0x630] sm:$0xff]
          %v5548 = vld [vmem:[%s5 + $0x638] sm:$0xff]
          %v5549 = vld [vmem:[%s5 + $0x640] sm:$0xff]
          %v5550 = vld [vmem:[%s5 + $0x648] sm:$0xff]
          %v5551 = vld [vmem:[%s5 + $0x650] sm:$0xff]
          %v5552 = vld [vmem:[%s5 + $0x658] sm:$0xff]
          %v5553 = vld [vmem:[%s5 + $0x660] sm:$0xff]
          %v5554 = vld [vmem:[%s5 + $0x668] sm:$0xff]
          %v5555 = vld [vmem:[%s5 + $0x670] sm:$0xff]
          %v5556 = vld [vmem:[%s5 + $0x678] sm:$0xff]
          %v5557 = vld [vmem:[%s5 + $0x680] sm:$0xff]
          %v5558 = vld [vmem:[%s5 + $0x688] sm:$0xff]
          %v5559 = vld [vmem:[%s5 + $0x690] sm:$0xff]
          %v5560 = vld [vmem:[%s5 + $0x698] sm:$0xff]
          %v5561 = vld [vmem:[%s5 + $0x6a0] sm:$0xff]
          %v5562 = vld [vmem:[%s5 + $0x6a8] sm:$0xff]
          %v5563 = vld [vmem:[%s5 + $0x6b0] sm:$0xff]
          %v5564 = vld [vmem:[%s5 + $0x6b8] sm:$0xff]
          %v5565 = vld [vmem:[%s5 + $0x6c0] sm:$0xff]
          %v5566 = vld [vmem:[%s5 + $0x6c8] sm:$0xff]
          %v5567 = vld [vmem:[%s5 + $0x6d0] sm:$0xff]
          %v5568 = vld [vmem:[%s5 + $0x6d8] sm:$0xff]
          %v5569 = vld [vmem:[%s5 + $0x6e0] sm:$0xff]
          %v5570 = vld [vmem:[%s5 + $0x6e8] sm:$0xff]
          %v5571 = vld [vmem:[%s5 + $0x6f0] sm:$0xff]
          %v5572 = vld [vmem:[%s5 + $0x6f8] sm:$0xff]
          %v5573 = vld [vmem:[%s5 + $0x700] sm:$0xff]
          %v5574 = vld [vmem:[%s5 + $0x708] sm:$0xff]
          %v5575 = vld [vmem:[%s5 + $0x710] sm:$0xff]
          %v5576 = vld [vmem:[%s5 + $0x718] sm:$0xff]
          %v5577 = vld [vmem:[%s5 + $0x720] sm:$0xff]
          %v5578 = vld [vmem:[%s5 + $0x728] sm:$0xff]
          %v5579 = vld [vmem:[%s5 + $0x730] sm:$0xff]
          %v5580 = vld [vmem:[%s5 + $0x738] sm:$0xff]
          %v5581 = vld [vmem:[%s5 + $0x740] sm:$0xff]
          %v5582 = vld [vmem:[%s5 + $0x748] sm:$0xff]
          %v5583 = vld [vmem:[%s5 + $0x750] sm:$0xff]
          %v5584 = vld [vmem:[%s5 + $0x758] sm:$0xff]
          %v5585 = vld [vmem:[%s5 + $0x760] sm:$0xff]
          %v5586 = vld [vmem:[%s5 + $0x768] sm:$0xff]
          %v5587 = vld [vmem:[%s5 + $0x770] sm:$0xff]
          %v5588 = vld [vmem:[%s5 + $0x778] sm:$0xff]
          %v5589 = vld [vmem:[%s5 + $0x780] sm:$0xff]
          %v5590 = vld [vmem:[%s5 + $0x788] sm:$0xff]
          %v5591 = vld [vmem:[%s5 + $0x790] sm:$0xff]
          %v5592 = vld [vmem:[%s5 + $0x798] sm:$0xff]
          %v5593 = vld [vmem:[%s5 + $0x7a0] sm:$0xff]
          %v5594 = vld [vmem:[%s5 + $0x7a8] sm:$0xff]
          %v5595 = vld [vmem:[%s5 + $0x7b0] sm:$0xff]
          %v5596 = vld [vmem:[%s5 + $0x7b8] sm:$0xff]
          %v5597 = vld [vmem:[%s5 + $0x7c0] sm:$0xff]
          %v5598 = vld [vmem:[%s5 + $0x7c8] sm:$0xff]
          %v5599 = vld [vmem:[%s5 + $0x7d0] sm:$0xff]
          %v5600 = vld [vmem:[%s5 + $0x7d8] sm:$0xff]
          %v5601 = vld [vmem:[%s5 + $0x7e0] sm:$0xff]
          %v5602 = vld [vmem:[%s5 + $0x7e8] sm:$0xff]
          %v5603 = vld [vmem:[%s5 + $0x7f0] sm:$0xff]
          %v5604 = vld [vmem:[%s5 + $0x7f8] sm:$0xff]
          %v5605 = vld [vmem:[%s5 + $0x800] sm:$0xff]
          %v5606 = vld [vmem:[%s5 + $0x808] sm:$0xff]
          %v5607 = vld [vmem:[%s5 + $0x810] sm:$0xff]
          %v5608 = vld [vmem:[%s5 + $0x818] sm:$0xff]
          %v5609 = vld [vmem:[%s5 + $0x820] sm:$0xff]
          %v5610 = vld [vmem:[%s5 + $0x828] sm:$0xff]
          %v5611 = vld [vmem:[%s5 + $0x830] sm:$0xff]
          %v5612 = vld [vmem:[%s5 + $0x838] sm:$0xff]
          %v5613 = vld [vmem:[%s5 + $0x840] sm:$0xff]
          %v5614 = vld [vmem:[%s5 + $0x848] sm:$0xff]
          %v5615 = vld [vmem:[%s5 + $0x850] sm:$0xff]
          %v5616 = vld [vmem:[%s5 + $0x858] sm:$0xff]
          %v5617 = vld [vmem:[%s5 + $0x860] sm:$0xff]
          %v5618 = vld [vmem:[%s5 + $0x868] sm:$0xff]
          %v5619 = vld [vmem:[%s5 + $0x870] sm:$0xff]
          %v5620 = vld [vmem:[%s5 + $0x878] sm:$0xff]
          %v5621 = vld [vmem:[%s5 + $0x880] sm:$0xff]
          %v5622 = vld [vmem:[%s5 + $0x888] sm:$0xff]
          %v5623 = vld [vmem:[%s5 + $0x890] sm:$0xff]
          %v5624 = vld [vmem:[%s5 + $0x898] sm:$0xff]
          %v5625 = vld [vmem:[%s6] sm:$0x1]
          %v5629 = vlaneseq
          %v5630 = vshrl.u32 %v5629, 7
          %v5631 = vsub.s32 0, %v5630
          %v5632 = vrot.slane %v5346, %v5631
          %v5633 = vlaneseq
          %v5634 = vshrl.u32 %v5633, 7
          %v5635 = vsub.s32 1, %v5634
          %v5636 = vrot.slane %v5346, %v5635
          %v5637 = vlaneseq
          %v5638 = vshrl.u32 %v5637, 7
          %v5639 = vsub.s32 2, %v5638
          %v5640 = vrot.slane %v5346, %v5639
          %v5641 = vlaneseq
          %v5642 = vshrl.u32 %v5641, 7
          %v5643 = vsub.s32 3, %v5642
          %v5644 = vrot.slane %v5346, %v5643
          %v5645 = vlaneseq
          %v5646 = vshrl.u32 %v5645, 7
          %v5647 = vsub.s32 4, %v5646
          %v5648 = vrot.slane %v5346, %v5647
          %v5649 = vlaneseq
          %v5650 = vshrl.u32 %v5649, 7
          %v5651 = vsub.s32 5, %v5650
          %v5652 = vrot.slane %v5346, %v5651
          %v5653 = vlaneseq
          %v5654 = vshrl.u32 %v5653, 7
          %v5655 = vsub.s32 6, %v5654
          %v5656 = vrot.slane %v5346, %v5655
          %v5657 = vlaneseq
          %v5658 = vshrl.u32 %v5657, 7
          %v5659 = vsub.s32 7, %v5658
          %v5660 = vrot.slane %v5346, %v5659
          %v5661 = vlaneseq
          %v5662 = vshrl.u32 %v5661, 7
          %v5663 = vsub.s32 0, %v5662
          %v5664 = vrot.slane %v5347, %v5663
          %v5665 = vlaneseq
          %v5666 = vshrl.u32 %v5665, 7
          %v5667 = vsub.s32 1, %v5666
          %v5668 = vrot.slane %v5347, %v5667
          %v5669 = vlaneseq
          %v5670 = vshrl.u32 %v5669, 7
          %v5671 = vsub.s32 2, %v5670
          %v5672 = vrot.slane %v5347, %v5671
          %v5673 = vlaneseq
          %v5674 = vshrl.u32 %v5673, 7
          %v5675 = vsub.s32 3, %v5674
          %v5676 = vrot.slane %v5347, %v5675
          %v5677 = vlaneseq
          %v5678 = vshrl.u32 %v5677, 7
          %v5679 = vsub.s32 4, %v5678
          %v5680 = vrot.slane %v5347, %v5679
          %v5681 = vlaneseq
          %v5682 = vshrl.u32 %v5681, 7
          %v5683 = vsub.s32 5, %v5682
          %v5684 = vrot.slane %v5347, %v5683
          %v5685 = vlaneseq
          %v5686 = vshrl.u32 %v5685, 7
          %v5687 = vsub.s32 6, %v5686
          %v5688 = vrot.slane %v5347, %v5687
          %v5689 = vlaneseq
          %v5690 = vshrl.u32 %v5689, 7
          %v5691 = vsub.s32 7, %v5690
          %v5692 = vrot.slane %v5347, %v5691
          %v5693 = vlaneseq
          %v5694 = vshrl.u32 %v5693, 7
          %v5695 = vsub.s32 0, %v5694
          %v5696 = vrot.slane %v5348, %v5695
          %v5697 = vlaneseq
          %v5698 = vshrl.u32 %v5697, 7
          %v5699 = vsub.s32 1, %v5698
          %v5700 = vrot.slane %v5348, %v5699
          %v5718 = vsel %vm5157, %v5700, 0
          %5720 = vmatprep.subr.mxu0 0.0
          %5721 = vmatpush1.msra.mxu0 %v5349
          %5722 = vmatprep.subr.mxu0 0.0
          %5723 = vmatpush1.msra.mxu0 %v5350
          %5724 = vmatprep.subr.mxu0 0.0
          %5725 = vmatpush1.msra.mxu0 %v5351
          %5726 = vmatprep.subr.mxu0 0.0
          %5727 = vmatpush1.msra.mxu0 %v5352
          %5728 = vmatprep.subr.mxu0 0.0
          %5729 = vmatpush1.msra.mxu0 %v5353
          %5730 = vmatprep.subr.mxu0 0.0
          %5731 = vmatpush1.msra.mxu0 %v5354
          %5732 = vmatprep.subr.mxu0 0.0
          %5733 = vmatpush1.msra.mxu0 %v5355
          %5734 = vmatprep.subr.mxu0 0.0
          %5735 = vmatpush1.msra.mxu0 %v5356
          %5736 = vmatprep.subr.mxu0 0.0
          %5737 = vmatpush1.msra.mxu0 %v5357
          %5738 = vmatprep.subr.mxu0 0.0
          %5739 = vmatpush1.msra.mxu0 %v5358
          %5740 = vmatprep.subr.mxu0 0.0
          %5741 = vmatpush1.msra.mxu0 %v5359
          %5742 = vmatprep.subr.mxu0 0.0
          %5743 = vmatpush1.msra.mxu0 %v5360
          %5744 = vmatprep.subr.mxu0 0.0
          %5745 = vmatpush1.msra.mxu0 %v5361
          %5746 = vmatprep.subr.mxu0 0.0
          %5747 = vmatpush1.msra.mxu0 %v5362
          %5748 = vmatprep.subr.mxu0 0.0
          %5749 = vmatpush1.msra.mxu0 %v5363
          %5750 = vmatprep.subr.mxu0 0.0
          %5751 = vmatpush1.msra.mxu0 %v5364
          %5752 = vmatprep.subr.mxu0 0.0
          %5753 = vmatpush1.msra.mxu0 %v5365
          %5754 = vmatprep.subr.mxu0 0.0
          %5755 = vmatpush1.msra.mxu0 %v5366
          %5756 = vmatprep.subr.mxu0 0.0
          %5757 = vmatpush1.msra.mxu0 %v5367
          %5758 = vmatprep.subr.mxu0 0.0
          %5759 = vmatpush1.msra.mxu0 %v5368
          %5760 = vmatprep.subr.mxu0 0.0
          %5761 = vmatpush1.msra.mxu0 %v5369
          %5762 = vmatprep.subr.mxu0 0.0
          %5763 = vmatpush1.msra.mxu0 %v5370
          %5764 = vmatprep.subr.mxu0 0.0
          %5765 = vmatpush1.msra.mxu0 %v5371
          %5766 = vmatprep.subr.mxu0 0.0
          %5767 = vmatpush1.msra.mxu0 %v5372
          %5768 = vmatprep.subr.mxu0 0.0
          %5769 = vmatpush1.msra.mxu0 %v5373
          %5770 = vmatprep.subr.mxu0 0.0
          %5771 = vmatpush1.msra.mxu0 %v5374
          %5772 = vmatprep.subr.mxu0 0.0
          %5773 = vmatpush1.msra.mxu0 %v5375
          %5774 = vmatprep.subr.mxu0 0.0
          %5775 = vmatpush1.msra.mxu0 %v5376
          %5776 = vmatprep.subr.mxu0 0.0
          %5777 = vmatpush1.msra.mxu0 %v5377
          %5778 = vmatprep.subr.mxu0 0.0
          %5779 = vmatpush1.msra.mxu0 %v5378
          %5780 = vmatprep.subr.mxu0 0.0
          %5781 = vmatpush1.msra.mxu0 %v5379
          %5782 = vmatprep.subr.mxu0 0.0
          %5783 = vmatpush1.msra.mxu0 %v5380
          %5784 = vmatprep.mubr.f32.mxu0 %v5636
          %5785 = vmatmul.mubr.f32.gmra.mrb[0].mxu0 %v5632
          %v5786 = vpop.f32.mrb[0].mxu0
          %v5787 = vadd.f32 %v5625, %v5786
          %v5788 = vpop.f32.mrb[0].mxu0
          %5789 = vdwg.mxu0
          %5790 = vmatprep.subr.mxu0 0.0
          %5791 = vmatpush1.msra.mxu0 %v5381
          %5792 = vmatprep.subr.mxu0 0.0
          %5793 = vmatpush1.msra.mxu0 %v5382
          %5794 = vmatprep.subr.mxu0 0.0
          %5795 = vmatpush1.msra.mxu0 %v5383
          %5796 = vmatprep.subr.mxu0 0.0
          %5797 = vmatpush1.msra.mxu0 %v5384
          %5798 = vmatprep.subr.mxu0 0.0
          %5799 = vmatpush1.msra.mxu0 %v5385
          %5800 = vmatprep.subr.mxu0 0.0
          %5801 = vmatpush1.msra.mxu0 %v5386
          %5802 = vmatprep.subr.mxu0 0.0
          %5803 = vmatpush1.msra.mxu0 %v5387
          %5804 = vmatprep.subr.mxu0 0.0
          %5805 = vmatpush1.msra.mxu0 %v5388
          %5806 = vmatprep.subr.mxu0 0.0
          %5807 = vmatpush1.msra.mxu0 %v5389
          %5808 = vmatprep.subr.mxu0 0.0
          %5809 = vmatpush1.msra.mxu0 %v5390
          %5810 = vmatprep.subr.mxu0 0.0
          %5811 = vmatpush1.msra.mxu0 %v5391
          %5812 = vmatprep.subr.mxu0 0.0
          %5813 = vmatpush1.msra.mxu0 %v5392
          %5814 = vmatprep.subr.mxu0 0.0
          %5815 = vmatpush1.msra.mxu0 %v5393
          %5816 = vmatprep.subr.mxu0 0.0
          %5817 = vmatpush1.msra.mxu0 %v5394
          %5818 = vmatprep.subr.mxu0 0.0
          %5819 = vmatpush1.msra.mxu0 %v5395
          %5820 = vmatprep.subr.mxu0 0.0
          %5821 = vmatpush1.msra.mxu0 %v5396
          %5822 = vmatprep.subr.mxu0 0.0
          %5823 = vmatpush1.msra.mxu0 %v5397
          %5824 = vmatprep.subr.mxu0 0.0
          %5825 = vmatpush1.msra.mxu0 %v5398
          %5826 = vmatprep.subr.mxu0 0.0
          %5827 = vmatpush1.msra.mxu0 %v5399
          %5828 = vmatprep.subr.mxu0 0.0
          %5829 = vmatpush1.msra.mxu0 %v5400
          %5830 = vmatprep.subr.mxu0 0.0
          %5831 = vmatpush1.msra.mxu0 %v5401
          %5832 = vmatprep.subr.mxu0 0.0
          %5833 = vmatpush1.msra.mxu0 %v5402
          %5834 = vmatprep.subr.mxu0 0.0
          %5835 = vmatpush1.msra.mxu0 %v5403
          %5836 = vmatprep.subr.mxu0 0.0
          %5837 = vmatpush1.msra.mxu0 %v5404
          %5838 = vmatprep.subr.mxu0 0.0
          %5839 = vmatpush1.msra.mxu0 %v5405
          %5840 = vmatprep.subr.mxu0 0.0
          %5841 = vmatpush1.msra.mxu0 %v5406
          %5842 = vmatprep.subr.mxu0 0.0
          %5843 = vmatpush1.msra.mxu0 %v5407
          %5844 = vmatprep.subr.mxu0 0.0
          %5845 = vmatpush1.msra.mxu0 %v5408
          %5846 = vmatprep.subr.mxu0 0.0
          %5847 = vmatpush1.msra.mxu0 %v5409
          %5848 = vmatprep.subr.mxu0 0.0
          %5849 = vmatpush1.msra.mxu0 %v5410
          %5850 = vmatprep.subr.mxu0 0.0
          %5851 = vmatpush1.msra.mxu0 %v5411
          %5852 = vmatprep.subr.mxu0 0.0
          %5853 = vmatpush1.msra.mxu0 %v5412
          %5854 = vmatprep.mubr.f32.mxu0 %v5644
          %5855 = vmatmul.mubr.f32.gmra.mrb[0].mxu0 %v5640
          %v5856 = vpop.f32.mrb[0].mxu0
          %v5857 = vadd.f32 %v5787, %v5856
          %v5858 = vpop.f32.mrb[0].mxu0
          %5859 = vdwg.mxu0
          %5860 = vmatprep.subr.mxu0 0.0
          %5861 = vmatpush1.msra.mxu0 %v5413
          %5862 = vmatprep.subr.mxu0 0.0
          %5863 = vmatpush1.msra.mxu0 %v5414
          %5864 = vmatprep.subr.mxu0 0.0
          %5865 = vmatpush1.msra.mxu0 %v5415
          %5866 = vmatprep.subr.mxu0 0.0
          %5867 = vmatpush1.msra.mxu0 %v5416
          %5868 = vmatprep.subr.mxu0 0.0
          %5869 = vmatpush1.msra.mxu0 %v5417
          %5870 = vmatprep.subr.mxu0 0.0
          %5871 = vmatpush1.msra.mxu0 %v5418
          %5872 = vmatprep.subr.mxu0 0.0
          %5873 = vmatpush1.msra.mxu0 %v5419
          %5874 = vmatprep.subr.mxu0 0.0
          %5875 = vmatpush1.msra.mxu0 %v5420
          %5876 = vmatprep.subr.mxu0 0.0
          %5877 = vmatpush1.msra.mxu0 %v5421
          %5878 = vmatprep.subr.mxu0 0.0
          %5879 = vmatpush1.msra.mxu0 %v5422
          %5880 = vmatprep.subr.mxu0 0.0
          %5881 = vmatpush1.msra.mxu0 %v5423
          %5882 = vmatprep.subr.mxu0 0.0
          %5883 = vmatpush1.msra.mxu0 %v5424
          %5884 = vmatprep.subr.mxu0 0.0
          %5885 = vmatpush1.msra.mxu0 %v5425
          %5886 = vmatprep.subr.mxu0 0.0
          %5887 = vmatpush1.msra.mxu0 %v5426
          %5888 = vmatprep.subr.mxu0 0.0
          %5889 = vmatpush1.msra.mxu0 %v5427
          %5890 = vmatprep.subr.mxu0 0.0
          %5891 = vmatpush1.msra.mxu0 %v5428
          %5892 = vmatprep.subr.mxu0 0.0
          %5893 = vmatpush1.msra.mxu0 %v5429
          %5894 = vmatprep.subr.mxu0 0.0
          %5895 = vmatpush1.msra.mxu0 %v5430
          %5896 = vmatprep.subr.mxu0 0.0
          %5897 = vmatpush1.msra.mxu0 %v5431
          %5898 = vmatprep.subr.mxu0 0.0
          %5899 = vmatpush1.msra.mxu0 %v5432
          %5900 = vmatprep.subr.mxu0 0.0
          %5901 = vmatpush1.msra.mxu0 %v5433
          %5902 = vmatprep.subr.mxu0 0.0
          %5903 = vmatpush1.msra.mxu0 %v5434
          %5904 = vmatprep.subr.mxu0 0.0
          %5905 = vmatpush1.msra.mxu0 %v5435
          %5906 = vmatprep.subr.mxu0 0.0
          %5907 = vmatpush1.msra.mxu0 %v5436
          %5908 = vmatprep.subr.mxu0 0.0
          %5909 = vmatpush1.msra.mxu0 %v5437
          %5910 = vmatprep.subr.mxu0 0.0
          %5911 = vmatpush1.msra.mxu0 %v5438
          %5912 = vmatprep.subr.mxu0 0.0
          %5913 = vmatpush1.msra.mxu0 %v5439
          %5914 = vmatprep.subr.mxu0 0.0
          %5915 = vmatpush1.msra.mxu0 %v5440
          %5916 = vmatprep.subr.mxu0 0.0
          %5917 = vmatpush1.msra.mxu0 %v5441
          %5918 = vmatprep.subr.mxu0 0.0
          %5919 = vmatpush1.msra.mxu0 %v5442
          %5920 = vmatprep.subr.mxu0 0.0
          %5921 = vmatpush1.msra.mxu0 %v5443
          %5922 = vmatprep.subr.mxu0 0.0
          %5923 = vmatpush1.msra.mxu0 %v5444
          %5924 = vmatprep.mubr.f32.mxu0 %v5652
          %5925 = vmatmul.mubr.f32.gmra.mrb[0].mxu0 %v5648
          %v5926 = vpop.f32.mrb[0].mxu0
          %v5927 = vadd.f32 %v5857, %v5926
          %v5928 = vpop.f32.mrb[0].mxu0
          %5929 = vdwg.mxu0
          %5930 = vmatprep.subr.mxu0 0.0
          %5931 = vmatpush1.msra.mxu0 %v5445
          %5932 = vmatprep.subr.mxu0 0.0
          %5933 = vmatpush1.msra.mxu0 %v5446
          %5934 = vmatprep.subr.mxu0 0.0
          %5935 = vmatpush1.msra.mxu0 %v5447
          %5936 = vmatprep.subr.mxu0 0.0
          %5937 = vmatpush1.msra.mxu0 %v5448
          %5938 = vmatprep.subr.mxu0 0.0
          %5939 = vmatpush1.msra.mxu0 %v5449
          %5940 = vmatprep.subr.mxu0 0.0
          %5941 = vmatpush1.msra.mxu0 %v5450
          %5942 = vmatprep.subr.mxu0 0.0
          %5943 = vmatpush1.msra.mxu0 %v5451
          %5944 = vmatprep.subr.mxu0 0.0
          %5945 = vmatpush1.msra.mxu0 %v5452
          %5946 = vmatprep.subr.mxu0 0.0
          %5947 = vmatpush1.msra.mxu0 %v5453
          %5948 = vmatprep.subr.mxu0 0.0
          %5949 = vmatpush1.msra.mxu0 %v5454
          %5950 = vmatprep.subr.mxu0 0.0
          %5951 = vmatpush1.msra.mxu0 %v5455
          %5952 = vmatprep.subr.mxu0 0.0
          %5953 = vmatpush1.msra.mxu0 %v5456
          %5954 = vmatprep.subr.mxu0 0.0
          %5955 = vmatpush1.msra.mxu0 %v5457
          %5956 = vmatprep.subr.mxu0 0.0
          %5957 = vmatpush1.msra.mxu0 %v5458
          %5958 = vmatprep.subr.mxu0 0.0
          %5959 = vmatpush1.msra.mxu0 %v5459
          %5960 = vmatprep.subr.mxu0 0.0
          %5961 = vmatpush1.msra.mxu0 %v5460
          %5962 = vmatprep.subr.mxu0 0.0
          %5963 = vmatpush1.msra.mxu0 %v5461
          %5964 = vmatprep.subr.mxu0 0.0
          %5965 = vmatpush1.msra.mxu0 %v5462
          %5966 = vmatprep.subr.mxu0 0.0
          %5967 = vmatpush1.msra.mxu0 %v5463
          %5968 = vmatprep.subr.mxu0 0.0
          %5969 = vmatpush1.msra.mxu0 %v5464
          %5970 = vmatprep.subr.mxu0 0.0
          %5971 = vmatpush1.msra.mxu0 %v5465
          %5972 = vmatprep.subr.mxu0 0.0
          %5973 = vmatpush1.msra.mxu0 %v5466
          %5974 = vmatprep.subr.mxu0 0.0
          %5975 = vmatpush1.msra.mxu0 %v5467
          %5976 = vmatprep.subr.mxu0 0.0
          %5977 = vmatpush1.msra.mxu0 %v5468
          %5978 = vmatprep.subr.mxu0 0.0
          %5979 = vmatpush1.msra.mxu0 %v5469
          %5980 = vmatprep.subr.mxu0 0.0
          %5981 = vmatpush1.msra.mxu0 %v5470
          %5982 = vmatprep.subr.mxu0 0.0
          %5983 = vmatpush1.msra.mxu0 %v5471
          %5984 = vmatprep.subr.mxu0 0.0
          %5985 = vmatpush1.msra.mxu0 %v5472
          %5986 = vmatprep.subr.mxu0 0.0
          %5987 = vmatpush1.msra.mxu0 %v5473
          %5988 = vmatprep.subr.mxu0 0.0
          %5989 = vmatpush1.msra.mxu0 %v5474
          %5990 = vmatprep.subr.mxu0 0.0
          %5991 = vmatpush1.msra.mxu0 %v5475
          %5992 = vmatprep.subr.mxu0 0.0
          %5993 = vmatpush1.msra.mxu0 %v5476
          %5994 = vmatprep.mubr.f32.mxu0 %v5660
          %5995 = vmatmul.mubr.f32.gmra.mrb[0].mxu0 %v5656
          %v5996 = vpop.f32.mrb[0].mxu0
          %v5997 = vadd.f32 %v5927, %v5996
          %v5998 = vpop.f32.mrb[0].mxu0
          %5999 = vdwg.mxu0
          %6000 = vmatprep.subr.mxu0 0.0
          %6001 = vmatpush1.msra.mxu0 %v5477
          %6002 = vmatprep.subr.mxu0 0.0
          %6003 = vmatpush1.msra.mxu0 %v5478
          %6004 = vmatprep.subr.mxu0 0.0
          %6005 = vmatpush1.msra.mxu0 %v5479
          %6006 = vmatprep.subr.mxu0 0.0
          %6007 = vmatpush1.msra.mxu0 %v5480
          %6008 = vmatprep.subr.mxu0 0.0
          %6009 = vmatpush1.msra.mxu0 %v5481
          %6010 = vmatprep.subr.mxu0 0.0
          %6011 = vmatpush1.msra.mxu0 %v5482
          %6012 = vmatprep.subr.mxu0 0.0
          %6013 = vmatpush1.msra.mxu0 %v5483
          %6014 = vmatprep.subr.mxu0 0.0
          %6015 = vmatpush1.msra.mxu0 %v5484
          %6016 = vmatprep.subr.mxu0 0.0
          %6017 = vmatpush1.msra.mxu0 %v5485
          %6018 = vmatprep.subr.mxu0 0.0
          %6019 = vmatpush1.msra.mxu0 %v5486
          %6020 = vmatprep.subr.mxu0 0.0
          %6021 = vmatpush1.msra.mxu0 %v5487
          %6022 = vmatprep.subr.mxu0 0.0
          %6023 = vmatpush1.msra.mxu0 %v5488
          %6024 = vmatprep.subr.mxu0 0.0
          %6025 = vmatpush1.msra.mxu0 %v5489
          %6026 = vmatprep.subr.mxu0 0.0
          %6027 = vmatpush1.msra.mxu0 %v5490
          %6028 = vmatprep.subr.mxu0 0.0
          %6029 = vmatpush1.msra.mxu0 %v5491
          %6030 = vmatprep.subr.mxu0 0.0
          %6031 = vmatpush1.msra.mxu0 %v5492
          %6032 = vmatprep.subr.mxu0 0.0
          %6033 = vmatpush1.msra.mxu0 %v5493
          %6034 = vmatprep.subr.mxu0 0.0
          %6035 = vmatpush1.msra.mxu0 %v5494
          %6036 = vmatprep.subr.mxu0 0.0
          %6037 = vmatpush1.msra.mxu0 %v5495
          %6038 = vmatprep.subr.mxu0 0.0
          %6039 = vmatpush1.msra.mxu0 %v5496
          %6040 = vmatprep.subr.mxu0 0.0
          %6041 = vmatpush1.msra.mxu0 %v5497
          %6042 = vmatprep.subr.mxu0 0.0
          %6043 = vmatpush1.msra.mxu0 %v5498
          %6044 = vmatprep.subr.mxu0 0.0
          %6045 = vmatpush1.msra.mxu0 %v5499
          %6046 = vmatprep.subr.mxu0 0.0
          %6047 = vmatpush1.msra.mxu0 %v5500
          %6048 = vmatprep.subr.mxu0 0.0
          %6049 = vmatpush1.msra.mxu0 %v5501
          %6050 = vmatprep.subr.mxu0 0.0
          %6051 = vmatpush1.msra.mxu0 %v5502
          %6052 = vmatprep.subr.mxu0 0.0
          %6053 = vmatpush1.msra.mxu0 %v5503
          %6054 = vmatprep.subr.mxu0 0.0
          %6055 = vmatpush1.msra.mxu0 %v5504
          %6056 = vmatprep.subr.mxu0 0.0
          %6057 = vmatpush1.msra.mxu0 %v5505
          %6058 = vmatprep.subr.mxu0 0.0
          %6059 = vmatpush1.msra.mxu0 %v5506
          %6060 = vmatprep.subr.mxu0 0.0
          %6061 = vmatpush1.msra.mxu0 %v5507
          %6062 = vmatprep.subr.mxu0 0.0
          %6063 = vmatpush1.msra.mxu0 %v5508
          %6064 = vmatprep.mubr.f32.mxu0 %v5668
          %6065 = vmatmul.mubr.f32.gmra.mrb[0].mxu0 %v5664
          %v6066 = vpop.f32.mrb[0].mxu0
          %v6067 = vadd.f32 %v5997, %v6066
          %v6068 = vpop.f32.mrb[0].mxu0
          %6069 = vdwg.mxu0
          %6070 = vmatprep.subr.mxu0 0.0
          %6071 = vmatpush1.msra.mxu0 %v5509
          %6072 = vmatprep.subr.mxu0 0.0
          %6073 = vmatpush1.msra.mxu0 %v5510
          %6074 = vmatprep.subr.mxu0 0.0
          %6075 = vmatpush1.msra.mxu0 %v5511
          %6076 = vmatprep.subr.mxu0 0.0
          %6077 = vmatpush1.msra.mxu0 %v5512
          %6078 = vmatprep.subr.mxu0 0.0
          %6079 = vmatpush1.msra.mxu0 %v5513
          %6080 = vmatprep.subr.mxu0 0.0
          %6081 = vmatpush1.msra.mxu0 %v5514
          %6082 = vmatprep.subr.mxu0 0.0
          %6083 = vmatpush1.msra.mxu0 %v5515
          %6084 = vmatprep.subr.mxu0 0.0
          %6085 = vmatpush1.msra.mxu0 %v5516
          %6086 = vmatprep.subr.mxu0 0.0
          %6087 = vmatpush1.msra.mxu0 %v5517
          %6088 = vmatprep.subr.mxu0 0.0
          %6089 = vmatpush1.msra.mxu0 %v5518
          %6090 = vmatprep.subr.mxu0 0.0
          %6091 = vmatpush1.msra.mxu0 %v5519
          %6092 = vmatprep.subr.mxu0 0.0
          %6093 = vmatpush1.msra.mxu0 %v5520
          %6094 = vmatprep.subr.mxu0 0.0
          %6095 = vmatpush1.msra.mxu0 %v5521
          %6096 = vmatprep.subr.mxu0 0.0
          %6097 = vmatpush1.msra.mxu0 %v5522
          %6098 = vmatprep.subr.mxu0 0.0
          %6099 = vmatpush1.msra.mxu0 %v5523
          %6100 = vmatprep.subr.mxu0 0.0
          %6101 = vmatpush1.msra.mxu0 %v5524
          %6102 = vmatprep.subr.mxu0 0.0
          %6103 = vmatpush1.msra.mxu0 %v5525
          %6104 = vmatprep.subr.mxu0 0.0
          %6105 = vmatpush1.msra.mxu0 %v5526
          %6106 = vmatprep.subr.mxu0 0.0
          %6107 = vmatpush1.msra.mxu0 %v5527
          %6108 = vmatprep.subr.mxu0 0.0
          %6109 = vmatpush1.msra.mxu0 %v5528
          %6110 = vmatprep.subr.mxu0 0.0
          %6111 = vmatpush1.msra.mxu0 %v5529
          %6112 = vmatprep.subr.mxu0 0.0
          %6113 = vmatpush1.msra.mxu0 %v5530
          %6114 = vmatprep.subr.mxu0 0.0
          %6115 = vmatpush1.msra.mxu0 %v5531
          %6116 = vmatprep.subr.mxu0 0.0
          %6117 = vmatpush1.msra.mxu0 %v5532
          %6118 = vmatprep.subr.mxu0 0.0
          %6119 = vmatpush1.msra.mxu0 %v5533
          %6120 = vmatprep.subr.mxu0 0.0
          %6121 = vmatpush1.msra.mxu0 %v5534
          %6122 = vmatprep.subr.mxu0 0.0
          %6123 = vmatpush1.msra.mxu0 %v5535
          %6124 = vmatprep.subr.mxu0 0.0
          %6125 = vmatpush1.msra.mxu0 %v5536
          %6126 = vmatprep.subr.mxu0 0.0
          %6127 = vmatpush1.msra.mxu0 %v5537
          %6128 = vmatprep.subr.mxu0 0.0
          %6129 = vmatpush1.msra.mxu0 %v5538
          %6130 = vmatprep.subr.mxu0 0.0
          %6131 = vmatpush1.msra.mxu0 %v5539
          %6132 = vmatprep.subr.mxu0 0.0
          %6133 = vmatpush1.msra.mxu0 %v5540
          %6134 = vmatprep.mubr.f32.mxu0 %v5676
          %6135 = vmatmul.mubr.f32.gmra.mrb[0].mxu0 %v5672
          %v6136 = vpop.f32.mrb[0].mxu0
          %v6137 = vadd.f32 %v6067, %v6136
          %v6138 = vpop.f32.mrb[0].mxu0
          %6139 = vdwg.mxu0
          %6140 = vmatprep.subr.mxu0 0.0
          %6141 = vmatpush1.msra.mxu0 %v5541
          %6142 = vmatprep.subr.mxu0 0.0
          %6143 = vmatpush1.msra.mxu0 %v5542
          %6144 = vmatprep.subr.mxu0 0.0
          %6145 = vmatpush1.msra.mxu0 %v5543
          %6146 = vmatprep.subr.mxu0 0.0
          %6147 = vmatpush1.msra.mxu0 %v5544
          %6148 = vmatprep.subr.mxu0 0.0
          %6149 = vmatpush1.msra.mxu0 %v5545
          %6150 = vmatprep.subr.mxu0 0.0
          %6151 = vmatpush1.msra.mxu0 %v5546
          %6152 = vmatprep.subr.mxu0 0.0
          %6153 = vmatpush1.msra.mxu0 %v5547
          %6154 = vmatprep.subr.mxu0 0.0
          %6155 = vmatpush1.msra.mxu0 %v5548
          %6156 = vmatprep.subr.mxu0 0.0
          %6157 = vmatpush1.msra.mxu0 %v5549
          %6158 = vmatprep.subr.mxu0 0.0
          %6159 = vmatpush1.msra.mxu0 %v5550
          %6160 = vmatprep.subr.mxu0 0.0
          %6161 = vmatpush1.msra.mxu0 %v5551
          %6162 = vmatprep.subr.mxu0 0.0
          %6163 = vmatpush1.msra.mxu0 %v5552
          %6164 = vmatprep.subr.mxu0 0.0
          %6165 = vmatpush1.msra.mxu0 %v5553
          %6166 = vmatprep.subr.mxu0 0.0
          %6167 = vmatpush1.msra.mxu0 %v5554
          %6168 = vmatprep.subr.mxu0 0.0
          %6169 = vmatpush1.msra.mxu0 %v5555
          %6170 = vmatprep.subr.mxu0 0.0
          %6171 = vmatpush1.msra.mxu0 %v5556
          %6172 = vmatprep.subr.mxu0 0.0
          %6173 = vmatpush1.msra.mxu0 %v5557
          %6174 = vmatprep.subr.mxu0 0.0
          %6175 = vmatpush1.msra.mxu0 %v5558
          %6176 = vmatprep.subr.mxu0 0.0
          %6177 = vmatpush1.msra.mxu0 %v5559
          %6178 = vmatprep.subr.mxu0 0.0
          %6179 = vmatpush1.msra.mxu0 %v5560
          %6180 = vmatprep.subr.mxu0 0.0
          %6181 = vmatpush1.msra.mxu0 %v5561
          %6182 = vmatprep.subr.mxu0 0.0
          %6183 = vmatpush1.msra.mxu0 %v5562
          %6184 = vmatprep.subr.mxu0 0.0
          %6185 = vmatpush1.msra.mxu0 %v5563
          %6186 = vmatprep.subr.mxu0 0.0
          %6187 = vmatpush1.msra.mxu0 %v5564
          %6188 = vmatprep.subr.mxu0 0.0
          %6189 = vmatpush1.msra.mxu0 %v5565
          %6190 = vmatprep.subr.mxu0 0.0
          %6191 = vmatpush1.msra.mxu0 %v5566
          %6192 = vmatprep.subr.mxu0 0.0
          %6193 = vmatpush1.msra.mxu0 %v5567
          %6194 = vmatprep.subr.mxu0 0.0
          %6195 = vmatpush1.msra.mxu0 %v5568
          %6196 = vmatprep.subr.mxu0 0.0
          %6197 = vmatpush1.msra.mxu0 %v5569
          %6198 = vmatprep.subr.mxu0 0.0
          %6199 = vmatpush1.msra.mxu0 %v5570
          %6200 = vmatprep.subr.mxu0 0.0
          %6201 = vmatpush1.msra.mxu0 %v5571
          %6202 = vmatprep.subr.mxu0 0.0
          %6203 = vmatpush1.msra.mxu0 %v5572
          %6204 = vmatprep.mubr.f32.mxu0 %v5684
          %6205 = vmatmul.mubr.f32.gmra.mrb[0].mxu0 %v5680
          %v6206 = vpop.f32.mrb[0].mxu0
          %v6207 = vadd.f32 %v6137, %v6206
          %v6208 = vpop.f32.mrb[0].mxu0
          %6209 = vdwg.mxu0
          %6210 = vmatprep.subr.mxu0 0.0
          %6211 = vmatpush1.msra.mxu0 %v5573
          %6212 = vmatprep.subr.mxu0 0.0
          %6213 = vmatpush1.msra.mxu0 %v5574
          %6214 = vmatprep.subr.mxu0 0.0
          %6215 = vmatpush1.msra.mxu0 %v5575
          %6216 = vmatprep.subr.mxu0 0.0
          %6217 = vmatpush1.msra.mxu0 %v5576
          %6218 = vmatprep.subr.mxu0 0.0
          %6219 = vmatpush1.msra.mxu0 %v5577
          %6220 = vmatprep.subr.mxu0 0.0
          %6221 = vmatpush1.msra.mxu0 %v5578
          %6222 = vmatprep.subr.mxu0 0.0
          %6223 = vmatpush1.msra.mxu0 %v5579
          %6224 = vmatprep.subr.mxu0 0.0
          %6225 = vmatpush1.msra.mxu0 %v5580
          %6226 = vmatprep.subr.mxu0 0.0
          %6227 = vmatpush1.msra.mxu0 %v5581
          %6228 = vmatprep.subr.mxu0 0.0
          %6229 = vmatpush1.msra.mxu0 %v5582
          %6230 = vmatprep.subr.mxu0 0.0
          %6231 = vmatpush1.msra.mxu0 %v5583
          %6232 = vmatprep.subr.mxu0 0.0
          %6233 = vmatpush1.msra.mxu0 %v5584
          %6234 = vmatprep.subr.mxu0 0.0
          %6235 = vmatpush1.msra.mxu0 %v5585
          %6236 = vmatprep.subr.mxu0 0.0
          %6237 = vmatpush1.msra.mxu0 %v5586
          %6238 = vmatprep.subr.mxu0 0.0
          %6239 = vmatpush1.msra.mxu0 %v5587
          %6240 = vmatprep.subr.mxu0 0.0
          %6241 = vmatpush1.msra.mxu0 %v5588
          %6242 = vmatprep.subr.mxu0 0.0
          %6243 = vmatpush1.msra.mxu0 %v5589
          %6244 = vmatprep.subr.mxu0 0.0
          %6245 = vmatpush1.msra.mxu0 %v5590
          %6246 = vmatprep.subr.mxu0 0.0
          %6247 = vmatpush1.msra.mxu0 %v5591
          %6248 = vmatprep.subr.mxu0 0.0
          %6249 = vmatpush1.msra.mxu0 %v5592
          %6250 = vmatprep.subr.mxu0 0.0
          %6251 = vmatpush1.msra.mxu0 %v5593
          %6252 = vmatprep.subr.mxu0 0.0
          %6253 = vmatpush1.msra.mxu0 %v5594
          %6254 = vmatprep.subr.mxu0 0.0
          %6255 = vmatpush1.msra.mxu0 %v5595
          %6256 = vmatprep.subr.mxu0 0.0
          %6257 = vmatpush1.msra.mxu0 %v5596
          %6258 = vmatprep.subr.mxu0 0.0
          %6259 = vmatpush1.msra.mxu0 %v5597
          %6260 = vmatprep.subr.mxu0 0.0
          %6261 = vmatpush1.msra.mxu0 %v5598
          %6262 = vmatprep.subr.mxu0 0.0
          %6263 = vmatpush1.msra.mxu0 %v5599
          %6264 = vmatprep.subr.mxu0 0.0
          %6265 = vmatpush1.msra.mxu0 %v5600
          %6266 = vmatprep.subr.mxu0 0.0
          %6267 = vmatpush1.msra.mxu0 %v5601
          %6268 = vmatprep.subr.mxu0 0.0
          %6269 = vmatpush1.msra.mxu0 %v5602
          %6270 = vmatprep.subr.mxu0 0.0
          %6271 = vmatpush1.msra.mxu0 %v5603
          %6272 = vmatprep.subr.mxu0 0.0
          %6273 = vmatpush1.msra.mxu0 %v5604
          %6274 = vmatprep.mubr.f32.mxu0 %v5692
          %6275 = vmatmul.mubr.f32.gmra.mrb[0].mxu0 %v5688
          %v6276 = vpop.f32.mrb[0].mxu0
          %v6277 = vadd.f32 %v6207, %v6276
          %v6278 = vpop.f32.mrb[0].mxu0
          %6279 = vdwg.mxu0
          %6280 = vmatprep.subr.mxu0 0.0
          %6281 = vmatpush1.msra.mxu0 %v5605
          %6282 = vmatprep.subr.mxu0 0.0
          %6283 = vmatpush1.msra.mxu0 %v5606
          %6284 = vmatprep.subr.mxu0 0.0
          %6285 = vmatpush1.msra.mxu0 %v5607
          %6286 = vmatprep.subr.mxu0 0.0
          %6287 = vmatpush1.msra.mxu0 %v5608
          %6288 = vmatprep.subr.mxu0 0.0
          %6289 = vmatpush1.msra.mxu0 %v5609
          %6290 = vmatprep.subr.mxu0 0.0
          %6291 = vmatpush1.msra.mxu0 %v5610
          %6292 = vmatprep.subr.mxu0 0.0
          %6293 = vmatpush1.msra.mxu0 %v5611
          %6294 = vmatprep.subr.mxu0 0.0
          %6295 = vmatpush1.msra.mxu0 %v5612
          %6296 = vmatprep.subr.mxu0 0.0
          %6297 = vmatpush1.msra.mxu0 %v5613
          %6298 = vmatprep.subr.mxu0 0.0
          %6299 = vmatpush1.msra.mxu0 %v5614
          %6300 = vmatprep.subr.mxu0 0.0
          %6301 = vmatpush1.msra.mxu0 %v5615
          %6302 = vmatprep.subr.mxu0 0.0
          %6303 = vmatpush1.msra.mxu0 %v5616
          %6304 = vmatprep.subr.mxu0 0.0
          %6305 = vmatpush1.msra.mxu0 %v5617
          %6306 = vmatprep.subr.mxu0 0.0
          %6307 = vmatpush1.msra.mxu0 %v5618
          %6308 = vmatprep.subr.mxu0 0.0
          %6309 = vmatpush1.msra.mxu0 %v5619
          %6310 = vmatprep.subr.mxu0 0.0
          %6311 = vmatpush1.msra.mxu0 %v5620
          %6312 = vmatprep.subr.mxu0 0.0
          %6313 = vmatpush1.msra.mxu0 %v5621
          %6314 = vmatprep.subr.mxu0 0.0
          %6315 = vmatpush1.msra.mxu0 %v5622
          %6316 = vmatprep.subr.mxu0 0.0
          %6317 = vmatpush1.msra.mxu0 %v5623
          %6318 = vmatprep.subr.mxu0 0.0
          %6319 = vmatpush1.msra.mxu0 %v5624
          %6320 = vmatprep.subr.mxu0 0.0
          %6321 = vmatpush1.msra.mxu0 0.0
          %6322 = vmatprep.subr.mxu0 0.0
          %6323 = vmatpush1.msra.mxu0 0.0
          %6324 = vmatprep.subr.mxu0 0.0
          %6325 = vmatpush1.msra.mxu0 0.0
          %6326 = vmatprep.subr.mxu0 0.0
          %6327 = vmatpush1.msra.mxu0 0.0
          %6328 = vmatprep.subr.mxu0 0.0
          %6329 = vmatpush1.msra.mxu0 0.0
          %6330 = vmatprep.subr.mxu0 0.0
          %6331 = vmatpush1.msra.mxu0 0.0
          %6332 = vmatprep.subr.mxu0 0.0
          %6333 = vmatpush1.msra.mxu0 0.0
          %6334 = vmatprep.subr.mxu0 0.0
          %6335 = vmatpush1.msra.mxu0 0.0
          %6336 = vmatprep.subr.mxu0 0.0
          %6337 = vmatpush1.msra.mxu0 0.0
          %6338 = vmatprep.subr.mxu0 0.0
          %6339 = vmatpush1.msra.mxu0 0.0
          %6340 = vmatprep.subr.mxu0 0.0
          %6341 = vmatpush1.msra.mxu0 0.0
          %6342 = vmatprep.subr.mxu0 0.0
          %6343 = vmatpush1.msra.mxu0 0.0
          %6344 = vmatprep.mubr.f32.mxu0 %v5718
          %6345 = vmatmul.mubr.f32.gmra.mrb[0].mxu0 %v5696
          %v6346 = vpop.f32.mrb[0].mxu0
          %v6347 = vadd.f32 %v6277, %v6346
          %v6348 = vpop.f32.mrb[0].mxu0
          %6349 = vdwg.mxu0
          %vm6350 = vcmask 8192
          %6351 = vst.msk [vmem:[%s282] sm:$0x1] %vm6350, %v6347
        $region56: #{two_inputs_net_forward.1} parent=47 // pred_fallthru
          _
        %s6352 = sand.u32 %s193, 1
        %s6353 = scalar_lea.sflag [#allocation4], %s6352
        %s6354 = sand.u32 %s193, 1
        %s6355 = scalar_lea.vmem [#allocation3], %s6354
        // Predicated region
        $region57: #{two_inputs_net_forward.1} parent=47 // pred_check
          %p6356 = pneg %p203
        $region58: #{two_inputs_net_forward.1} parent=47 // pred_check_branch
          %6358 = sbr.rel (%p6356) target = $region60
        $region59: #{two_inputs_net_forward.1} parent=47 // pred_region
          %s6360 = ssub.s32 16, 16
          %6361 = vsyncadd %s6353, %s6360
          %s6362 = smul.addr %s25, 16
          %s6363 = scalar_lea.hbm %s7, %s6362
          %s6365 = sshll.u32 %s6355, 4
          %s6366 = int_to_ptr.vmem [resolvable:$true] %s6365
          %6368 = dma.vmem_to_hbm [thread:$0]  %s6366, 16, %s6363, %s6353
        $region60: #{two_inputs_net_forward.1} parent=47 // pred_fallthru
          _
      $region48: #{two_inputs_net_forward.1} parent=5 // pred_fallthru
        _
      %p6369 = scmp.le.s32.totalorder 2, %s16
      // Predicated region
      $region61: #{two_inputs_net_forward.1} parent=5 // pred_check
        %p6370 = pneg %p6369
      $region62: #{two_inputs_net_forward.1} parent=5 // pred_check_branch
        %6372 = sbr.rel (%p6370) target = $region64
      $region63: #{two_inputs_net_forward.1} parent=5 // pred_region
        %s6373 = ssub.s32 %s16, 2
        // Predicated region
        $region65: #{two_inputs_net_forward.1} parent=63 // pred_check
          %p6374 = pneg %p209
        $region66: #{two_inputs_net_forward.1} parent=63 // pred_check_branch
          %6376 = sbr.rel (%p6374) target = $region68
        $region67: #{two_inputs_net_forward.1} parent=63 // pred_region
          %s6377 = sand.u32 %s194, 1
          %s6378 = scalar_lea.sflag [#allocation4], %s6377
          %s6379 = sand.u32 %s194, 1
          %s6380 = scalar_lea.vmem [#allocation3], %s6379
          %6381 = dma.done %s6378, 16
        $region68: #{two_inputs_net_forward.1} parent=63 // pred_fallthru
          _
      $region64: #{two_inputs_net_forward.1} parent=5 // pred_fallthru
        _
    $region6: #{two_inputs_net_forward.1} parent=1 // loop_footer
      %s20 = sadd.s32 1, %s16
    $region7: #{two_inputs_net_forward.1} parent=1 // loop_footer_branch
      %15 = sbr.rel target = $region3
    $region8: #{two_inputs_net_forward.1} parent=1 // loop_exit
      _
    %6382 = vsyncpa [#allocation4], 1
    %s6383 = scalar_lea.sflag [#allocation4], 1
    %6384 = vsyncpa %s6383, 1

</llo_original>
